<compile_context>
chip_gen: v7x
topology: tpu7x:2x2x1
jax: 0.10.0
libtpu: 0.0.40
codegen_flags: <defaults>
</compile_context>

<pallas_src>
import jax
import jax.numpy as jnp
from jax.experimental import pallas as pl
from jax.experimental.pallas import tpu as pltpu


def _round_up(x, m):
    return ((x + m - 1) // m) * m


# ----------------------------------------------------------------------------
# Pallas kernel: T decoder steps; hidden state carried in the constant-index
# hidden output block (VMEM resident across the whole grid).
# ----------------------------------------------------------------------------
def attn_decoder_kernel(
    gi0_ref,        # (1, Bp, 3Hp)  x_t @ Wx0 + bih0, precomputed per step (pipelined)
    h_init_ref,     # (L, Bp, Hp)   initial hidden (f32)
    enc_bsh_ref,    # (Bp, S, Hp)   encoder outputs, batch-major (compute dtype)
    enc_bhs_ref,    # (Bp, Hp, S)   encoder outputs, pre-transposed for the score matmul
    wh0_ref, bh0_ref,               # GRU layer 0 hidden path: (Hp, 3Hp), (1, 3Hp) f32
    wx1_ref, bx1_ref,               # GRU layer 1 input path
    wh1_ref, bh1_ref,               # GRU layer 1 hidden path
    wc_rnn_ref, wc_ctx_ref, bc_ref, # concat Linear split: (Hp,Hp), (Hp,Hp), (1,Hp) f32
    wo_ref, bo_ref,                 # out Linear: (Hp, Vp), (1, Vp) f32 (pad bias -1e30)
    out_ref,        # (1, Bp, Vp)   this step's softmax output block
    hid_ref,        # (L, Bp, Hp)   f32; constant-index output == carried hidden state
):
    Hp = hid_ref.shape[2]
    cdt = wh0_ref.dtype           # MXU operand dtype (f32 or bf16)
    t = pl.program_id(0)

    # Initialize the carried hidden state on the first decode step.
    @pl.when(t == 0)
    def _():
        hid_ref[...] = h_init_ref[...]

    def gru_update(gi, gh, h):
        # gi/gh: (Bp, 3Hp) f32 pre-activations (biases included); h: (Bp, Hp) f32.
        # Gate slices are lane-aligned (Hp is a multiple of 128). f32 VPU/EUP math.
        r = jax.nn.sigmoid(gi[:, 0:Hp] + gh[:, 0:Hp])
        z = jax.nn.sigmoid(gi[:, Hp:2 * Hp] + gh[:, Hp:2 * Hp])
        n = jnp.tanh(gi[:, 2 * Hp:3 * Hp] + r * gh[:, 2 * Hp:3 * Hp])
        return (1.0 - z) * n + z * h

    # ---- GRU layer 0 (input path hoisted to the wrapper) --------------------
    h0 = hid_ref[0]
    gi0 = gi0_ref[0].astype(jnp.float32)
    gh0 = jnp.dot(h0.astype(cdt), wh0_ref[...],
                  preferred_element_type=jnp.float32) + bh0_ref[...]
    h0n = gru_update(gi0, gh0, h0)

    # ---- GRU layer 1 (inter-layer dropout: eval = identity) -----------------
    h1 = hid_ref[1]
    gi1 = jnp.dot(h0n.astype(cdt), wx1_ref[...],
                  preferred_element_type=jnp.float32) + bx1_ref[...]
    gh1 = jnp.dot(h1.astype(cdt), wh1_ref[...],
                  preferred_element_type=jnp.float32) + bh1_ref[...]
    h1n = gru_update(gi1, gh1, h1)

    hid_ref[0] = h0n
    hid_ref[1] = h1n

    # ---- dot attention + softmax over S --------------------------------------
    rnn_out = h1n                                              # (Bp, Hp) f32
    q = rnn_out.astype(cdt)[:, None, :]                        # (Bp, 1, Hp)
    energies = jnp.einsum("bqh,bhs->bqs", q, enc_bhs_ref[...],
                          preferred_element_type=jnp.float32)  # (Bp, 1, S)
    e = jnp.exp(energies - jnp.max(energies, axis=2, keepdims=True))
    attn = e * pl.reciprocal(jnp.sum(e, axis=2, keepdims=True), approx=True)
    context = jnp.einsum("bqs,bsh->bqh", attn.astype(cdt), enc_bsh_ref[...],
                         preferred_element_type=jnp.float32)[:, 0, :]  # (Bp, Hp)

    # ---- concat Linear (split; no lane-axis concat) + tanh -------------------
    concat_out = jnp.tanh(
        jnp.dot(rnn_out.astype(cdt), wc_rnn_ref[...],
                preferred_element_type=jnp.float32)
        + jnp.dot(context.astype(cdt), wc_ctx_ref[...],
                  preferred_element_type=jnp.float32)
        + bc_ref[...])                                         # (Bp, Hp) f32

    # ---- output projection (lane-padded) + softmax with EXACT normalization --
    logits = jnp.dot(concat_out.astype(cdt), wo_ref[...],
                     preferred_element_type=jnp.float32) + bo_ref[...]   # (Bp, Vp)
    p = jnp.exp(logits - jnp.max(logits, axis=1, keepdims=True))
    out_ref[0] = (p / jnp.sum(p, axis=1, keepdims=True)).astype(out_ref.dtype)


# ----------------------------------------------------------------------------
# Host-side parameter packing: fused per-gate slabs padded to 128-lane gate
# boundaries, split concat Linear, lane-padded output projection.
# Weights are stored transposed as (in_features, out_features).
# ----------------------------------------------------------------------------
def _pack_params(params, compute_dtype=jnp.float32):
    H = params["wih0"].shape[0]
    V = params["wo"].shape[1]
    Hp = _round_up(H, 128)
    Vp = _round_up(V, 128)
    cdt = compute_dtype

    def pad2(w, rows, cols):
        return jnp.zeros((rows, cols), jnp.float32).at[:w.shape[0], :w.shape[1]].set(w)

    def gates_fused(w):          # (H, 3H) -> (Hp, 3Hp), gate blocks at k*Hp (r, z, n)
        out = jnp.zeros((Hp, 3 * Hp), jnp.float32)
        for g in range(3):
            out = out.at[:H, g * Hp:g * Hp + H].set(w[:, g * H:(g + 1) * H])
        return out.astype(cdt)

    def bias_fused(b):           # (1, 3H) -> (1, 3Hp), kept f32 (VPU adds)
        out = jnp.zeros((1, 3 * Hp), jnp.float32)
        for g in range(3):
            out = out.at[:, g * Hp:g * Hp + H].set(b[:, g * H:(g + 1) * H])
        return out

    wo_p = pad2(params["wo"], Hp, Vp).astype(cdt)
    bo_p = jnp.full((1, Vp), -1e30, jnp.float32).at[:, :V].set(params["bo"])

    return dict(
        H=H, V=V, Hp=Hp, Vp=Vp,
        emb=pad2(params["embedding"], params["embedding"].shape[0], Hp),  # (V, Hp) f32
        wx0=gates_fused(params["wih0"]), bx0=bias_fused(params["bih0"]),  # wrapper-only
        wh0=gates_fused(params["whh0"]), bh0=bias_fused(params["bhh0"]),
        wx1=gates_fused(params["wih1"]), bx1=bias_fused(params["bih1"]),
        wh1=gates_fused(params["whh1"]), bh1=bias_fused(params["bhh1"]),
        wc_rnn=pad2(params["wc"][:H], Hp, Hp).astype(cdt),
        wc_ctx=pad2(params["wc"][H:2 * H], Hp, Hp).astype(cdt),
        bc=pad2(params["bc"], 1, Hp),
        wo=wo_p, bo=bo_p,
    )


# ----------------------------------------------------------------------------
# Wrappers
# ----------------------------------------------------------------------------
def attn_decoder_decode(ids, last_hidden, encoder_outputs, params,
                        compute_dtype=jnp.float32, out_dtype=jnp.float32):
    """Run T teacher-forced decoder steps inside one pallas_call.

    ids: (T, B) int32; last_hidden: (L=2, B, H); encoder_outputs: (S, B, H).
    Returns (probs (T, B, V) float32, hidden (L, B, H) float32).
    """
    ids = jnp.asarray(ids, jnp.int32)
    T, B = ids.shape
    L, _, H = last_hidden.shape
    S = encoder_outputs.shape[0]
    assert L == 2, "kernel hardcodes the module default n_layers=2"

    cdt = compute_dtype
    pk = _pack_params(params, compute_dtype=cdt)
    Hp, Vp, V = pk["Hp"], pk["Vp"], pk["V"]
    Bp = max(8, _round_up(B, 8))                  # dense sublane tiles

    # ---- hoist: embedding gather + GRU layer-0 input matmul for all T steps ----
    ids_p = jnp.zeros((T, Bp), jnp.int32).at[:, :B].set(
        jnp.clip(ids, 0, pk["emb"].shape[0] - 1))
    x_all = pk["emb"][ids_p.reshape(-1)]                                  # (T*Bp, Hp)
    gi0_all = (jnp.dot(x_all.astype(cdt), pk["wx0"],
                       preferred_element_type=jnp.float32)
               + pk["bx0"]).reshape(T, Bp, 3 * Hp).astype(cdt)

    # ---- pad batch/hidden, build both encoder layouts once per sequence --------
    h0_p = jnp.zeros((L, Bp, Hp), jnp.float32).at[:, :B, :H].set(last_hidden)
    enc_p = jnp.zeros((S, Bp, Hp), jnp.float32).at[:, :B, :H].set(encoder_outputs)
    enc_bsh = jnp.transpose(enc_p, (1, 0, 2)).astype(cdt)                 # (Bp, S, Hp)
    enc_bhs = jnp.transpose(enc_p, (1, 2, 0)).astype(cdt)                 # (Bp, Hp, S)

    resident = (h0_p, enc_bsh, enc_bhs,
                pk["wh0"], pk["bh0"],
                pk["wx1"], pk["bx1"], pk["wh1"], pk["bh1"],
                pk["wc_rnn"], pk["wc_ctx"], pk["bc"],
                pk["wo"], pk["bo"])

    def call(single_buffer_resident):
        def res_spec(a):
            kwargs = {}
            if single_buffer_resident:
                # Constant block index -> no benefit from double buffering.
                kwargs["pipeline_mode"] = pl.Buffered(1)
            return pl.BlockSpec(a.shape, lambda t, _n=a.ndim: (0,) * _n, **kwargs)

        in_specs = ([pl.BlockSpec((1, Bp, 3 * Hp), lambda t: (t, 0, 0))]
                    + [res_spec(a) for a in resident])
        out_specs = (
            pl.BlockSpec((1, Bp, Vp), lambda t: (t, 0, 0)),
            pl.BlockSpec((L, Bp, Hp), lambda t: (0, 0, 0)),   # carried hidden
        )
        grid_spec = pltpu.PrefetchScalarGridSpec(
            num_scalar_prefetch=0, grid=(T,),
            in_specs=in_specs, out_specs=out_specs)

        # Explicit scoped-VMEM limit sized from the actual resident set (+ headroom).
        buf = 1 if single_buffer_resident else 2
        resident_bytes = sum(int(a.size) * a.dtype.itemsize for a in resident)
        resident_bytes += L * Bp * Hp * 4                     # hidden output block
        stream_bytes = 2 * (Bp * 3 * Hp * jnp.dtype(cdt).itemsize
                            + Bp * Vp * jnp.dtype(out_dtype).itemsize)
        vmem_limit = max(32 << 20,
                         min(buf * resident_bytes + stream_bytes + (8 << 20),
                             100 << 20))

        return pl.pallas_call(
            attn_decoder_kernel,
            grid_spec=grid_spec,
            out_shape=(
                jax.ShapeDtypeStruct((T, Bp, Vp), out_dtype),
                jax.ShapeDtypeStruct((L, Bp, Hp), jnp.float32),
            ),
            compiler_params=pltpu.CompilerParams(
                dimension_semantics=("arbitrary",),
                vmem_limit_bytes=int(vmem_limit)),
        )(gi0_all, *resident)

    try:
        probs_pad, hid_pad = call(True)
        jax.block_until_ready((probs_pad, hid_pad))
    except Exception:
        # pl.Buffered(1) single-buffering unsupported on this jax/backend: fall back.
        probs_pad, hid_pad = call(False)

    probs = probs_pad[:, :B, :V].astype(jnp.float32)
    hidden = hid_pad[:, :B, :H]
    return probs, hidden


def attn_decoder_forward(input_step, last_hidden, encoder_outputs, params, **kw):
    """Single decoder step (matches the PyTorch module's forward signature).

    input_step: (1, B) int32; last_hidden: (L, B, H); encoder_outputs: (S, B, H).
    """
    probs, hidden = attn_decoder_decode(jnp.asarray(input_step, jnp.int32),
                                        last_hidden, encoder_outputs, params, **kw)
    return probs[0], hidden


# ----------------------------------------------------------------------------
# Pure-JAX reference (mirrors the PyTorch forward) for correctness checking
# ----------------------------------------------------------------------------
def attn_decoder_reference(input_step, last_hidden, encoder_outputs, params):
    H = last_hidden.shape[2]
    x = params["embedding"][input_step[0]]

    def gru_cell(x, h, wih, whh, bih, bhh):
        gi = x @ wih + bih
        gh = h @ whh + bhh
        r = jax.nn.sigmoid(gi[:, 0:H] + gh[:, 0:H])
        z = jax.nn.sigmoid(gi[:, H:2 * H] + gh[:, H:2 * H])
        n = jnp.tanh(gi[:, 2 * H:3 * H] + r * gh[:, 2 * H:3 * H])
        return (1.0 - z) * n + z * h

    h0 = gru_cell(x, last_hidden[0], params["wih0"], params["whh0"],
                  params["bih0"], params["bhh0"])
    h1 = gru_cell(h0, last_hidden[1], params["wih1"], params["whh1"],
                  params["bih1"], params["bhh1"])
    rnn_output = h1
    energies = jnp.sum(rnn_output[None] * encoder_outputs, axis=2)   # (S, B)
    attn_w = jax.nn.softmax(energies.T, axis=1)                      # (B, S)
    context = jnp.einsum("bs,sbh->bh", attn_w, encoder_outputs)
    concat_output = jnp.tanh(
        jnp.concatenate([rnn_output, context], axis=1) @ params["wc"] + params["bc"])
    output = jax.nn.softmax(concat_output @ params["wo"] + params["bo"], axis=1)
    return output, jnp.stack([h0, h1])


def attn_decoder_reference_decode(ids, last_hidden, encoder_outputs, params):
    outs, hidden = [], last_hidden
    for t in range(ids.shape[0]):
        out, hidden = attn_decoder_reference(ids[t:t + 1], hidden,
                                             encoder_outputs, params)
        outs.append(out)
    return jnp.stack(outs), hidden


# ----------------------------------------------------------------------------
# Main
# ----------------------------------------------------------------------------
if __name__ == "__main__":
    H = 32      # hidden_size
    V = 64      # output_size (vocab)
    B = 2       # batch
    S = 8       # encoder sequence length
    L = 2       # n_layers
    T = 4       # decode steps for the in-kernel loop test

    key = jax.random.PRNGKey(0)
    keys = jax.random.split(key, 20)

    def init(k, shape, scale=0.1):
        return (scale * jax.random.normal(k, shape)).astype(jnp.float32)

    params = {
        "embedding": init(keys[0], (V, H)),
        # GRU layer 0, stored transposed -> (in, 3H); gate order r, z, n
        "wih0": init(keys[1], (H, 3 * H)),
        "whh0": init(keys[2], (H, 3 * H)),
        "bih0": init(keys[3], (1, 3 * H)),
        "bhh0": init(keys[4], (1, 3 * H)),
        # GRU layer 1
        "wih1": init(keys[5], (H, 3 * H)),
        "whh1": init(keys[6], (H, 3 * H)),
        "bih1": init(keys[7], (1, 3 * H)),
        "bhh1": init(keys[8], (1, 3 * H)),
        # concat Linear (2H -> H)
        "wc": init(keys[9], (2 * H, H)),
        "bc": init(keys[10], (1, H)),
        # out Linear (H -> V)
        "wo": init(keys[11], (H, V)),
        "bo": init(keys[12], (1, V)),
    }

    input_step = jax.random.randint(keys[13], (1, B), 0, V, dtype=jnp.int32)
    last_hidden = init(keys[14], (L, B, H), scale=1.0)
    encoder_outputs = init(keys[15], (S, B, H), scale=1.0)

    # ---- single-step check (module semantics), f32 MXU operands -------------
    out, hidden = attn_decoder_forward(input_step, last_hidden, encoder_outputs, params)
    jax.block_until_ready((out, hidden))
    ref_out, ref_hidden = attn_decoder_reference(
        input_step, last_hidden, encoder_outputs, params)

    assert out.shape == (B, V) and hidden.shape == (L, B, H)
    assert jnp.allclose(out, ref_out, atol=2e-3, rtol=2e-3)
    assert jnp.allclose(hidden, ref_hidden, atol=1e-2, rtol=1e-2)
    assert jnp.allclose(jnp.sum(out, axis=1), 1.0, atol=1e-3)   # exact normalization

    # ---- multi-step check: decode loop runs inside the kernel, f32 ----------
    ids = jax.random.randint(keys[16], (T, B), 0, V, dtype=jnp.int32)
    probs_multi, hidden_multi = attn_decoder_decode(
        ids, last_hidden, encoder_outputs, params)
    jax.block_until_ready((probs_multi, hidden_multi))
    ref_probs, ref_hid = attn_decoder_reference_decode(
        ids, last_hidden, encoder_outputs, params)

    assert probs_multi.shape == (T, B, V) and hidden_multi.shape == (L, B, H)
    assert jnp.allclose(probs_multi, ref_probs, atol=2e-3, rtol=2e-3)
    assert jnp.allclose(hidden_multi, ref_hid, atol=1e-2, rtol=1e-2)
    assert jnp.allclose(jnp.sum(probs_multi, axis=2), 1.0, atol=1e-3)

    # ---- perf config: bf16 MXU operands + bf16 probability writeback --------
    probs_bf, hid_bf = attn_decoder_decode(
        ids, last_hidden, encoder_outputs, params,
        compute_dtype=jnp.bfloat16, out_dtype=jnp.bfloat16)
    jax.block_until_ready((probs_bf, hid_bf))
    assert jnp.allclose(probs_bf, ref_probs, atol=2e-2, rtol=2e-2)
    assert jnp.allclose(hid_bf, ref_hid, atol=2e-2, rtol=2e-2)
    assert jnp.allclose(jnp.sum(probs_bf, axis=2), 1.0, atol=1e-2)

    print("KERNEL_OK")
</pallas_src>

<mosaic_0001>
module attributes {stable_mosaic.version = 11 : i64} {
  func.func @attn_decoder_kernel(%arg0: i32, %arg1: memref<1x8x384xf32, #tpu.memory_space<vmem>>, %arg2: memref<2x8x128xf32, #tpu.memory_space<vmem>>, %arg3: memref<8x8x128xf32, #tpu.memory_space<vmem>>, %arg4: memref<8x128x8xf32, #tpu.memory_space<vmem>>, %arg5: memref<128x384xf32, #tpu.memory_space<vmem>>, %arg6: memref<1x384xf32, #tpu.memory_space<vmem>>, %arg7: memref<128x384xf32, #tpu.memory_space<vmem>>, %arg8: memref<1x384xf32, #tpu.memory_space<vmem>>, %arg9: memref<128x384xf32, #tpu.memory_space<vmem>>, %arg10: memref<1x384xf32, #tpu.memory_space<vmem>>, %arg11: memref<128x128xf32, #tpu.memory_space<vmem>>, %arg12: memref<128x128xf32, #tpu.memory_space<vmem>>, %arg13: memref<1x128xf32, #tpu.memory_space<vmem>>, %arg14: memref<128x128xf32, #tpu.memory_space<vmem>>, %arg15: memref<1x128xf32, #tpu.memory_space<vmem>>, %arg16: memref<1x8x128xf32, #tpu.memory_space<vmem>>, %arg17: memref<2x8x128xf32, #tpu.memory_space<vmem>>) attributes {dimension_semantics = [#tpu.dimension_semantics<arbitrary>], iteration_bounds = array<i64: 1>, scalar_prefetch = 0 : i64, scratch_operands = 0 : i64, tpu.core_type = #tpu.core_type<tc>, window_params = [{transform_indices = @transform_0, window_bounds = array<i64: 1, 8, 384>}, {pipeline_mode = #tpu.pipeline_mode<synchronous>, transform_indices = @transform_1, window_bounds = array<i64: 2, 8, 128>}, {pipeline_mode = #tpu.pipeline_mode<synchronous>, transform_indices = @transform_2, window_bounds = array<i64: 8, 8, 128>}, {pipeline_mode = #tpu.pipeline_mode<synchronous>, transform_indices = @transform_3, window_bounds = array<i64: 8, 128, 8>}, {pipeline_mode = #tpu.pipeline_mode<synchronous>, transform_indices = @transform_4, window_bounds = array<i64: 128, 384>}, {pipeline_mode = #tpu.pipeline_mode<synchronous>, transform_indices = @transform_5, window_bounds = array<i64: 1, 384>}, {pipeline_mode = #tpu.pipeline_mode<synchronous>, transform_indices = @transform_6, window_bounds = array<i64: 128, 384>}, {pipeline_mode = #tpu.pipeline_mode<synchronous>, transform_indices = @transform_7, window_bounds = array<i64: 1, 384>}, {pipeline_mode = #tpu.pipeline_mode<synchronous>, transform_indices = @transform_8, window_bounds = array<i64: 128, 384>}, {pipeline_mode = #tpu.pipeline_mode<synchronous>, transform_indices = @transform_9, window_bounds = array<i64: 1, 384>}, {pipeline_mode = #tpu.pipeline_mode<synchronous>, transform_indices = @transform_10, window_bounds = array<i64: 128, 128>}, {pipeline_mode = #tpu.pipeline_mode<synchronous>, transform_indices = @transform_11, window_bounds = array<i64: 128, 128>}, {pipeline_mode = #tpu.pipeline_mode<synchronous>, transform_indices = @transform_12, window_bounds = array<i64: 1, 128>}, {pipeline_mode = #tpu.pipeline_mode<synchronous>, transform_indices = @transform_13, window_bounds = array<i64: 128, 128>}, {pipeline_mode = #tpu.pipeline_mode<synchronous>, transform_indices = @transform_14, window_bounds = array<i64: 1, 128>}, {transform_indices = @transform_15, window_bounds = array<i64: 1, 8, 128>}, {pipeline_mode = #tpu.pipeline_mode<synchronous>, transform_indices = @transform_16, window_bounds = array<i64: 2, 8, 128>}]} {
    %c0_i32 = arith.constant 0 : i32
    %0 = arith.cmpi eq, %arg0, %c0_i32 : i32
    %1 = arith.extui %0 : i1 to i32
    %c0_i32_0 = arith.constant 0 : i32
    %2 = arith.cmpi ne, %1, %c0_i32_0 : i32
    scf.if %2 {
      %c0_62 = arith.constant 0 : index
      %c0_63 = arith.constant 0 : index
      %c0_64 = arith.constant 0 : index
      %124 = vector.load %arg2[%c0_62, %c0_63, %c0_64] : memref<2x8x128xf32, #tpu.memory_space<vmem>>, vector<2x8x128xf32>
      %c0_65 = arith.constant 0 : index
      %c0_66 = arith.constant 0 : index
      %c0_67 = arith.constant 0 : index
      %125 = vector.load %arg17[%c0_65, %c0_66, %c0_67] : memref<2x8x128xf32, #tpu.memory_space<vmem>>, vector<2x8x128xf32>
      tpu.vector_store %arg17[%c0_65, %c0_66, %c0_67], %124 {strides = array<i32>} : memref<2x8x128xf32, #tpu.memory_space<vmem>>, vector<2x8x128xf32>,
    } else {
    }
    %c0 = arith.constant 0 : index
    %c0_1 = arith.constant 0 : index
    %c0_2 = arith.constant 0 : index
    %3 = vector.load %arg17[%c0, %c0_1, %c0_2] : memref<2x8x128xf32, #tpu.memory_space<vmem>>, vector<1x8x128xf32>
    %4 = vector.shape_cast %3 : vector<1x8x128xf32> to vector<8x128xf32>
    %c0_3 = arith.constant 0 : index
    %c0_4 = arith.constant 0 : index
    %c0_5 = arith.constant 0 : index
    %5 = vector.load %arg1[%c0_3, %c0_4, %c0_5] : memref<1x8x384xf32, #tpu.memory_space<vmem>>, vector<1x8x384xf32>
    %6 = vector.shape_cast %5 : vector<1x8x384xf32> to vector<8x384xf32>
    %c0_6 = arith.constant 0 : index
    %c0_7 = arith.constant 0 : index
    %7 = vector.load %arg5[%c0_6, %c0_7] : memref<128x384xf32, #tpu.memory_space<vmem>>, vector<128x384xf32>
    %cst = arith.constant dense<0.000000e+00> : vector<8x384xf32>
    %8 = tpu.matmul %4, %7, %cst {dimension_numbers = #tpu.dot_dimension_numbers<[1], [0], [0], [1], [0, 0, 1, 1], [], []>} : vector<8x128xf32>, vector<128x384xf32>, vector<8x384xf32> -> vector<8x384xf32>
    %c0_8 = arith.constant 0 : index
    %c0_9 = arith.constant 0 : index
    %9 = vector.load %arg6[%c0_8, %c0_9] : memref<1x384xf32, #tpu.memory_space<vmem>>, vector<1x384xf32>
    %10 = vector.broadcast %9 : vector<1x384xf32> to vector<8x384xf32>
    %11 = arith.addf %8, %10 : vector<8x384xf32>
    %12 = vector.extract_strided_slice %6 {offsets = [0, 0], sizes = [8, 128], strides = [1, 1]} : vector<8x384xf32> to vector<8x128xf32>
    %13 = vector.extract_strided_slice %11 {offsets = [0, 0], sizes = [8, 128], strides = [1, 1]} : vector<8x384xf32> to vector<8x128xf32>
    %14 = arith.addf %12, %13 : vector<8x128xf32>
    %15 = arith.negf %14 : vector<8x128xf32>
    %16 = math.exp %15 : vector<8x128xf32>
    %cst_10 = arith.constant 1.000000e+00 : f32
    %17 = vector.broadcast %cst_10 : f32 to vector<8x128xf32>
    %18 = arith.addf %17, %16 : vector<8x128xf32>
    %19 = arith.divf %17, %18 : vector<8x128xf32>
    %20 = vector.extract_strided_slice %6 {offsets = [0, 128], sizes = [8, 128], strides = [1, 1]} : vector<8x384xf32> to vector<8x128xf32>
    %21 = vector.extract_strided_slice %11 {offsets = [0, 128], sizes = [8, 128], strides = [1, 1]} : vector<8x384xf32> to vector<8x128xf32>
    %22 = arith.addf %20, %21 : vector<8x128xf32>
    %23 = arith.negf %22 : vector<8x128xf32>
    %24 = math.exp %23 : vector<8x128xf32>
    %cst_11 = arith.constant 1.000000e+00 : f32
    %25 = vector.broadcast %cst_11 : f32 to vector<8x128xf32>
    %26 = arith.addf %25, %24 : vector<8x128xf32>
    %27 = arith.divf %25, %26 : vector<8x128xf32>
    %28 = vector.extract_strided_slice %6 {offsets = [0, 256], sizes = [8, 128], strides = [1, 1]} : vector<8x384xf32> to vector<8x128xf32>
    %29 = vector.extract_strided_slice %11 {offsets = [0, 256], sizes = [8, 128], strides = [1, 1]} : vector<8x384xf32> to vector<8x128xf32>
    %30 = arith.mulf %19, %29 : vector<8x128xf32>
    %31 = arith.addf %28, %30 : vector<8x128xf32>
    %32 = math.tanh %31 : vector<8x128xf32>
    %cst_12 = arith.constant 1.000000e+00 : f32
    %33 = vector.broadcast %cst_12 : f32 to vector<8x128xf32>
    %34 = arith.subf %33, %27 : vector<8x128xf32>
    %35 = arith.mulf %34, %32 : vector<8x128xf32>
    %36 = arith.mulf %27, %4 : vector<8x128xf32>
    %37 = arith.addf %35, %36 : vector<8x128xf32>
    %c1 = arith.constant 1 : index
    %c0_13 = arith.constant 0 : index
    %c0_14 = arith.constant 0 : index
    %38 = vector.load %arg17[%c1, %c0_13, %c0_14] : memref<2x8x128xf32, #tpu.memory_space<vmem>>, vector<1x8x128xf32>
    %39 = vector.shape_cast %38 : vector<1x8x128xf32> to vector<8x128xf32>
    %c0_15 = arith.constant 0 : index
    %c0_16 = arith.constant 0 : index
    %40 = vector.load %arg7[%c0_15, %c0_16] : memref<128x384xf32, #tpu.memory_space<vmem>>, vector<128x384xf32>
    %cst_17 = arith.constant dense<0.000000e+00> : vector<8x384xf32>
    %41 = tpu.matmul %37, %40, %cst_17 {dimension_numbers = #tpu.dot_dimension_numbers<[1], [0], [0], [1], [0, 0, 1, 1], [], []>} : vector<8x128xf32>, vector<128x384xf32>, vector<8x384xf32> -> vector<8x384xf32>
    %c0_18 = arith.constant 0 : index
    %c0_19 = arith.constant 0 : index
    %42 = vector.load %arg8[%c0_18, %c0_19] : memref<1x384xf32, #tpu.memory_space<vmem>>, vector<1x384xf32>
    %43 = vector.broadcast %42 : vector<1x384xf32> to vector<8x384xf32>
    %44 = arith.addf %41, %43 : vector<8x384xf32>
    %c0_20 = arith.constant 0 : index
    %c0_21 = arith.constant 0 : index
    %45 = vector.load %arg9[%c0_20, %c0_21] : memref<128x384xf32, #tpu.memory_space<vmem>>, vector<128x384xf32>
    %cst_22 = arith.constant dense<0.000000e+00> : vector<8x384xf32>
    %46 = tpu.matmul %39, %45, %cst_22 {dimension_numbers = #tpu.dot_dimension_numbers<[1], [0], [0], [1], [0, 0, 1, 1], [], []>} : vector<8x128xf32>, vector<128x384xf32>, vector<8x384xf32> -> vector<8x384xf32>
    %c0_23 = arith.constant 0 : index
    %c0_24 = arith.constant 0 : index
    %47 = vector.load %arg10[%c0_23, %c0_24] : memref<1x384xf32, #tpu.memory_space<vmem>>, vector<1x384xf32>
    %48 = vector.broadcast %47 : vector<1x384xf32> to vector<8x384xf32>
    %49 = arith.addf %46, %48 : vector<8x384xf32>
    %50 = vector.extract_strided_slice %44 {offsets = [0, 0], sizes = [8, 128], strides = [1, 1]} : vector<8x384xf32> to vector<8x128xf32>
    %51 = vector.extract_strided_slice %49 {offsets = [0, 0], sizes = [8, 128], strides = [1, 1]} : vector<8x384xf32> to vector<8x128xf32>
    %52 = arith.addf %50, %51 : vector<8x128xf32>
    %53 = arith.negf %52 : vector<8x128xf32>
    %54 = math.exp %53 : vector<8x128xf32>
    %cst_25 = arith.constant 1.000000e+00 : f32
    %55 = vector.broadcast %cst_25 : f32 to vector<8x128xf32>
    %56 = arith.addf %55, %54 : vector<8x128xf32>
    %57 = arith.divf %55, %56 : vector<8x128xf32>
    %58 = vector.extract_strided_slice %44 {offsets = [0, 128], sizes = [8, 128], strides = [1, 1]} : vector<8x384xf32> to vector<8x128xf32>
    %59 = vector.extract_strided_slice %49 {offsets = [0, 128], sizes = [8, 128], strides = [1, 1]} : vector<8x384xf32> to vector<8x128xf32>
    %60 = arith.addf %58, %59 : vector<8x128xf32>
    %61 = arith.negf %60 : vector<8x128xf32>
    %62 = math.exp %61 : vector<8x128xf32>
    %cst_26 = arith.constant 1.000000e+00 : f32
    %63 = vector.broadcast %cst_26 : f32 to vector<8x128xf32>
    %64 = arith.addf %63, %62 : vector<8x128xf32>
    %65 = arith.divf %63, %64 : vector<8x128xf32>
    %66 = vector.extract_strided_slice %44 {offsets = [0, 256], sizes = [8, 128], strides = [1, 1]} : vector<8x384xf32> to vector<8x128xf32>
    %67 = vector.extract_strided_slice %49 {offsets = [0, 256], sizes = [8, 128], strides = [1, 1]} : vector<8x384xf32> to vector<8x128xf32>
    %68 = arith.mulf %57, %67 : vector<8x128xf32>
    %69 = arith.addf %66, %68 : vector<8x128xf32>
    %70 = math.tanh %69 : vector<8x128xf32>
    %cst_27 = arith.constant 1.000000e+00 : f32
    %71 = vector.broadcast %cst_27 : f32 to vector<8x128xf32>
    %72 = arith.subf %71, %65 : vector<8x128xf32>
    %73 = arith.mulf %72, %70 : vector<8x128xf32>
    %74 = arith.mulf %65, %39 : vector<8x128xf32>
    %75 = arith.addf %73, %74 : vector<8x128xf32>
    %c0_28 = arith.constant 0 : index
    %c0_29 = arith.constant 0 : index
    %c0_30 = arith.constant 0 : index
    %76 = vector.load %arg17[%c0_28, %c0_29, %c0_30] : memref<2x8x128xf32, #tpu.memory_space<vmem>>, vector<1x8x128xf32>
    %77 = vector.shape_cast %76 : vector<1x8x128xf32> to vector<8x128xf32>
    %78 = vector.shape_cast %37 : vector<8x128xf32> to vector<1x8x128xf32>
    tpu.vector_store %arg17[%c0_28, %c0_29, %c0_30], %78 {strides = array<i32>} : memref<2x8x128xf32, #tpu.memory_space<vmem>>, vector<1x8x128xf32>,
    %c1_31 = arith.constant 1 : index
    %c0_32 = arith.constant 0 : index
    %c0_33 = arith.constant 0 : index
    %79 = vector.load %arg17[%c1_31, %c0_32, %c0_33] : memref<2x8x128xf32, #tpu.memory_space<vmem>>, vector<1x8x128xf32>
    %80 = vector.shape_cast %79 : vector<1x8x128xf32> to vector<8x128xf32>
    %81 = vector.shape_cast %75 : vector<8x128xf32> to vector<1x8x128xf32>
    tpu.vector_store %arg17[%c1_31, %c0_32, %c0_33], %81 {strides = array<i32>} : memref<2x8x128xf32, #tpu.memory_space<vmem>>, vector<1x8x128xf32>,
    %82 = vector.shape_cast %75 : vector<8x128xf32> to vector<8x1x128xf32>
    %c0_34 = arith.constant 0 : index
    %c0_35 = arith.constant 0 : index
    %c0_36 = arith.constant 0 : index
    %83 = vector.load %arg4[%c0_34, %c0_35, %c0_36] : memref<8x128x8xf32, #tpu.memory_space<vmem>>, vector<8x128x8xf32>
    "tpu.trace_start"() <{level = 10 : i32, message = "bqh,bhs->bqs"}> : () -> ()
    %cst_37 = arith.constant dense<0.000000e+00> : vector<8x1x8xf32>
    %84 = tpu.matmul %82, %83, %cst_37 {dimension_numbers = #tpu.dot_dimension_numbers<[2], [1], [1], [2], [0, 0, 0, 1, 1, 2], [0], [0]>} : vector<8x1x128xf32>, vector<8x128x8xf32>, vector<8x1x8xf32> -> vector<8x1x8xf32>
    "tpu.trace_stop"() : () -> ()
    %cst_38 = arith.constant dense<0xFF800000> : vector<8x1xf32>
    %85 = vector.multi_reduction <maximumf>, %84, %cst_38 [2] : vector<8x1x8xf32> to vector<8x1xf32>
    %86 = vector.shape_cast %85 : vector<8x1xf32> to vector<8x1x1xf32>
    %87 = vector.broadcast %86 : vector<8x1x1xf32> to vector<8x1x8xf32>
    %88 = arith.subf %84, %87 : vector<8x1x8xf32>
    %89 = math.exp %88 : vector<8x1x8xf32>
    %cst_39 = arith.constant dense<0.000000e+00> : vector<8x1xf32>
    %90 = vector.multi_reduction <add>, %89, %cst_39 [2] : vector<8x1x8xf32> to vector<8x1xf32>
    %91 = vector.shape_cast %90 : vector<8x1xf32> to vector<8x1x1xf32>
    %92 = tpu.reciprocal %91 {approx = true} : vector<8x1x1xf32> -> vector<8x1x1xf32>
    %93 = vector.broadcast %92 : vector<8x1x1xf32> to vector<8x1x8xf32>
    %94 = arith.mulf %89, %93 : vector<8x1x8xf32>
    %c0_40 = arith.constant 0 : index
    %c0_41 = arith.constant 0 : index
    %c0_42 = arith.constant 0 : index
    %95 = vector.load %arg3[%c0_40, %c0_41, %c0_42] : memref<8x8x128xf32, #tpu.memory_space<vmem>>, vector<8x8x128xf32>
    "tpu.trace_start"() <{level = 10 : i32, message = "bqs,bsh->bqh"}> : () -> ()
    %cst_43 = arith.constant dense<0.000000e+00> : vector<8x1x128xf32>
    %96 = tpu.matmul %94, %95, %cst_43 {dimension_numbers = #tpu.dot_dimension_numbers<[2], [1], [1], [2], [0, 0, 0, 1, 1, 2], [0], [0]>} : vector<8x1x8xf32>, vector<8x8x128xf32>, vector<8x1x128xf32> -> vector<8x1x128xf32>
    "tpu.trace_stop"() : () -> ()
    %97 = vector.shape_cast %96 : vector<8x1x128xf32> to vector<8x128xf32>
    %c0_44 = arith.constant 0 : index
    %c0_45 = arith.constant 0 : index
    %98 = vector.load %arg11[%c0_44, %c0_45] : memref<128x128xf32, #tpu.memory_space<vmem>>, vector<128x128xf32>
    %cst_46 = arith.constant dense<0.000000e+00> : vector<8x128xf32>
    %99 = tpu.matmul %75, %98, %cst_46 {dimension_numbers = #tpu.dot_dimension_numbers<[1], [0], [0], [1], [0, 0, 1, 1], [], []>} : vector<8x128xf32>, vector<128x128xf32>, vector<8x128xf32> -> vector<8x128xf32>
    %c0_47 = arith.constant 0 : index
    %c0_48 = arith.constant 0 : index
    %100 = vector.load %arg12[%c0_47, %c0_48] : memref<128x128xf32, #tpu.memory_space<vmem>>, vector<128x128xf32>
    %cst_49 = arith.constant dense<0.000000e+00> : vector<8x128xf32>
    %101 = tpu.matmul %97, %100, %cst_49 {dimension_numbers = #tpu.dot_dimension_numbers<[1], [0], [0], [1], [0, 0, 1, 1], [], []>} : vector<8x128xf32>, vector<128x128xf32>, vector<8x128xf32> -> vector<8x128xf32>
    %102 = arith.addf %99, %101 : vector<8x128xf32>
    %c0_50 = arith.constant 0 : index
    %c0_51 = arith.constant 0 : index
    %103 = vector.load %arg13[%c0_50, %c0_51] : memref<1x128xf32, #tpu.memory_space<vmem>>, vector<1x128xf32>
    %104 = vector.broadcast %103 : vector<1x128xf32> to vector<8x128xf32>
    %105 = arith.addf %102, %104 : vector<8x128xf32>
    %106 = math.tanh %105 : vector<8x128xf32>
    %c0_52 = arith.constant 0 : index
    %c0_53 = arith.constant 0 : index
    %107 = vector.load %arg14[%c0_52, %c0_53] : memref<128x128xf32, #tpu.memory_space<vmem>>, vector<128x128xf32>
    %cst_54 = arith.constant dense<0.000000e+00> : vector<8x128xf32>
    %108 = tpu.matmul %106, %107, %cst_54 {dimension_numbers = #tpu.dot_dimension_numbers<[1], [0], [0], [1], [0, 0, 1, 1], [], []>} : vector<8x128xf32>, vector<128x128xf32>, vector<8x128xf32> -> vector<8x128xf32>
    %c0_55 = arith.constant 0 : index
    %c0_56 = arith.constant 0 : index
    %109 = vector.load %arg15[%c0_55, %c0_56] : memref<1x128xf32, #tpu.memory_space<vmem>>, vector<1x128xf32>
    %110 = vector.broadcast %109 : vector<1x128xf32> to vector<8x128xf32>
    %111 = arith.addf %108, %110 : vector<8x128xf32>
    %cst_57 = arith.constant dense<0xFF800000> : vector<8xf32>
    %112 = vector.multi_reduction <maximumf>, %111, %cst_57 [1] : vector<8x128xf32> to vector<8xf32>
    %113 = vector.shape_cast %112 : vector<8xf32> to vector<8x1xf32>
    %114 = vector.broadcast %113 : vector<8x1xf32> to vector<8x128xf32>
    %115 = arith.subf %111, %114 : vector<8x128xf32>
    %116 = math.exp %115 : vector<8x128xf32>
    %cst_58 = arith.constant dense<0.000000e+00> : vector<8xf32>
    %117 = vector.multi_reduction <add>, %116, %cst_58 [1] : vector<8x128xf32> to vector<8xf32>
    %118 = vector.shape_cast %117 : vector<8xf32> to vector<8x1xf32>
    %119 = vector.broadcast %118 : vector<8x1xf32> to vector<8x128xf32>
    %120 = arith.divf %116, %119 : vector<8x128xf32>
    %c0_59 = arith.constant 0 : index
    %c0_60 = arith.constant 0 : index
    %c0_61 = arith.constant 0 : index
    %121 = vector.load %arg16[%c0_59, %c0_60, %c0_61] : memref<1x8x128xf32, #tpu.memory_space<vmem>>, vector<1x8x128xf32>
    %122 = vector.shape_cast %121 : vector<1x8x128xf32> to vector<8x128xf32>
    %123 = vector.shape_cast %120 : vector<8x128xf32> to vector<1x8x128xf32>
    tpu.vector_store %arg16[%c0_59, %c0_60, %c0_61], %123 {strides = array<i32>} : memref<1x8x128xf32, #tpu.memory_space<vmem>>, vector<1x8x128xf32>,
    return
  }
  func.func @transform_0(%arg0: i32) -> (i32, i32, i32) {
    %c0_i32 = arith.constant 0 : i32
    %c0_i32_0 = arith.constant 0 : i32
    %c0_i32_1 = arith.constant 0 : i32
    return %arg0, %c0_i32, %c0_i32_0 : i32, i32, i32
  }
  func.func @transform_1(%arg0: i32) -> (i32, i32, i32) {
    %c0_i32 = arith.constant 0 : i32
    %c0_i32_0 = arith.constant 0 : i32
    %c0_i32_1 = arith.constant 0 : i32
    %c0_i32_2 = arith.constant 0 : i32
    return %c0_i32, %c0_i32_0, %c0_i32_1 : i32, i32, i32
  }
  func.func @transform_2(%arg0: i32) -> (i32, i32, i32) {
    %c0_i32 = arith.constant 0 : i32
    %c0_i32_0 = arith.constant 0 : i32
    %c0_i32_1 = arith.constant 0 : i32
    %c0_i32_2 = arith.constant 0 : i32
    return %c0_i32, %c0_i32_0, %c0_i32_1 : i32, i32, i32
  }
  func.func @transform_3(%arg0: i32) -> (i32, i32, i32) {
    %c0_i32 = arith.constant 0 : i32
    %c0_i32_0 = arith.constant 0 : i32
    %c0_i32_1 = arith.constant 0 : i32
    %c0_i32_2 = arith.constant 0 : i32
    return %c0_i32, %c0_i32_0, %c0_i32_1 : i32, i32, i32
  }
  func.func @transform_4(%arg0: i32) -> (i32, i32) {
    %c0_i32 = arith.constant 0 : i32
    %c0_i32_0 = arith.constant 0 : i32
    %c0_i32_1 = arith.constant 0 : i32
    return %c0_i32, %c0_i32_0 : i32, i32
  }
  func.func @transform_5(%arg0: i32) -> (i32, i32) {
    %c0_i32 = arith.constant 0 : i32
    %c0_i32_0 = arith.constant 0 : i32
    %c0_i32_1 = arith.constant 0 : i32
    return %c0_i32, %c0_i32_0 : i32, i32
  }
  func.func @transform_6(%arg0: i32) -> (i32, i32) {
    %c0_i32 = arith.constant 0 : i32
    %c0_i32_0 = arith.constant 0 : i32
    %c0_i32_1 = arith.constant 0 : i32
    return %c0_i32, %c0_i32_0 : i32, i32
  }
  func.func @transform_7(%arg0: i32) -> (i32, i32) {
    %c0_i32 = arith.constant 0 : i32
    %c0_i32_0 = arith.constant 0 : i32
    %c0_i32_1 = arith.constant 0 : i32
    return %c0_i32, %c0_i32_0 : i32, i32
  }
  func.func @transform_8(%arg0: i32) -> (i32, i32) {
    %c0_i32 = arith.constant 0 : i32
    %c0_i32_0 = arith.constant 0 : i32
    %c0_i32_1 = arith.constant 0 : i32
    return %c0_i32, %c0_i32_0 : i32, i32
  }
  func.func @transform_9(%arg0: i32) -> (i32, i32) {
    %c0_i32 = arith.constant 0 : i32
    %c0_i32_0 = arith.constant 0 : i32
    %c0_i32_1 = arith.constant 0 : i32
    return %c0_i32, %c0_i32_0 : i32, i32
  }
  func.func @transform_10(%arg0: i32) -> (i32, i32) {
    %c0_i32 = arith.constant 0 : i32
    %c0_i32_0 = arith.constant 0 : i32
    %c0_i32_1 = arith.constant 0 : i32
    return %c0_i32, %c0_i32_0 : i32, i32
  }
  func.func @transform_11(%arg0: i32) -> (i32, i32) {
    %c0_i32 = arith.constant 0 : i32
    %c0_i32_0 = arith.constant 0 : i32
    %c0_i32_1 = arith.constant 0 : i32
    return %c0_i32, %c0_i32_0 : i32, i32
  }
  func.func @transform_12(%arg0: i32) -> (i32, i32) {
    %c0_i32 = arith.constant 0 : i32
    %c0_i32_0 = arith.constant 0 : i32
    %c0_i32_1 = arith.constant 0 : i32
    return %c0_i32, %c0_i32_0 : i32, i32
  }
  func.func @transform_13(%arg0: i32) -> (i32, i32) {
    %c0_i32 = arith.constant 0 : i32
    %c0_i32_0 = arith.constant 0 : i32
    %c0_i32_1 = arith.constant 0 : i32
    return %c0_i32, %c0_i32_0 : i32, i32
  }
  func.func @transform_14(%arg0: i32) -> (i32, i32) {
    %c0_i32 = arith.constant 0 : i32
    %c0_i32_0 = arith.constant 0 : i32
    %c0_i32_1 = arith.constant 0 : i32
    return %c0_i32, %c0_i32_0 : i32, i32
  }
  func.func @transform_15(%arg0: i32) -> (i32, i32, i32) {
    %c0_i32 = arith.constant 0 : i32
    %c0_i32_0 = arith.constant 0 : i32
    %c0_i32_1 = arith.constant 0 : i32
    return %arg0, %c0_i32, %c0_i32_0 : i32, i32, i32
  }
  func.func @transform_16(%arg0: i32) -> (i32, i32, i32) {
    %c0_i32 = arith.constant 0 : i32
    %c0_i32_0 = arith.constant 0 : i32
    %c0_i32_1 = arith.constant 0 : i32
    %c0_i32_2 = arith.constant 0 : i32
    return %c0_i32, %c0_i32_0, %c0_i32_1 : i32, i32, i32
  }
}

module attributes {stable_mosaic.version = 11 : i64} {
  func.func @attn_decoder_kernel(%arg0: i32, %arg1: memref<1x8x384xf32, #tpu.memory_space<vmem>>, %arg2: memref<2x8x128xf32, #tpu.memory_space<vmem>>, %arg3: memref<8x8x128xf32, #tpu.memory_space<vmem>>, %arg4: memref<8x128x8xf32, #tpu.memory_space<vmem>>, %arg5: memref<128x384xf32, #tpu.memory_space<vmem>>, %arg6: memref<1x384xf32, #tpu.memory_space<vmem>>, %arg7: memref<128x384xf32, #tpu.memory_space<vmem>>, %arg8: memref<1x384xf32, #tpu.memory_space<vmem>>, %arg9: memref<128x384xf32, #tpu.memory_space<vmem>>, %arg10: memref<1x384xf32, #tpu.memory_space<vmem>>, %arg11: memref<128x128xf32, #tpu.memory_space<vmem>>, %arg12: memref<128x128xf32, #tpu.memory_space<vmem>>, %arg13: memref<1x128xf32, #tpu.memory_space<vmem>>, %arg14: memref<128x128xf32, #tpu.memory_space<vmem>>, %arg15: memref<1x128xf32, #tpu.memory_space<vmem>>, %arg16: memref<1x8x128xf32, #tpu.memory_space<vmem>>, %arg17: memref<2x8x128xf32, #tpu.memory_space<vmem>>) attributes {dimension_semantics = [#tpu.dimension_semantics<arbitrary>], iteration_bounds = array<i64: 1>, scalar_prefetch = 0 : i64, scratch_operands = 0 : i64, tpu.core_type = #tpu.core_type<tc>, window_params = [{transform_indices = @transform_0, window_bounds = array<i64: 1, 8, 384>}, {pipeline_mode = #tpu.pipeline_mode<synchronous>, transform_indices = @transform_1, window_bounds = array<i64: 2, 8, 128>}, {pipeline_mode = #tpu.pipeline_mode<synchronous>, transform_indices = @transform_2, window_bounds = array<i64: 8, 8, 128>}, {pipeline_mode = #tpu.pipeline_mode<synchronous>, transform_indices = @transform_3, window_bounds = array<i64: 8, 128, 8>}, {pipeline_mode = #tpu.pipeline_mode<synchronous>, transform_indices = @transform_4, window_bounds = array<i64: 128, 384>}, {pipeline_mode = #tpu.pipeline_mode<synchronous>, transform_indices = @transform_5, window_bounds = array<i64: 1, 384>}, {pipeline_mode = #tpu.pipeline_mode<synchronous>, transform_indices = @transform_6, window_bounds = array<i64: 128, 384>}, {pipeline_mode = #tpu.pipeline_mode<synchronous>, transform_indices = @transform_7, window_bounds = array<i64: 1, 384>}, {pipeline_mode = #tpu.pipeline_mode<synchronous>, transform_indices = @transform_8, window_bounds = array<i64: 128, 384>}, {pipeline_mode = #tpu.pipeline_mode<synchronous>, transform_indices = @transform_9, window_bounds = array<i64: 1, 384>}, {pipeline_mode = #tpu.pipeline_mode<synchronous>, transform_indices = @transform_10, window_bounds = array<i64: 128, 128>}, {pipeline_mode = #tpu.pipeline_mode<synchronous>, transform_indices = @transform_11, window_bounds = array<i64: 128, 128>}, {pipeline_mode = #tpu.pipeline_mode<synchronous>, transform_indices = @transform_12, window_bounds = array<i64: 1, 128>}, {pipeline_mode = #tpu.pipeline_mode<synchronous>, transform_indices = @transform_13, window_bounds = array<i64: 128, 128>}, {pipeline_mode = #tpu.pipeline_mode<synchronous>, transform_indices = @transform_14, window_bounds = array<i64: 1, 128>}, {transform_indices = @transform_15, window_bounds = array<i64: 1, 8, 128>}, {pipeline_mode = #tpu.pipeline_mode<synchronous>, transform_indices = @transform_16, window_bounds = array<i64: 2, 8, 128>}]} {
    %c0_i32 = arith.constant 0 : i32
    %0 = arith.cmpi eq, %arg0, %c0_i32 : i32
    %1 = arith.extui %0 : i1 to i32
    %c0_i32_0 = arith.constant 0 : i32
    %2 = arith.cmpi ne, %1, %c0_i32_0 : i32
    scf.if %2 {
      %c0_62 = arith.constant 0 : index
      %c0_63 = arith.constant 0 : index
      %c0_64 = arith.constant 0 : index
      %124 = vector.load %arg2[%c0_62, %c0_63, %c0_64] : memref<2x8x128xf32, #tpu.memory_space<vmem>>, vector<2x8x128xf32>
      %c0_65 = arith.constant 0 : index
      %c0_66 = arith.constant 0 : index
      %c0_67 = arith.constant 0 : index
      %125 = vector.load %arg17[%c0_65, %c0_66, %c0_67] : memref<2x8x128xf32, #tpu.memory_space<vmem>>, vector<2x8x128xf32>
      tpu.vector_store %arg17[%c0_65, %c0_66, %c0_67], %124 {strides = array<i32>} : memref<2x8x128xf32, #tpu.memory_space<vmem>>, vector<2x8x128xf32>,
    } else {
    }
    %c0 = arith.constant 0 : index
    %c0_1 = arith.constant 0 : index
    %c0_2 = arith.constant 0 : index
    %3 = vector.load %arg17[%c0, %c0_1, %c0_2] : memref<2x8x128xf32, #tpu.memory_space<vmem>>, vector<1x8x128xf32>
    %4 = vector.shape_cast %3 : vector<1x8x128xf32> to vector<8x128xf32>
    %c0_3 = arith.constant 0 : index
    %c0_4 = arith.constant 0 : index
    %c0_5 = arith.constant 0 : index
    %5 = vector.load %arg1[%c0_3, %c0_4, %c0_5] : memref<1x8x384xf32, #tpu.memory_space<vmem>>, vector<1x8x384xf32>
    %6 = vector.shape_cast %5 : vector<1x8x384xf32> to vector<8x384xf32>
    %c0_6 = arith.constant 0 : index
    %c0_7 = arith.constant 0 : index
    %7 = vector.load %arg5[%c0_6, %c0_7] : memref<128x384xf32, #tpu.memory_space<vmem>>, vector<128x384xf32>
    %cst = arith.constant dense<0.000000e+00> : vector<8x384xf32>
    %8 = tpu.matmul %4, %7, %cst {dimension_numbers = #tpu.dot_dimension_numbers<[1], [0], [0], [1], [0, 0, 1, 1], [], []>} : vector<8x128xf32>, vector<128x384xf32>, vector<8x384xf32> -> vector<8x384xf32>
    %c0_8 = arith.constant 0 : index
    %c0_9 = arith.constant 0 : index
    %9 = vector.load %arg6[%c0_8, %c0_9] : memref<1x384xf32, #tpu.memory_space<vmem>>, vector<1x384xf32>
    %10 = vector.broadcast %9 : vector<1x384xf32> to vector<8x384xf32>
    %11 = arith.addf %8, %10 : vector<8x384xf32>
    %12 = vector.extract_strided_slice %6 {offsets = [0, 0], sizes = [8, 128], strides = [1, 1]} : vector<8x384xf32> to vector<8x128xf32>
    %13 = vector.extract_strided_slice %11 {offsets = [0, 0], sizes = [8, 128], strides = [1, 1]} : vector<8x384xf32> to vector<8x128xf32>
    %14 = arith.addf %12, %13 : vector<8x128xf32>
    %15 = arith.negf %14 : vector<8x128xf32>
    %16 = math.exp %15 : vector<8x128xf32>
    %cst_10 = arith.constant 1.000000e+00 : f32
    %17 = vector.broadcast %cst_10 : f32 to vector<8x128xf32>
    %18 = arith.addf %17, %16 : vector<8x128xf32>
    %19 = arith.divf %17, %18 : vector<8x128xf32>
    %20 = vector.extract_strided_slice %6 {offsets = [0, 128], sizes = [8, 128], strides = [1, 1]} : vector<8x384xf32> to vector<8x128xf32>
    %21 = vector.extract_strided_slice %11 {offsets = [0, 128], sizes = [8, 128], strides = [1, 1]} : vector<8x384xf32> to vector<8x128xf32>
    %22 = arith.addf %20, %21 : vector<8x128xf32>
    %23 = arith.negf %22 : vector<8x128xf32>
    %24 = math.exp %23 : vector<8x128xf32>
    %cst_11 = arith.constant 1.000000e+00 : f32
    %25 = vector.broadcast %cst_11 : f32 to vector<8x128xf32>
    %26 = arith.addf %25, %24 : vector<8x128xf32>
    %27 = arith.divf %25, %26 : vector<8x128xf32>
    %28 = vector.extract_strided_slice %6 {offsets = [0, 256], sizes = [8, 128], strides = [1, 1]} : vector<8x384xf32> to vector<8x128xf32>
    %29 = vector.extract_strided_slice %11 {offsets = [0, 256], sizes = [8, 128], strides = [1, 1]} : vector<8x384xf32> to vector<8x128xf32>
    %30 = arith.mulf %19, %29 : vector<8x128xf32>
    %31 = arith.addf %28, %30 : vector<8x128xf32>
    %32 = math.tanh %31 : vector<8x128xf32>
    %cst_12 = arith.constant 1.000000e+00 : f32
    %33 = vector.broadcast %cst_12 : f32 to vector<8x128xf32>
    %34 = arith.subf %33, %27 : vector<8x128xf32>
    %35 = arith.mulf %34, %32 : vector<8x128xf32>
    %36 = arith.mulf %27, %4 : vector<8x128xf32>
    %37 = arith.addf %35, %36 : vector<8x128xf32>
    %c1 = arith.constant 1 : index
    %c0_13 = arith.constant 0 : index
    %c0_14 = arith.constant 0 : index
    %38 = vector.load %arg17[%c1, %c0_13, %c0_14] : memref<2x8x128xf32, #tpu.memory_space<vmem>>, vector<1x8x128xf32>
    %39 = vector.shape_cast %38 : vector<1x8x128xf32> to vector<8x128xf32>
    %c0_15 = arith.constant 0 : index
    %c0_16 = arith.constant 0 : index
    %40 = vector.load %arg7[%c0_15, %c0_16] : memref<128x384xf32, #tpu.memory_space<vmem>>, vector<128x384xf32>
    %cst_17 = arith.constant dense<0.000000e+00> : vector<8x384xf32>
    %41 = tpu.matmul %37, %40, %cst_17 {dimension_numbers = #tpu.dot_dimension_numbers<[1], [0], [0], [1], [0, 0, 1, 1], [], []>} : vector<8x128xf32>, vector<128x384xf32>, vector<8x384xf32> -> vector<8x384xf32>
    %c0_18 = arith.constant 0 : index
    %c0_19 = arith.constant 0 : index
    %42 = vector.load %arg8[%c0_18, %c0_19] : memref<1x384xf32, #tpu.memory_space<vmem>>, vector<1x384xf32>
    %43 = vector.broadcast %42 : vector<1x384xf32> to vector<8x384xf32>
    %44 = arith.addf %41, %43 : vector<8x384xf32>
    %c0_20 = arith.constant 0 : index
    %c0_21 = arith.constant 0 : index
    %45 = vector.load %arg9[%c0_20, %c0_21] : memref<128x384xf32, #tpu.memory_space<vmem>>, vector<128x384xf32>
    %cst_22 = arith.constant dense<0.000000e+00> : vector<8x384xf32>
    %46 = tpu.matmul %39, %45, %cst_22 {dimension_numbers = #tpu.dot_dimension_numbers<[1], [0], [0], [1], [0, 0, 1, 1], [], []>} : vector<8x128xf32>, vector<128x384xf32>, vector<8x384xf32> -> vector<8x384xf32>
    %c0_23 = arith.constant 0 : index
    %c0_24 = arith.constant 0 : index
    %47 = vector.load %arg10[%c0_23, %c0_24] : memref<1x384xf32, #tpu.memory_space<vmem>>, vector<1x384xf32>
    %48 = vector.broadcast %47 : vector<1x384xf32> to vector<8x384xf32>
    %49 = arith.addf %46, %48 : vector<8x384xf32>
    %50 = vector.extract_strided_slice %44 {offsets = [0, 0], sizes = [8, 128], strides = [1, 1]} : vector<8x384xf32> to vector<8x128xf32>
    %51 = vector.extract_strided_slice %49 {offsets = [0, 0], sizes = [8, 128], strides = [1, 1]} : vector<8x384xf32> to vector<8x128xf32>
    %52 = arith.addf %50, %51 : vector<8x128xf32>
    %53 = arith.negf %52 : vector<8x128xf32>
    %54 = math.exp %53 : vector<8x128xf32>
    %cst_25 = arith.constant 1.000000e+00 : f32
    %55 = vector.broadcast %cst_25 : f32 to vector<8x128xf32>
    %56 = arith.addf %55, %54 : vector<8x128xf32>
    %57 = arith.divf %55, %56 : vector<8x128xf32>
    %58 = vector.extract_strided_slice %44 {offsets = [0, 128], sizes = [8, 128], strides = [1, 1]} : vector<8x384xf32> to vector<8x128xf32>
    %59 = vector.extract_strided_slice %49 {offsets = [0, 128], sizes = [8, 128], strides = [1, 1]} : vector<8x384xf32> to vector<8x128xf32>
    %60 = arith.addf %58, %59 : vector<8x128xf32>
    %61 = arith.negf %60 : vector<8x128xf32>
    %62 = math.exp %61 : vector<8x128xf32>
    %cst_26 = arith.constant 1.000000e+00 : f32
    %63 = vector.broadcast %cst_26 : f32 to vector<8x128xf32>
    %64 = arith.addf %63, %62 : vector<8x128xf32>
    %65 = arith.divf %63, %64 : vector<8x128xf32>
    %66 = vector.extract_strided_slice %44 {offsets = [0, 256], sizes = [8, 128], strides = [1, 1]} : vector<8x384xf32> to vector<8x128xf32>
    %67 = vector.extract_strided_slice %49 {offsets = [0, 256], sizes = [8, 128], strides = [1, 1]} : vector<8x384xf32> to vector<8x128xf32>
    %68 = arith.mulf %57, %67 : vector<8x128xf32>
    %69 = arith.addf %66, %68 : vector<8x128xf32>
    %70 = math.tanh %69 : vector<8x128xf32>
    %cst_27 = arith.constant 1.000000e+00 : f32
    %71 = vector.broadcast %cst_27 : f32 to vector<8x128xf32>
    %72 = arith.subf %71, %65 : vector<8x128xf32>
    %73 = arith.mulf %72, %70 : vector<8x128xf32>
    %74 = arith.mulf %65, %39 : vector<8x128xf32>
    %75 = arith.addf %73, %74 : vector<8x128xf32>
    %c0_28 = arith.constant 0 : index
    %c0_29 = arith.constant 0 : index
    %c0_30 = arith.constant 0 : index
    %76 = vector.load %arg17[%c0_28, %c0_29, %c0_30] : memref<2x8x128xf32, #tpu.memory_space<vmem>>, vector<1x8x128xf32>
    %77 = vector.shape_cast %76 : vector<1x8x128xf32> to vector<8x128xf32>
    %78 = vector.shape_cast %37 : vector<8x128xf32> to vector<1x8x128xf32>
    tpu.vector_store %arg17[%c0_28, %c0_29, %c0_30], %78 {strides = array<i32>} : memref<2x8x128xf32, #tpu.memory_space<vmem>>, vector<1x8x128xf32>,
    %c1_31 = arith.constant 1 : index
    %c0_32 = arith.constant 0 : index
    %c0_33 = arith.constant 0 : index
    %79 = vector.load %arg17[%c1_31, %c0_32, %c0_33] : memref<2x8x128xf32, #tpu.memory_space<vmem>>, vector<1x8x128xf32>
    %80 = vector.shape_cast %79 : vector<1x8x128xf32> to vector<8x128xf32>
    %81 = vector.shape_cast %75 : vector<8x128xf32> to vector<1x8x128xf32>
    tpu.vector_store %arg17[%c1_31, %c0_32, %c0_33], %81 {strides = array<i32>} : memref<2x8x128xf32, #tpu.memory_space<vmem>>, vector<1x8x128xf32>,
    %82 = vector.shape_cast %75 : vector<8x128xf32> to vector<8x1x128xf32>
    %c0_34 = arith.constant 0 : index
    %c0_35 = arith.constant 0 : index
    %c0_36 = arith.constant 0 : index
    %83 = vector.load %arg4[%c0_34, %c0_35, %c0_36] : memref<8x128x8xf32, #tpu.memory_space<vmem>>, vector<8x128x8xf32>
    "tpu.trace_start"() <{level = 10 : i32, message = "bqh,bhs->bqs"}> : () -> ()
    %cst_37 = arith.constant dense<0.000000e+00> : vector<8x1x8xf32>
    %84 = tpu.matmul %82, %83, %cst_37 {dimension_numbers = #tpu.dot_dimension_numbers<[2], [1], [1], [2], [0, 0, 0, 1, 1, 2], [0], [0]>} : vector<8x1x128xf32>, vector<8x128x8xf32>, vector<8x1x8xf32> -> vector<8x1x8xf32>
    "tpu.trace_stop"() : () -> ()
    %cst_38 = arith.constant dense<0xFF800000> : vector<8x1xf32>
    %85 = vector.multi_reduction <maximumf>, %84, %cst_38 [2] : vector<8x1x8xf32> to vector<8x1xf32>
    %86 = vector.shape_cast %85 : vector<8x1xf32> to vector<8x1x1xf32>
    %87 = vector.broadcast %86 : vector<8x1x1xf32> to vector<8x1x8xf32>
    %88 = arith.subf %84, %87 : vector<8x1x8xf32>
    %89 = math.exp %88 : vector<8x1x8xf32>
    %cst_39 = arith.constant dense<0.000000e+00> : vector<8x1xf32>
    %90 = vector.multi_reduction <add>, %89, %cst_39 [2] : vector<8x1x8xf32> to vector<8x1xf32>
    %91 = vector.shape_cast %90 : vector<8x1xf32> to vector<8x1x1xf32>
    %92 = tpu.reciprocal %91 {approx = true} : vector<8x1x1xf32> -> vector<8x1x1xf32>
    %93 = vector.broadcast %92 : vector<8x1x1xf32> to vector<8x1x8xf32>
    %94 = arith.mulf %89, %93 : vector<8x1x8xf32>
    %c0_40 = arith.constant 0 : index
    %c0_41 = arith.constant 0 : index
    %c0_42 = arith.constant 0 : index
    %95 = vector.load %arg3[%c0_40, %c0_41, %c0_42] : memref<8x8x128xf32, #tpu.memory_space<vmem>>, vector<8x8x128xf32>
    "tpu.trace_start"() <{level = 10 : i32, message = "bqs,bsh->bqh"}> : () -> ()
    %cst_43 = arith.constant dense<0.000000e+00> : vector<8x1x128xf32>
    %96 = tpu.matmul %94, %95, %cst_43 {dimension_numbers = #tpu.dot_dimension_numbers<[2], [1], [1], [2], [0, 0, 0, 1, 1, 2], [0], [0]>} : vector<8x1x8xf32>, vector<8x8x128xf32>, vector<8x1x128xf32> -> vector<8x1x128xf32>
    "tpu.trace_stop"() : () -> ()
    %97 = vector.shape_cast %96 : vector<8x1x128xf32> to vector<8x128xf32>
    %c0_44 = arith.constant 0 : index
    %c0_45 = arith.constant 0 : index
    %98 = vector.load %arg11[%c0_44, %c0_45] : memref<128x128xf32, #tpu.memory_space<vmem>>, vector<128x128xf32>
    %cst_46 = arith.constant dense<0.000000e+00> : vector<8x128xf32>
    %99 = tpu.matmul %75, %98, %cst_46 {dimension_numbers = #tpu.dot_dimension_numbers<[1], [0], [0], [1], [0, 0, 1, 1], [], []>} : vector<8x128xf32>, vector<128x128xf32>, vector<8x128xf32> -> vector<8x128xf32>
    %c0_47 = arith.constant 0 : index
    %c0_48 = arith.constant 0 : index
    %100 = vector.load %arg12[%c0_47, %c0_48] : memref<128x128xf32, #tpu.memory_space<vmem>>, vector<128x128xf32>
    %cst_49 = arith.constant dense<0.000000e+00> : vector<8x128xf32>
    %101 = tpu.matmul %97, %100, %cst_49 {dimension_numbers = #tpu.dot_dimension_numbers<[1], [0], [0], [1], [0, 0, 1, 1], [], []>} : vector<8x128xf32>, vector<128x128xf32>, vector<8x128xf32> -> vector<8x128xf32>
    %102 = arith.addf %99, %101 : vector<8x128xf32>
    %c0_50 = arith.constant 0 : index
    %c0_51 = arith.constant 0 : index
    %103 = vector.load %arg13[%c0_50, %c0_51] : memref<1x128xf32, #tpu.memory_space<vmem>>, vector<1x128xf32>
    %104 = vector.broadcast %103 : vector<1x128xf32> to vector<8x128xf32>
    %105 = arith.addf %102, %104 : vector<8x128xf32>
    %106 = math.tanh %105 : vector<8x128xf32>
    %c0_52 = arith.constant 0 : index
    %c0_53 = arith.constant 0 : index
    %107 = vector.load %arg14[%c0_52, %c0_53] : memref<128x128xf32, #tpu.memory_space<vmem>>, vector<128x128xf32>
    %cst_54 = arith.constant dense<0.000000e+00> : vector<8x128xf32>
    %108 = tpu.matmul %106, %107, %cst_54 {dimension_numbers = #tpu.dot_dimension_numbers<[1], [0], [0], [1], [0, 0, 1, 1], [], []>} : vector<8x128xf32>, vector<128x128xf32>, vector<8x128xf32> -> vector<8x128xf32>
    %c0_55 = arith.constant 0 : index
    %c0_56 = arith.constant 0 : index
    %109 = vector.load %arg15[%c0_55, %c0_56] : memref<1x128xf32, #tpu.memory_space<vmem>>, vector<1x128xf32>
    %110 = vector.broadcast %109 : vector<1x128xf32> to vector<8x128xf32>
    %111 = arith.addf %108, %110 : vector<8x128xf32>
    %cst_57 = arith.constant dense<0xFF800000> : vector<8xf32>
    %112 = vector.multi_reduction <maximumf>, %111, %cst_57 [1] : vector<8x128xf32> to vector<8xf32>
    %113 = vector.shape_cast %112 : vector<8xf32> to vector<8x1xf32>
    %114 = vector.broadcast %113 : vector<8x1xf32> to vector<8x128xf32>
    %115 = arith.subf %111, %114 : vector<8x128xf32>
    %116 = math.exp %115 : vector<8x128xf32>
    %cst_58 = arith.constant dense<0.000000e+00> : vector<8xf32>
    %117 = vector.multi_reduction <add>, %116, %cst_58 [1] : vector<8x128xf32> to vector<8xf32>
    %118 = vector.shape_cast %117 : vector<8xf32> to vector<8x1xf32>
    %119 = vector.broadcast %118 : vector<8x1xf32> to vector<8x128xf32>
    %120 = arith.divf %116, %119 : vector<8x128xf32>
    %c0_59 = arith.constant 0 : index
    %c0_60 = arith.constant 0 : index
    %c0_61 = arith.constant 0 : index
    %121 = vector.load %arg16[%c0_59, %c0_60, %c0_61] : memref<1x8x128xf32, #tpu.memory_space<vmem>>, vector<1x8x128xf32>
    %122 = vector.shape_cast %121 : vector<1x8x128xf32> to vector<8x128xf32>
    %123 = vector.shape_cast %120 : vector<8x128xf32> to vector<1x8x128xf32>
    tpu.vector_store %arg16[%c0_59, %c0_60, %c0_61], %123 {strides = array<i32>} : memref<1x8x128xf32, #tpu.memory_space<vmem>>, vector<1x8x128xf32>,
    return
  }
  func.func @transform_0(%arg0: i32) -> (i32, i32, i32) {
    %c0_i32 = arith.constant 0 : i32
    %c0_i32_0 = arith.constant 0 : i32
    %c0_i32_1 = arith.constant 0 : i32
    return %arg0, %c0_i32, %c0_i32_0 : i32, i32, i32
  }
  func.func @transform_1(%arg0: i32) -> (i32, i32, i32) {
    %c0_i32 = arith.constant 0 : i32
    %c0_i32_0 = arith.constant 0 : i32
    %c0_i32_1 = arith.constant 0 : i32
    %c0_i32_2 = arith.constant 0 : i32
    return %c0_i32, %c0_i32_0, %c0_i32_1 : i32, i32, i32
  }
  func.func @transform_2(%arg0: i32) -> (i32, i32, i32) {
    %c0_i32 = arith.constant 0 : i32
    %c0_i32_0 = arith.constant 0 : i32
    %c0_i32_1 = arith.constant 0 : i32
    %c0_i32_2 = arith.constant 0 : i32
    return %c0_i32, %c0_i32_0, %c0_i32_1 : i32, i32, i32
  }
  func.func @transform_3(%arg0: i32) -> (i32, i32, i32) {
    %c0_i32 = arith.constant 0 : i32
    %c0_i32_0 = arith.constant 0 : i32
    %c0_i32_1 = arith.constant 0 : i32
    %c0_i32_2 = arith.constant 0 : i32
    return %c0_i32, %c0_i32_0, %c0_i32_1 : i32, i32, i32
  }
  func.func @transform_4(%arg0: i32) -> (i32, i32) {
    %c0_i32 = arith.constant 0 : i32
    %c0_i32_0 = arith.constant 0 : i32
    %c0_i32_1 = arith.constant 0 : i32
    return %c0_i32, %c0_i32_0 : i32, i32
  }
  func.func @transform_5(%arg0: i32) -> (i32, i32) {
    %c0_i32 = arith.constant 0 : i32
    %c0_i32_0 = arith.constant 0 : i32
    %c0_i32_1 = arith.constant 0 : i32
    return %c0_i32, %c0_i32_0 : i32, i32
  }
  func.func @transform_6(%arg0: i32) -> (i32, i32) {
    %c0_i32 = arith.constant 0 : i32
    %c0_i32_0 = arith.constant 0 : i32
    %c0_i32_1 = arith.constant 0 : i32
    return %c0_i32, %c0_i32_0 : i32, i32
  }
  func.func @transform_7(%arg0: i32) -> (i32, i32) {
    %c0_i32 = arith.constant 0 : i32
    %c0_i32_0 = arith.constant 0 : i32
    %c0_i32_1 = arith.constant 0 : i32
    return %c0_i32, %c0_i32_0 : i32, i32
  }
  func.func @transform_8(%arg0: i32) -> (i32, i32) {
    %c0_i32 = arith.constant 0 : i32
    %c0_i32_0 = arith.constant 0 : i32
    %c0_i32_1 = arith.constant 0 : i32
    return %c0_i32, %c0_i32_0 : i32, i32
  }
  func.func @transform_9(%arg0: i32) -> (i32, i32) {
    %c0_i32 = arith.constant 0 : i32
    %c0_i32_0 = arith.constant 0 : i32
    %c0_i32_1 = arith.constant 0 : i32
    return %c0_i32, %c0_i32_0 : i32, i32
  }
  func.func @transform_10(%arg0: i32) -> (i32, i32) {
    %c0_i32 = arith.constant 0 : i32
    %c0_i32_0 = arith.constant 0 : i32
    %c0_i32_1 = arith.constant 0 : i32
    return %c0_i32, %c0_i32_0 : i32, i32
  }
  func.func @transform_11(%arg0: i32) -> (i32, i32) {
    %c0_i32 = arith.constant 0 : i32
    %c0_i32_0 = arith.constant 0 : i32
    %c0_i32_1 = arith.constant 0 : i32
    return %c0_i32, %c0_i32_0 : i32, i32
  }
  func.func @transform_12(%arg0: i32) -> (i32, i32) {
    %c0_i32 = arith.constant 0 : i32
    %c0_i32_0 = arith.constant 0 : i32
    %c0_i32_1 = arith.constant 0 : i32
    return %c0_i32, %c0_i32_0 : i32, i32
  }
  func.func @transform_13(%arg0: i32) -> (i32, i32) {
    %c0_i32 = arith.constant 0 : i32
    %c0_i32_0 = arith.constant 0 : i32
    %c0_i32_1 = arith.constant 0 : i32
    return %c0_i32, %c0_i32_0 : i32, i32
  }
  func.func @transform_14(%arg0: i32) -> (i32, i32) {
    %c0_i32 = arith.constant 0 : i32
    %c0_i32_0 = arith.constant 0 : i32
    %c0_i32_1 = arith.constant 0 : i32
    return %c0_i32, %c0_i32_0 : i32, i32
  }
  func.func @transform_15(%arg0: i32) -> (i32, i32, i32) {
    %c0_i32 = arith.constant 0 : i32
    %c0_i32_0 = arith.constant 0 : i32
    %c0_i32_1 = arith.constant 0 : i32
    return %arg0, %c0_i32, %c0_i32_0 : i32, i32, i32
  }
  func.func @transform_16(%arg0: i32) -> (i32, i32, i32) {
    %c0_i32 = arith.constant 0 : i32
    %c0_i32_0 = arith.constant 0 : i32
    %c0_i32_1 = arith.constant 0 : i32
    %c0_i32_2 = arith.constant 0 : i32
    return %c0_i32, %c0_i32_0, %c0_i32_1 : i32, i32, i32
  }
}

</mosaic_0001>

<llo_original>
// kernel: tpu_custom_call.1
$region0: #{tpu_custom_call.1}
  #allocation0 [shape = 'u32[]', space=smem, size = 0x4, offset = 0x4, fixed_abs, tag = 'smem constant byte address 0x4 - core index']
  #allocation1 [shape = 'u32[144,128]{1,0:T(1,128)}', space=vmem, size = 0x12000, scoped, tag = 'internal scratch']
  %s0 = inlined_call_operand.hbm [shape: f32[1,8,384], index: 0, kind: input, shape index: {}]
  %s1 = inlined_call_operand.hbm [shape: f32[2,8,128], index: 1, kind: input, shape index: {}]
  %s2 = inlined_call_operand.vmem [shape: f32[8,8,128], index: 2, kind: input, shape index: {}]
  %s3 = inlined_call_operand.vmem [shape: f32[8,128,8], index: 3, kind: input, shape index: {}]
  %s4 = inlined_call_operand.vmem [shape: f32[128,384], index: 4, kind: input, shape index: {}]
  %s5 = inlined_call_operand.vmem [shape: f32[1,384], index: 5, kind: input, shape index: {}]
  %s6 = inlined_call_operand.vmem [shape: f32[128,384], index: 6, kind: input, shape index: {}]
  %s7 = inlined_call_operand.vmem [shape: f32[1,384], index: 7, kind: input, shape index: {}]
  %s8 = inlined_call_operand.hbm [shape: f32[128,384], index: 8, kind: input, shape index: {}]
  %s9 = inlined_call_operand.vmem [shape: f32[1,384], index: 9, kind: input, shape index: {}]
  %s10 = inlined_call_operand.vmem [shape: f32[128,128], index: 10, kind: input, shape index: {}]
  %s11 = inlined_call_operand.vmem [shape: f32[128,128], index: 11, kind: input, shape index: {}]
  %s12 = inlined_call_operand.vmem [shape: f32[1,128], index: 12, kind: input, shape index: {}]
  %s13 = inlined_call_operand.hbm [shape: f32[128,128], index: 13, kind: input, shape index: {}]
  %s14 = inlined_call_operand.vmem [shape: f32[1,128], index: 14, kind: input, shape index: {}]
  %s15 = inlined_call_operand.hbm [shape: f32[1,8,128], index: 15, kind: output, shape index: {0}]
  %s16 = inlined_call_operand.hbm [shape: f32[2,8,128], index: 16, kind: output, shape index: {1}]
  %17 = xla_tuple %s15, %s16
  %s18 = sld [smem:[#allocation0]]
  $region98: #{tpu_custom_call.1} parent=0
    _
  %s20 = ssub.s32 1, %s18
  %s21 = scalar_select 0, %s20, %s18
  $region1: #{tpu_custom_call.1} parent=0
    #allocation2 [shape = 'u8[12288]{0}', space=vmem, size = 0x3000, scoped, tag = 'input window, operand 0, single buffered']
    #allocation3 [shape = 's32[1]{0}', space=sflag, size = 0x4, scoped, tag = 'scoped memory for tpu_custom_call.1']
    #allocation4 [shape = 's32[1]{0}', space=sflag, size = 0x4, scoped, tag = 'scoped memory for tpu_custom_call.1']
    #allocation5 [shape = 'u8[8192]{0}', space=vmem, size = 0x2000, scoped, tag = 'input window, operand 1, single buffered']
    #allocation6 [shape = 's32[1]{0}', space=sflag, size = 0x4, scoped, tag = 'scoped memory for tpu_custom_call.1']
    #allocation7 [shape = 'u8[196608]{0}', space=vmem, size = 0x30000, scoped, tag = 'input window, operand 8, single buffered']
    #allocation8 [shape = 'u8[65536]{0}', space=vmem, size = 0x10000, scoped, tag = 'input window, operand 13, single buffered']
    #allocation9 [shape = 's32[1]{0}', space=sflag, size = 0x4, scoped, tag = 'scoped memory for tpu_custom_call.1']
    #allocation10 [shape = 'u8[4096]{0}', space=vmem, size = 0x1000, scoped, tag = 'output window, operand 0, single buffered']
    #allocation11 [shape = 'u8[8192]{0}', space=vmem, size = 0x2000, scoped, tag = 'output window, operand 1, single buffered']
    #allocation12 [shape = 's32[1]{0}', space=sflag, size = 0x4, scoped, tag = 'scoped memory for tpu_custom_call.1']
    %22 = vsyncpa [#allocation3], 0
    %23 = vsyncpa [#allocation6], 0
    %24 = vsyncpa [#allocation9], 0
    %25 = vsyncpa [#allocation4], 0
    %26 = vsyncpa [#allocation12], 0
    // Predicated region
    $region2: #{tpu_custom_call.1} parent=1 // pred_check
      _
    $region3: #{tpu_custom_call.1} parent=1 // pred_check_branch
      %28 = sbr.rel (0) target = $region5
    $region4: #{tpu_custom_call.1} parent=1 // pred_region
      %s30 = ssub.s32 384, 384
      %31 = vsyncadd [#allocation3], %s30
      %s33 = sshll.u32 [#allocation2], 4
      %s34 = int_to_ptr.vmem [resolvable:$true] %s33
      %36 = dma.hbm_to_vmem [thread:$0]  %s0, 384, %s34, [#allocation3]
    $region5: #{tpu_custom_call.1} parent=1 // pred_fallthru
      _
    // Predicated region
    $region6: #{tpu_custom_call.1} parent=1 // pred_check
      _
    $region7: #{tpu_custom_call.1} parent=1 // pred_check_branch
      %38 = sbr.rel (0) target = $region9
    $region8: #{tpu_custom_call.1} parent=1 // pred_region
      %s40 = ssub.s32 256, 256
      %41 = vsyncadd [#allocation6], %s40
      %s42 = sshll.u32 [#allocation5], 4
      %s43 = int_to_ptr.vmem [resolvable:$true] %s42
      %48 = dma.hbm_to_vmem [thread:$0]  %s1, 256, %s43, [#allocation6], 128, 128, 8
    $region9: #{tpu_custom_call.1} parent=1 // pred_fallthru
      _
    // Predicated region
    $region10: #{tpu_custom_call.1} parent=1 // pred_check
      _
    $region11: #{tpu_custom_call.1} parent=1 // pred_check_branch
      %50 = sbr.rel (0) target = $region13
    $region12: #{tpu_custom_call.1} parent=1 // pred_region
      _
    $region13: #{tpu_custom_call.1} parent=1 // pred_fallthru
      _
    // Predicated region
    $region14: #{tpu_custom_call.1} parent=1 // pred_check
      _
    $region15: #{tpu_custom_call.1} parent=1 // pred_check_branch
      %52 = sbr.rel (0) target = $region17
    $region16: #{tpu_custom_call.1} parent=1 // pred_region
      _
    $region17: #{tpu_custom_call.1} parent=1 // pred_fallthru
      _
    // Predicated region
    $region18: #{tpu_custom_call.1} parent=1 // pred_check
      _
    $region19: #{tpu_custom_call.1} parent=1 // pred_check_branch
      %54 = sbr.rel (0) target = $region21
    $region20: #{tpu_custom_call.1} parent=1 // pred_region
      _
    $region21: #{tpu_custom_call.1} parent=1 // pred_fallthru
      _
    // Predicated region
    $region22: #{tpu_custom_call.1} parent=1 // pred_check
      _
    $region23: #{tpu_custom_call.1} parent=1 // pred_check_branch
      %56 = sbr.rel (0) target = $region25
    $region24: #{tpu_custom_call.1} parent=1 // pred_region
      _
    $region25: #{tpu_custom_call.1} parent=1 // pred_fallthru
      _
    // Predicated region
    $region26: #{tpu_custom_call.1} parent=1 // pred_check
      _
    $region27: #{tpu_custom_call.1} parent=1 // pred_check_branch
      %58 = sbr.rel (0) target = $region29
    $region28: #{tpu_custom_call.1} parent=1 // pred_region
      _
    $region29: #{tpu_custom_call.1} parent=1 // pred_fallthru
      _
    // Predicated region
    $region30: #{tpu_custom_call.1} parent=1 // pred_check
      _
    $region31: #{tpu_custom_call.1} parent=1 // pred_check_branch
      %60 = sbr.rel (0) target = $region33
    $region32: #{tpu_custom_call.1} parent=1 // pred_region
      _
    $region33: #{tpu_custom_call.1} parent=1 // pred_fallthru
      _
    // Predicated region
    $region34: #{tpu_custom_call.1} parent=1 // pred_check
      _
    $region35: #{tpu_custom_call.1} parent=1 // pred_check_branch
      %62 = sbr.rel (0) target = $region37
    $region36: #{tpu_custom_call.1} parent=1 // pred_region
      %s64 = ssub.s32 6144, 6144
      %65 = vsyncadd [#allocation6], %s64
      %s66 = sshll.u32 [#allocation7], 4
      %s67 = int_to_ptr.vmem [resolvable:$true] %s66
      %72 = dma.hbm_to_vmem [thread:$0]  %s8, 6144, %s67, [#allocation6], 384, 384, 24
    $region37: #{tpu_custom_call.1} parent=1 // pred_fallthru
      _
    // Predicated region
    $region38: #{tpu_custom_call.1} parent=1 // pred_check
      _
    $region39: #{tpu_custom_call.1} parent=1 // pred_check_branch
      %74 = sbr.rel (0) target = $region41
    $region40: #{tpu_custom_call.1} parent=1 // pred_region
      _
    $region41: #{tpu_custom_call.1} parent=1 // pred_fallthru
      _
    // Predicated region
    $region42: #{tpu_custom_call.1} parent=1 // pred_check
      _
    $region43: #{tpu_custom_call.1} parent=1 // pred_check_branch
      %76 = sbr.rel (0) target = $region45
    $region44: #{tpu_custom_call.1} parent=1 // pred_region
      _
    $region45: #{tpu_custom_call.1} parent=1 // pred_fallthru
      _
    // Predicated region
    $region46: #{tpu_custom_call.1} parent=1 // pred_check
      _
    $region47: #{tpu_custom_call.1} parent=1 // pred_check_branch
      %78 = sbr.rel (0) target = $region49
    $region48: #{tpu_custom_call.1} parent=1 // pred_region
      _
    $region49: #{tpu_custom_call.1} parent=1 // pred_fallthru
      _
    // Predicated region
    $region50: #{tpu_custom_call.1} parent=1 // pred_check
      _
    $region51: #{tpu_custom_call.1} parent=1 // pred_check_branch
      %80 = sbr.rel (0) target = $region53
    $region52: #{tpu_custom_call.1} parent=1 // pred_region
      _
    $region53: #{tpu_custom_call.1} parent=1 // pred_fallthru
      _
    // Predicated region
    $region54: #{tpu_custom_call.1} parent=1 // pred_check
      _
    $region55: #{tpu_custom_call.1} parent=1 // pred_check_branch
      %82 = sbr.rel (0) target = $region57
    $region56: #{tpu_custom_call.1} parent=1 // pred_region
      %s84 = ssub.s32 2048, 2048
      %85 = vsyncadd [#allocation9], %s84
      %s86 = sshll.u32 [#allocation8], 4
      %s87 = int_to_ptr.vmem [resolvable:$true] %s86
      %92 = dma.hbm_to_vmem [thread:$0]  %s13, 2048, %s87, [#allocation9], 128, 128, 8
    $region57: #{tpu_custom_call.1} parent=1 // pred_fallthru
      _
    // Predicated region
    $region58: #{tpu_custom_call.1} parent=1 // pred_check
      _
    $region59: #{tpu_custom_call.1} parent=1 // pred_check_branch
      %94 = sbr.rel (0) target = $region61
    $region60: #{tpu_custom_call.1} parent=1 // pred_region
      _
    $region61: #{tpu_custom_call.1} parent=1 // pred_fallthru
      _
    // Predicated region
    $region62: #{tpu_custom_call.1} parent=1 // pred_check
      _
    $region63: #{tpu_custom_call.1} parent=1 // pred_check_branch
      %96 = sbr.rel (0) target = $region65
    $region64: #{tpu_custom_call.1} parent=1 // pred_region
      %97 = dma.done [#allocation3], 384
    $region65: #{tpu_custom_call.1} parent=1 // pred_fallthru
      _
    // Predicated region
    $region66: #{tpu_custom_call.1} parent=1 // pred_check
      _
    $region67: #{tpu_custom_call.1} parent=1 // pred_check_branch
      %99 = sbr.rel (0) target = $region69
    $region68: #{tpu_custom_call.1} parent=1 // pred_region
      %100 = dma.done [#allocation6], 256
    $region69: #{tpu_custom_call.1} parent=1 // pred_fallthru
      _
    // Predicated region
    $region70: #{tpu_custom_call.1} parent=1 // pred_check
      _
    $region71: #{tpu_custom_call.1} parent=1 // pred_check_branch
      %102 = sbr.rel (0) target = $region73
    $region72: #{tpu_custom_call.1} parent=1 // pred_region
      %103 = dma.done [#allocation6], 6144
    $region73: #{tpu_custom_call.1} parent=1 // pred_fallthru
      _
    // Predicated region
    $region74: #{tpu_custom_call.1} parent=1 // pred_check
      _
    $region75: #{tpu_custom_call.1} parent=1 // pred_check_branch
      %105 = sbr.rel (0) target = $region77
    $region76: #{tpu_custom_call.1} parent=1 // pred_region
      %106 = dma.done [#allocation9], 2048
    $region77: #{tpu_custom_call.1} parent=1 // pred_fallthru
      _
    %p107 = scmp.eq.s32.totalorder 0, 0
    // Predicated region
    $region78: #{tpu_custom_call.1} parent=1 // pred_check
      %p108 = pneg %p107
    $region79: #{tpu_custom_call.1} parent=1 // pred_check_branch
      %110 = sbr.rel (%p108) target = $region81
    $region80: #{tpu_custom_call.1} parent=1 // pred_region
      %v111 = vld [vmem:[#allocation5] sm:$0xff]
      %v112 = vld [vmem:[#allocation5 + $0x8] sm:$0xff]
      %113 = vst [vmem:[#allocation11] sm:$0xff] %v111
      %114 = vst [vmem:[#allocation11 + $0x8] sm:$0xff] %v112
    $region81: #{tpu_custom_call.1} parent=1 // pred_fallthru
      _
    %v115 = vld [vmem:[#allocation11] sm:$0xff]
    %v116 = vld [vmem:[#allocation2] sm:$0xff]
    %v117 = vld [vmem:[#allocation2 + $0x8] sm:$0xff]
    %v118 = vld [vmem:[#allocation2 + $0x10] sm:$0xff]
    %v119 = vld [vmem:[%s4] sm:$0xff]
    %v120 = vld [vmem:[%s4 + $0x8] sm:$0xff]
    %v121 = vld [vmem:[%s4 + $0x10] sm:$0xff]
    %v122 = vld [vmem:[%s4 + $0x18] sm:$0xff]
    %v123 = vld [vmem:[%s4 + $0x20] sm:$0xff]
    %v124 = vld [vmem:[%s4 + $0x28] sm:$0xff]
    %v125 = vld [vmem:[%s4 + $0x30] sm:$0xff]
    %v126 = vld [vmem:[%s4 + $0x38] sm:$0xff]
    %v127 = vld [vmem:[%s4 + $0x40] sm:$0xff]
    %v128 = vld [vmem:[%s4 + $0x48] sm:$0xff]
    %v129 = vld [vmem:[%s4 + $0x50] sm:$0xff]
    %v130 = vld [vmem:[%s4 + $0x58] sm:$0xff]
    %v131 = vld [vmem:[%s4 + $0x60] sm:$0xff]
    %v132 = vld [vmem:[%s4 + $0x68] sm:$0xff]
    %v133 = vld [vmem:[%s4 + $0x70] sm:$0xff]
    %v134 = vld [vmem:[%s4 + $0x78] sm:$0xff]
    %v135 = vld [vmem:[%s4 + $0x80] sm:$0xff]
    %v136 = vld [vmem:[%s4 + $0x88] sm:$0xff]
    %v137 = vld [vmem:[%s4 + $0x90] sm:$0xff]
    %v138 = vld [vmem:[%s4 + $0x98] sm:$0xff]
    %v139 = vld [vmem:[%s4 + $0xa0] sm:$0xff]
    %v140 = vld [vmem:[%s4 + $0xa8] sm:$0xff]
    %v141 = vld [vmem:[%s4 + $0xb0] sm:$0xff]
    %v142 = vld [vmem:[%s4 + $0xb8] sm:$0xff]
    %v143 = vld [vmem:[%s4 + $0xc0] sm:$0xff]
    %v144 = vld [vmem:[%s4 + $0xc8] sm:$0xff]
    %v145 = vld [vmem:[%s4 + $0xd0] sm:$0xff]
    %v146 = vld [vmem:[%s4 + $0xd8] sm:$0xff]
    %v147 = vld [vmem:[%s4 + $0xe0] sm:$0xff]
    %v148 = vld [vmem:[%s4 + $0xe8] sm:$0xff]
    %v149 = vld [vmem:[%s4 + $0xf0] sm:$0xff]
    %v150 = vld [vmem:[%s4 + $0xf8] sm:$0xff]
    %v151 = vld [vmem:[%s4 + $0x100] sm:$0xff]
    %v152 = vld [vmem:[%s4 + $0x108] sm:$0xff]
    %v153 = vld [vmem:[%s4 + $0x110] sm:$0xff]
    %v154 = vld [vmem:[%s4 + $0x118] sm:$0xff]
    %v155 = vld [vmem:[%s4 + $0x120] sm:$0xff]
    %v156 = vld [vmem:[%s4 + $0x128] sm:$0xff]
    %v157 = vld [vmem:[%s4 + $0x130] sm:$0xff]
    %v158 = vld [vmem:[%s4 + $0x138] sm:$0xff]
    %v159 = vld [vmem:[%s4 + $0x140] sm:$0xff]
    %v160 = vld [vmem:[%s4 + $0x148] sm:$0xff]
    %v161 = vld [vmem:[%s4 + $0x150] sm:$0xff]
    %v162 = vld [vmem:[%s4 + $0x158] sm:$0xff]
    %v163 = vld [vmem:[%s4 + $0x160] sm:$0xff]
    %v164 = vld [vmem:[%s4 + $0x168] sm:$0xff]
    %v165 = vld [vmem:[%s4 + $0x170] sm:$0xff]
    %v166 = vld [vmem:[%s4 + $0x178] sm:$0xff]
    %v167 = vld [vmem:[%s5] sm:$0x7]
    %v169 = vlaneseq
    %v170 = vshrl.u32 %v169, 7
    %v171 = vsub.s32 0, %v170
    %v172 = vrot.slane %v167, %v171
    %v173 = vlaneseq
    %v174 = vshrl.u32 %v173, 7
    %v175 = vsub.s32 1, %v174
    %v176 = vrot.slane %v167, %v175
    %v177 = vlaneseq
    %v178 = vshrl.u32 %v177, 7
    %v179 = vsub.s32 2, %v178
    %v180 = vrot.slane %v167, %v179
    %184 = vmatprep.subr.mxu0 %v120
    %185 = vmatpush1.msra.mxu0 %v119
    %186 = vmatprep.subr.mxu0 %v123
    %187 = vmatpush1.msra.mxu0 %v122
    %188 = vmatprep.subr.mxu0 %v126
    %189 = vmatpush1.msra.mxu0 %v125
    %190 = vmatprep.subr.mxu0 %v129
    %191 = vmatpush1.msra.mxu0 %v128
    %192 = vmatprep.subr.mxu0 %v132
    %193 = vmatpush1.msra.mxu0 %v131
    %194 = vmatprep.subr.mxu0 %v135
    %195 = vmatpush1.msra.mxu0 %v134
    %196 = vmatprep.subr.mxu0 %v138
    %197 = vmatpush1.msra.mxu0 %v137
    %198 = vmatprep.subr.mxu0 %v141
    %199 = vmatpush1.msra.mxu0 %v140
    %200 = vmatprep.subr.mxu0 %v144
    %201 = vmatpush1.msra.mxu0 %v143
    %202 = vmatprep.subr.mxu0 %v147
    %203 = vmatpush1.msra.mxu0 %v146
    %204 = vmatprep.subr.mxu0 %v150
    %205 = vmatpush1.msra.mxu0 %v149
    %206 = vmatprep.subr.mxu0 %v153
    %207 = vmatpush1.msra.mxu0 %v152
    %208 = vmatprep.subr.mxu0 %v156
    %209 = vmatpush1.msra.mxu0 %v155
    %210 = vmatprep.subr.mxu0 %v159
    %211 = vmatpush1.msra.mxu0 %v158
    %212 = vmatprep.subr.mxu0 %v162
    %213 = vmatpush1.msra.mxu0 %v161
    %214 = vmatprep.subr.mxu0 %v165
    %215 = vmatpush1.msra.mxu0 %v164
    %216 = vmatprep.subr.mxu0 0.0
    %217 = vmatpush1.msra.mxu0 0.0
    %218 = vmatprep.subr.mxu0 0.0
    %219 = vmatpush1.msra.mxu0 0.0
    %220 = vmatprep.subr.mxu0 0.0
    %221 = vmatpush1.msra.mxu0 0.0
    %222 = vmatprep.subr.mxu0 0.0
    %223 = vmatpush1.msra.mxu0 0.0
    %224 = vmatprep.subr.mxu0 0.0
    %225 = vmatpush1.msra.mxu0 0.0
    %226 = vmatprep.subr.mxu0 0.0
    %227 = vmatpush1.msra.mxu0 0.0
    %228 = vmatprep.subr.mxu0 0.0
    %229 = vmatpush1.msra.mxu0 0.0
    %230 = vmatprep.subr.mxu0 0.0
    %231 = vmatpush1.msra.mxu0 0.0
    %232 = vmatprep.subr.mxu0 0.0
    %233 = vmatpush1.msra.mxu0 0.0
    %234 = vmatprep.subr.mxu0 0.0
    %235 = vmatpush1.msra.mxu0 0.0
    %236 = vmatprep.subr.mxu0 0.0
    %237 = vmatpush1.msra.mxu0 0.0
    %238 = vmatprep.subr.mxu0 0.0
    %239 = vmatpush1.msra.mxu0 0.0
    %240 = vmatprep.subr.mxu0 0.0
    %241 = vmatpush1.msra.mxu0 0.0
    %242 = vmatprep.subr.mxu0 0.0
    %243 = vmatpush1.msra.mxu0 0.0
    %244 = vmatprep.subr.mxu0 0.0
    %245 = vmatpush1.msra.mxu0 0.0
    %246 = vmatprep.subr.mxu0 0.0
    %247 = vmatpush1.msra.mxu0 0.0
    %248 = vmatprep.mubr.f32.mxu0 0.0
    %249 = vmatmul.mubr.f32.gmra.mrb[0].mxu0 %v115
    %v250 = vpop.f32.mrb[0].mxu0
    %v251 = vadd.f32 %v172, %v250
    %v252 = vpop.f32.mrb[0].mxu0
    %v253 = vadd.f32 %v176, %v252
    %254 = vdwg.mxu0
    %255 = vmatprep.subr.mxu0 0.0
    %256 = vmatpush1.msra.mxu0 %v121
    %257 = vmatprep.subr.mxu0 0.0
    %258 = vmatpush1.msra.mxu0 %v124
    %259 = vmatprep.subr.mxu0 0.0
    %260 = vmatpush1.msra.mxu0 %v127
    %261 = vmatprep.subr.mxu0 0.0
    %262 = vmatpush1.msra.mxu0 %v130
    %263 = vmatprep.subr.mxu0 0.0
    %264 = vmatpush1.msra.mxu0 %v133
    %265 = vmatprep.subr.mxu0 0.0
    %266 = vmatpush1.msra.mxu0 %v136
    %267 = vmatprep.subr.mxu0 0.0
    %268 = vmatpush1.msra.mxu0 %v139
    %269 = vmatprep.subr.mxu0 0.0
    %270 = vmatpush1.msra.mxu0 %v142
    %271 = vmatprep.subr.mxu0 0.0
    %272 = vmatpush1.msra.mxu0 %v145
    %273 = vmatprep.subr.mxu0 0.0
    %274 = vmatpush1.msra.mxu0 %v148
    %275 = vmatprep.subr.mxu0 0.0
    %276 = vmatpush1.msra.mxu0 %v151
    %277 = vmatprep.subr.mxu0 0.0
    %278 = vmatpush1.msra.mxu0 %v154
    %279 = vmatprep.subr.mxu0 0.0
    %280 = vmatpush1.msra.mxu0 %v157
    %281 = vmatprep.subr.mxu0 0.0
    %282 = vmatpush1.msra.mxu0 %v160
    %283 = vmatprep.subr.mxu0 0.0
    %284 = vmatpush1.msra.mxu0 %v163
    %285 = vmatprep.subr.mxu0 0.0
    %286 = vmatpush1.msra.mxu0 %v166
    %287 = vmatprep.subr.mxu0 0.0
    %288 = vmatpush1.msra.mxu0 0.0
    %289 = vmatprep.subr.mxu0 0.0
    %290 = vmatpush1.msra.mxu0 0.0
    %291 = vmatprep.subr.mxu0 0.0
    %292 = vmatpush1.msra.mxu0 0.0
    %293 = vmatprep.subr.mxu0 0.0
    %294 = vmatpush1.msra.mxu0 0.0
    %295 = vmatprep.subr.mxu0 0.0
    %296 = vmatpush1.msra.mxu0 0.0
    %297 = vmatprep.subr.mxu0 0.0
    %298 = vmatpush1.msra.mxu0 0.0
    %299 = vmatprep.subr.mxu0 0.0
    %300 = vmatpush1.msra.mxu0 0.0
    %301 = vmatprep.subr.mxu0 0.0
    %302 = vmatpush1.msra.mxu0 0.0
    %303 = vmatprep.subr.mxu0 0.0
    %304 = vmatpush1.msra.mxu0 0.0
    %305 = vmatprep.subr.mxu0 0.0
    %306 = vmatpush1.msra.mxu0 0.0
    %307 = vmatprep.subr.mxu0 0.0
    %308 = vmatpush1.msra.mxu0 0.0
    %309 = vmatprep.subr.mxu0 0.0
    %310 = vmatpush1.msra.mxu0 0.0
    %311 = vmatprep.subr.mxu0 0.0
    %312 = vmatpush1.msra.mxu0 0.0
    %313 = vmatprep.subr.mxu0 0.0
    %314 = vmatpush1.msra.mxu0 0.0
    %315 = vmatprep.subr.mxu0 0.0
    %316 = vmatpush1.msra.mxu0 0.0
    %317 = vmatprep.subr.mxu0 0.0
    %318 = vmatpush1.msra.mxu0 0.0
    %319 = vmatprep.mubr.f32.mxu0 0.0
    %320 = vmatmul.mubr.f32.gmra.mrb[0].mxu0 %v115
    %v321 = vpop.f32.mrb[0].mxu0
    %v322 = vadd.f32 %v180, %v321
    %v323 = vpop.f32.mrb[0].mxu0
    %324 = vdwg.mxu0
    %v325 = vadd.f32 %v116, %v251
    %v326 = vxor.u32 %v325, 2147483648
    %v327 = vmul.f32 %v326, 1.442695
    %v328 = vpow.pop %v327
    %v329 = vadd.f32 %v328, 1.0
    %v330 = vrcp.pop %v329
    %v331 = vmul.f32 1.0, %v330
    %v332 = vadd.f32 %v117, %v253
    %v333 = vxor.u32 %v332, 2147483648
    %v334 = vmul.f32 %v333, 1.442695
    %v335 = vpow.pop %v334
    %v336 = vadd.f32 %v335, 1.0
    %v337 = vrcp.pop %v336
    %v338 = vmul.f32 1.0, %v337
    %v339 = vmul.f32 %v331, %v322
    %v340 = vadd.f32 %v118, %v339
    %v341 = vtanh.pop %v340
    %v342 = vsub.f32 1.0, %v338
    %v343 = vmul.f32 %v342, %v341
    %v344 = vmul.f32 %v338, %v115
    %v345 = vadd.f32 %v343, %v344
    %s346 = scalar_lea.vmem [#allocation11], 8
    %v347 = vld [vmem:[%s346] sm:$0xff]
    %v348 = vld [vmem:[%s6] sm:$0xff]
    %v349 = vld [vmem:[%s6 + $0x8] sm:$0xff]
    %v350 = vld [vmem:[%s6 + $0x10] sm:$0xff]
    %v351 = vld [vmem:[%s6 + $0x18] sm:$0xff]
    %v352 = vld [vmem:[%s6 + $0x20] sm:$0xff]
    %v353 = vld [vmem:[%s6 + $0x28] sm:$0xff]
    %v354 = vld [vmem:[%s6 + $0x30] sm:$0xff]
    %v355 = vld [vmem:[%s6 + $0x38] sm:$0xff]
    %v356 = vld [vmem:[%s6 + $0x40] sm:$0xff]
    %v357 = vld [vmem:[%s6 + $0x48] sm:$0xff]
    %v358 = vld [vmem:[%s6 + $0x50] sm:$0xff]
    %v359 = vld [vmem:[%s6 + $0x58] sm:$0xff]
    %v360 = vld [vmem:[%s6 + $0x60] sm:$0xff]
    %v361 = vld [vmem:[%s6 + $0x68] sm:$0xff]
    %v362 = vld [vmem:[%s6 + $0x70] sm:$0xff]
    %v363 = vld [vmem:[%s6 + $0x78] sm:$0xff]
    %v364 = vld [vmem:[%s6 + $0x80] sm:$0xff]
    %v365 = vld [vmem:[%s6 + $0x88] sm:$0xff]
    %v366 = vld [vmem:[%s6 + $0x90] sm:$0xff]
    %v367 = vld [vmem:[%s6 + $0x98] sm:$0xff]
    %v368 = vld [vmem:[%s6 + $0xa0] sm:$0xff]
    %v369 = vld [vmem:[%s6 + $0xa8] sm:$0xff]
    %v370 = vld [vmem:[%s6 + $0xb0] sm:$0xff]
    %v371 = vld [vmem:[%s6 + $0xb8] sm:$0xff]
    %v372 = vld [vmem:[%s6 + $0xc0] sm:$0xff]
    %v373 = vld [vmem:[%s6 + $0xc8] sm:$0xff]
    %v374 = vld [vmem:[%s6 + $0xd0] sm:$0xff]
    %v375 = vld [vmem:[%s6 + $0xd8] sm:$0xff]
    %v376 = vld [vmem:[%s6 + $0xe0] sm:$0xff]
    %v377 = vld [vmem:[%s6 + $0xe8] sm:$0xff]
    %v378 = vld [vmem:[%s6 + $0xf0] sm:$0xff]
    %v379 = vld [vmem:[%s6 + $0xf8] sm:$0xff]
    %v380 = vld [vmem:[%s6 + $0x100] sm:$0xff]
    %v381 = vld [vmem:[%s6 + $0x108] sm:$0xff]
    %v382 = vld [vmem:[%s6 + $0x110] sm:$0xff]
    %v383 = vld [vmem:[%s6 + $0x118] sm:$0xff]
    %v384 = vld [vmem:[%s6 + $0x120] sm:$0xff]
    %v385 = vld [vmem:[%s6 + $0x128] sm:$0xff]
    %v386 = vld [vmem:[%s6 + $0x130] sm:$0xff]
    %v387 = vld [vmem:[%s6 + $0x138] sm:$0xff]
    %v388 = vld [vmem:[%s6 + $0x140] sm:$0xff]
    %v389 = vld [vmem:[%s6 + $0x148] sm:$0xff]
    %v390 = vld [vmem:[%s6 + $0x150] sm:$0xff]
    %v391 = vld [vmem:[%s6 + $0x158] sm:$0xff]
    %v392 = vld [vmem:[%s6 + $0x160] sm:$0xff]
    %v393 = vld [vmem:[%s6 + $0x168] sm:$0xff]
    %v394 = vld [vmem:[%s6 + $0x170] sm:$0xff]
    %v395 = vld [vmem:[%s6 + $0x178] sm:$0xff]
    %v396 = vld [vmem:[%s7] sm:$0x7]
    %v398 = vlaneseq
    %v399 = vshrl.u32 %v398, 7
    %v400 = vsub.s32 0, %v399
    %v401 = vrot.slane %v396, %v400
    %v402 = vlaneseq
    %v403 = vshrl.u32 %v402, 7
    %v404 = vsub.s32 1, %v403
    %v405 = vrot.slane %v396, %v404
    %v406 = vlaneseq
    %v407 = vshrl.u32 %v406, 7
    %v408 = vsub.s32 2, %v407
    %v409 = vrot.slane %v396, %v408
    %413 = vmatprep.subr.mxu0 %v349
    %414 = vmatpush1.msra.mxu0 %v348
    %415 = vmatprep.subr.mxu0 %v352
    %416 = vmatpush1.msra.mxu0 %v351
    %417 = vmatprep.subr.mxu0 %v355
    %418 = vmatpush1.msra.mxu0 %v354
    %419 = vmatprep.subr.mxu0 %v358
    %420 = vmatpush1.msra.mxu0 %v357
    %421 = vmatprep.subr.mxu0 %v361
    %422 = vmatpush1.msra.mxu0 %v360
    %423 = vmatprep.subr.mxu0 %v364
    %424 = vmatpush1.msra.mxu0 %v363
    %425 = vmatprep.subr.mxu0 %v367
    %426 = vmatpush1.msra.mxu0 %v366
    %427 = vmatprep.subr.mxu0 %v370
    %428 = vmatpush1.msra.mxu0 %v369
    %429 = vmatprep.subr.mxu0 %v373
    %430 = vmatpush1.msra.mxu0 %v372
    %431 = vmatprep.subr.mxu0 %v376
    %432 = vmatpush1.msra.mxu0 %v375
    %433 = vmatprep.subr.mxu0 %v379
    %434 = vmatpush1.msra.mxu0 %v378
    %435 = vmatprep.subr.mxu0 %v382
    %436 = vmatpush1.msra.mxu0 %v381
    %437 = vmatprep.subr.mxu0 %v385
    %438 = vmatpush1.msra.mxu0 %v384
    %439 = vmatprep.subr.mxu0 %v388
    %440 = vmatpush1.msra.mxu0 %v387
    %441 = vmatprep.subr.mxu0 %v391
    %442 = vmatpush1.msra.mxu0 %v390
    %443 = vmatprep.subr.mxu0 %v394
    %444 = vmatpush1.msra.mxu0 %v393
    %445 = vmatprep.subr.mxu0 0.0
    %446 = vmatpush1.msra.mxu0 0.0
    %447 = vmatprep.subr.mxu0 0.0
    %448 = vmatpush1.msra.mxu0 0.0
    %449 = vmatprep.subr.mxu0 0.0
    %450 = vmatpush1.msra.mxu0 0.0
    %451 = vmatprep.subr.mxu0 0.0
    %452 = vmatpush1.msra.mxu0 0.0
    %453 = vmatprep.subr.mxu0 0.0
    %454 = vmatpush1.msra.mxu0 0.0
    %455 = vmatprep.subr.mxu0 0.0
    %456 = vmatpush1.msra.mxu0 0.0
    %457 = vmatprep.subr.mxu0 0.0
    %458 = vmatpush1.msra.mxu0 0.0
    %459 = vmatprep.subr.mxu0 0.0
    %460 = vmatpush1.msra.mxu0 0.0
    %461 = vmatprep.subr.mxu0 0.0
    %462 = vmatpush1.msra.mxu0 0.0
    %463 = vmatprep.subr.mxu0 0.0
    %464 = vmatpush1.msra.mxu0 0.0
    %465 = vmatprep.subr.mxu0 0.0
    %466 = vmatpush1.msra.mxu0 0.0
    %467 = vmatprep.subr.mxu0 0.0
    %468 = vmatpush1.msra.mxu0 0.0
    %469 = vmatprep.subr.mxu0 0.0
    %470 = vmatpush1.msra.mxu0 0.0
    %471 = vmatprep.subr.mxu0 0.0
    %472 = vmatpush1.msra.mxu0 0.0
    %473 = vmatprep.subr.mxu0 0.0
    %474 = vmatpush1.msra.mxu0 0.0
    %475 = vmatprep.subr.mxu0 0.0
    %476 = vmatpush1.msra.mxu0 0.0
    %477 = vmatprep.mubr.f32.mxu0 0.0
    %478 = vmatmul.mubr.f32.gmra.mrb[0].mxu0 %v345
    %v479 = vpop.f32.mrb[0].mxu0
    %v480 = vadd.f32 %v401, %v479
    %v481 = vpop.f32.mrb[0].mxu0
    %v482 = vadd.f32 %v405, %v481
    %483 = vdwg.mxu0
    %484 = vmatprep.subr.mxu0 0.0
    %485 = vmatpush1.msra.mxu0 %v350
    %486 = vmatprep.subr.mxu0 0.0
    %487 = vmatpush1.msra.mxu0 %v353
    %488 = vmatprep.subr.mxu0 0.0
    %489 = vmatpush1.msra.mxu0 %v356
    %490 = vmatprep.subr.mxu0 0.0
    %491 = vmatpush1.msra.mxu0 %v359
    %492 = vmatprep.subr.mxu0 0.0
    %493 = vmatpush1.msra.mxu0 %v362
    %494 = vmatprep.subr.mxu0 0.0
    %495 = vmatpush1.msra.mxu0 %v365
    %496 = vmatprep.subr.mxu0 0.0
    %497 = vmatpush1.msra.mxu0 %v368
    %498 = vmatprep.subr.mxu0 0.0
    %499 = vmatpush1.msra.mxu0 %v371
    %500 = vmatprep.subr.mxu0 0.0
    %501 = vmatpush1.msra.mxu0 %v374
    %502 = vmatprep.subr.mxu0 0.0
    %503 = vmatpush1.msra.mxu0 %v377
    %504 = vmatprep.subr.mxu0 0.0
    %505 = vmatpush1.msra.mxu0 %v380
    %506 = vmatprep.subr.mxu0 0.0
    %507 = vmatpush1.msra.mxu0 %v383
    %508 = vmatprep.subr.mxu0 0.0
    %509 = vmatpush1.msra.mxu0 %v386
    %510 = vmatprep.subr.mxu0 0.0
    %511 = vmatpush1.msra.mxu0 %v389
    %512 = vmatprep.subr.mxu0 0.0
    %513 = vmatpush1.msra.mxu0 %v392
    %514 = vmatprep.subr.mxu0 0.0
    %515 = vmatpush1.msra.mxu0 %v395
    %516 = vmatprep.subr.mxu0 0.0
    %517 = vmatpush1.msra.mxu0 0.0
    %518 = vmatprep.subr.mxu0 0.0
    %519 = vmatpush1.msra.mxu0 0.0
    %520 = vmatprep.subr.mxu0 0.0
    %521 = vmatpush1.msra.mxu0 0.0
    %522 = vmatprep.subr.mxu0 0.0
    %523 = vmatpush1.msra.mxu0 0.0
    %524 = vmatprep.subr.mxu0 0.0
    %525 = vmatpush1.msra.mxu0 0.0
    %526 = vmatprep.subr.mxu0 0.0
    %527 = vmatpush1.msra.mxu0 0.0
    %528 = vmatprep.subr.mxu0 0.0
    %529 = vmatpush1.msra.mxu0 0.0
    %530 = vmatprep.subr.mxu0 0.0
    %531 = vmatpush1.msra.mxu0 0.0
    %532 = vmatprep.subr.mxu0 0.0
    %533 = vmatpush1.msra.mxu0 0.0
    %534 = vmatprep.subr.mxu0 0.0
    %535 = vmatpush1.msra.mxu0 0.0
    %536 = vmatprep.subr.mxu0 0.0
    %537 = vmatpush1.msra.mxu0 0.0
    %538 = vmatprep.subr.mxu0 0.0
    %539 = vmatpush1.msra.mxu0 0.0
    %540 = vmatprep.subr.mxu0 0.0
    %541 = vmatpush1.msra.mxu0 0.0
    %542 = vmatprep.subr.mxu0 0.0
    %543 = vmatpush1.msra.mxu0 0.0
    %544 = vmatprep.subr.mxu0 0.0
    %545 = vmatpush1.msra.mxu0 0.0
    %546 = vmatprep.subr.mxu0 0.0
    %547 = vmatpush1.msra.mxu0 0.0
    %548 = vmatprep.mubr.f32.mxu0 0.0
    %549 = vmatmul.mubr.f32.gmra.mrb[0].mxu0 %v345
    %v550 = vpop.f32.mrb[0].mxu0
    %v551 = vadd.f32 %v409, %v550
    %v552 = vpop.f32.mrb[0].mxu0
    %553 = vdwg.mxu0
    %v554 = vld [vmem:[#allocation7] sm:$0xff]
    %v555 = vld [vmem:[#allocation7 + $0x8] sm:$0xff]
    %v556 = vld [vmem:[#allocation7 + $0x10] sm:$0xff]
    %v557 = vld [vmem:[#allocation7 + $0x18] sm:$0xff]
    %v558 = vld [vmem:[#allocation7 + $0x20] sm:$0xff]
    %v559 = vld [vmem:[#allocation7 + $0x28] sm:$0xff]
    %v560 = vld [vmem:[#allocation7 + $0x30] sm:$0xff]
    %v561 = vld [vmem:[#allocation7 + $0x38] sm:$0xff]
    %v562 = vld [vmem:[#allocation7 + $0x40] sm:$0xff]
    %v563 = vld [vmem:[#allocation7 + $0x48] sm:$0xff]
    %v564 = vld [vmem:[#allocation7 + $0x50] sm:$0xff]
    %v565 = vld [vmem:[#allocation7 + $0x58] sm:$0xff]
    %v566 = vld [vmem:[#allocation7 + $0x60] sm:$0xff]
    %v567 = vld [vmem:[#allocation7 + $0x68] sm:$0xff]
    %v568 = vld [vmem:[#allocation7 + $0x70] sm:$0xff]
    %v569 = vld [vmem:[#allocation7 + $0x78] sm:$0xff]
    %v570 = vld [vmem:[#allocation7 + $0x80] sm:$0xff]
    %v571 = vld [vmem:[#allocation7 + $0x88] sm:$0xff]
    %v572 = vld [vmem:[#allocation7 + $0x90] sm:$0xff]
    %v573 = vld [vmem:[#allocation7 + $0x98] sm:$0xff]
    %v574 = vld [vmem:[#allocation7 + $0xa0] sm:$0xff]
    %v575 = vld [vmem:[#allocation7 + $0xa8] sm:$0xff]
    %v576 = vld [vmem:[#allocation7 + $0xb0] sm:$0xff]
    %v577 = vld [vmem:[#allocation7 + $0xb8] sm:$0xff]
    %v578 = vld [vmem:[#allocation7 + $0xc0] sm:$0xff]
    %v579 = vld [vmem:[#allocation7 + $0xc8] sm:$0xff]
    %v580 = vld [vmem:[#allocation7 + $0xd0] sm:$0xff]
    %v581 = vld [vmem:[#allocation7 + $0xd8] sm:$0xff]
    %v582 = vld [vmem:[#allocation7 + $0xe0] sm:$0xff]
    %v583 = vld [vmem:[#allocation7 + $0xe8] sm:$0xff]
    %v584 = vld [vmem:[#allocation7 + $0xf0] sm:$0xff]
    %v585 = vld [vmem:[#allocation7 + $0xf8] sm:$0xff]
    %v586 = vld [vmem:[#allocation7 + $0x100] sm:$0xff]
    %v587 = vld [vmem:[#allocation7 + $0x108] sm:$0xff]
    %v588 = vld [vmem:[#allocation7 + $0x110] sm:$0xff]
    %v589 = vld [vmem:[#allocation7 + $0x118] sm:$0xff]
    %v590 = vld [vmem:[#allocation7 + $0x120] sm:$0xff]
    %v591 = vld [vmem:[#allocation7 + $0x128] sm:$0xff]
    %v592 = vld [vmem:[#allocation7 + $0x130] sm:$0xff]
    %v593 = vld [vmem:[#allocation7 + $0x138] sm:$0xff]
    %v594 = vld [vmem:[#allocation7 + $0x140] sm:$0xff]
    %v595 = vld [vmem:[#allocation7 + $0x148] sm:$0xff]
    %v596 = vld [vmem:[#allocation7 + $0x150] sm:$0xff]
    %v597 = vld [vmem:[#allocation7 + $0x158] sm:$0xff]
    %v598 = vld [vmem:[#allocation7 + $0x160] sm:$0xff]
    %v599 = vld [vmem:[#allocation7 + $0x168] sm:$0xff]
    %v600 = vld [vmem:[#allocation7 + $0x170] sm:$0xff]
    %v601 = vld [vmem:[#allocation7 + $0x178] sm:$0xff]
    %v602 = vld [vmem:[%s9] sm:$0x7]
    %v604 = vlaneseq
    %v605 = vshrl.u32 %v604, 7
    %v606 = vsub.s32 0, %v605
    %v607 = vrot.slane %v602, %v606
    %v608 = vlaneseq
    %v609 = vshrl.u32 %v608, 7
    %v610 = vsub.s32 1, %v609
    %v611 = vrot.slane %v602, %v610
    %v612 = vlaneseq
    %v613 = vshrl.u32 %v612, 7
    %v614 = vsub.s32 2, %v613
    %v615 = vrot.slane %v602, %v614
    %619 = vmatprep.subr.mxu0 %v555
    %620 = vmatpush1.msra.mxu0 %v554
    %621 = vmatprep.subr.mxu0 %v558
    %622 = vmatpush1.msra.mxu0 %v557
    %623 = vmatprep.subr.mxu0 %v561
    %624 = vmatpush1.msra.mxu0 %v560
    %625 = vmatprep.subr.mxu0 %v564
    %626 = vmatpush1.msra.mxu0 %v563
    %627 = vmatprep.subr.mxu0 %v567
    %628 = vmatpush1.msra.mxu0 %v566
    %629 = vmatprep.subr.mxu0 %v570
    %630 = vmatpush1.msra.mxu0 %v569
    %631 = vmatprep.subr.mxu0 %v573
    %632 = vmatpush1.msra.mxu0 %v572
    %633 = vmatprep.subr.mxu0 %v576
    %634 = vmatpush1.msra.mxu0 %v575
    %635 = vmatprep.subr.mxu0 %v579
    %636 = vmatpush1.msra.mxu0 %v578
    %637 = vmatprep.subr.mxu0 %v582
    %638 = vmatpush1.msra.mxu0 %v581
    %639 = vmatprep.subr.mxu0 %v585
    %640 = vmatpush1.msra.mxu0 %v584
    %641 = vmatprep.subr.mxu0 %v588
    %642 = vmatpush1.msra.mxu0 %v587
    %643 = vmatprep.subr.mxu0 %v591
    %644 = vmatpush1.msra.mxu0 %v590
    %645 = vmatprep.subr.mxu0 %v594
    %646 = vmatpush1.msra.mxu0 %v593
    %647 = vmatprep.subr.mxu0 %v597
    %648 = vmatpush1.msra.mxu0 %v596
    %649 = vmatprep.subr.mxu0 %v600
    %650 = vmatpush1.msra.mxu0 %v599
    %651 = vmatprep.subr.mxu0 0.0
    %652 = vmatpush1.msra.mxu0 0.0
    %653 = vmatprep.subr.mxu0 0.0
    %654 = vmatpush1.msra.mxu0 0.0
    %655 = vmatprep.subr.mxu0 0.0
    %656 = vmatpush1.msra.mxu0 0.0
    %657 = vmatprep.subr.mxu0 0.0
    %658 = vmatpush1.msra.mxu0 0.0
    %659 = vmatprep.subr.mxu0 0.0
    %660 = vmatpush1.msra.mxu0 0.0
    %661 = vmatprep.subr.mxu0 0.0
    %662 = vmatpush1.msra.mxu0 0.0
    %663 = vmatprep.subr.mxu0 0.0
    %664 = vmatpush1.msra.mxu0 0.0
    %665 = vmatprep.subr.mxu0 0.0
    %666 = vmatpush1.msra.mxu0 0.0
    %667 = vmatprep.subr.mxu0 0.0
    %668 = vmatpush1.msra.mxu0 0.0
    %669 = vmatprep.subr.mxu0 0.0
    %670 = vmatpush1.msra.mxu0 0.0
    %671 = vmatprep.subr.mxu0 0.0
    %672 = vmatpush1.msra.mxu0 0.0
    %673 = vmatprep.subr.mxu0 0.0
    %674 = vmatpush1.msra.mxu0 0.0
    %675 = vmatprep.subr.mxu0 0.0
    %676 = vmatpush1.msra.mxu0 0.0
    %677 = vmatprep.subr.mxu0 0.0
    %678 = vmatpush1.msra.mxu0 0.0
    %679 = vmatprep.subr.mxu0 0.0
    %680 = vmatpush1.msra.mxu0 0.0
    %681 = vmatprep.subr.mxu0 0.0
    %682 = vmatpush1.msra.mxu0 0.0
    %683 = vmatprep.mubr.f32.mxu0 0.0
    %684 = vmatmul.mubr.f32.gmra.mrb[0].mxu0 %v347
    %v685 = vpop.f32.mrb[0].mxu0
    %v686 = vadd.f32 %v607, %v685
    %v687 = vpop.f32.mrb[0].mxu0
    %v688 = vadd.f32 %v611, %v687
    %689 = vdwg.mxu0
    %690 = vmatprep.subr.mxu0 0.0
    %691 = vmatpush1.msra.mxu0 %v556
    %692 = vmatprep.subr.mxu0 0.0
    %693 = vmatpush1.msra.mxu0 %v559
    %694 = vmatprep.subr.mxu0 0.0
    %695 = vmatpush1.msra.mxu0 %v562
    %696 = vmatprep.subr.mxu0 0.0
    %697 = vmatpush1.msra.mxu0 %v565
    %698 = vmatprep.subr.mxu0 0.0
    %699 = vmatpush1.msra.mxu0 %v568
    %700 = vmatprep.subr.mxu0 0.0
    %701 = vmatpush1.msra.mxu0 %v571
    %702 = vmatprep.subr.mxu0 0.0
    %703 = vmatpush1.msra.mxu0 %v574
    %704 = vmatprep.subr.mxu0 0.0
    %705 = vmatpush1.msra.mxu0 %v577
    %706 = vmatprep.subr.mxu0 0.0
    %707 = vmatpush1.msra.mxu0 %v580
    %708 = vmatprep.subr.mxu0 0.0
    %709 = vmatpush1.msra.mxu0 %v583
    %710 = vmatprep.subr.mxu0 0.0
    %711 = vmatpush1.msra.mxu0 %v586
    %712 = vmatprep.subr.mxu0 0.0
    %713 = vmatpush1.msra.mxu0 %v589
    %714 = vmatprep.subr.mxu0 0.0
    %715 = vmatpush1.msra.mxu0 %v592
    %716 = vmatprep.subr.mxu0 0.0
    %717 = vmatpush1.msra.mxu0 %v595
    %718 = vmatprep.subr.mxu0 0.0
    %719 = vmatpush1.msra.mxu0 %v598
    %720 = vmatprep.subr.mxu0 0.0
    %721 = vmatpush1.msra.mxu0 %v601
    %722 = vmatprep.subr.mxu0 0.0
    %723 = vmatpush1.msra.mxu0 0.0
    %724 = vmatprep.subr.mxu0 0.0
    %725 = vmatpush1.msra.mxu0 0.0
    %726 = vmatprep.subr.mxu0 0.0
    %727 = vmatpush1.msra.mxu0 0.0
    %728 = vmatprep.subr.mxu0 0.0
    %729 = vmatpush1.msra.mxu0 0.0
    %730 = vmatprep.subr.mxu0 0.0
    %731 = vmatpush1.msra.mxu0 0.0
    %732 = vmatprep.subr.mxu0 0.0
    %733 = vmatpush1.msra.mxu0 0.0
    %734 = vmatprep.subr.mxu0 0.0
    %735 = vmatpush1.msra.mxu0 0.0
    %736 = vmatprep.subr.mxu0 0.0
    %737 = vmatpush1.msra.mxu0 0.0
    %738 = vmatprep.subr.mxu0 0.0
    %739 = vmatpush1.msra.mxu0 0.0
    %740 = vmatprep.subr.mxu0 0.0
    %741 = vmatpush1.msra.mxu0 0.0
    %742 = vmatprep.subr.mxu0 0.0
    %743 = vmatpush1.msra.mxu0 0.0
    %744 = vmatprep.subr.mxu0 0.0
    %745 = vmatpush1.msra.mxu0 0.0
    %746 = vmatprep.subr.mxu0 0.0
    %747 = vmatpush1.msra.mxu0 0.0
    %748 = vmatprep.subr.mxu0 0.0
    %749 = vmatpush1.msra.mxu0 0.0
    %750 = vmatprep.subr.mxu0 0.0
    %751 = vmatpush1.msra.mxu0 0.0
    %752 = vmatprep.subr.mxu0 0.0
    %753 = vmatpush1.msra.mxu0 0.0
    %754 = vmatprep.mubr.f32.mxu0 0.0
    %755 = vmatmul.mubr.f32.gmra.mrb[0].mxu0 %v347
    %v756 = vpop.f32.mrb[0].mxu0
    %v757 = vadd.f32 %v615, %v756
    %v758 = vpop.f32.mrb[0].mxu0
    %759 = vdwg.mxu0
    %v760 = vadd.f32 %v480, %v686
    %v761 = vxor.u32 %v760, 2147483648
    %v762 = vmul.f32 %v761, 1.442695
    %v763 = vpow.pop %v762
    %v764 = vadd.f32 %v763, 1.0
    %v765 = vrcp.pop %v764
    %v766 = vmul.f32 1.0, %v765
    %v767 = vadd.f32 %v482, %v688
    %v768 = vxor.u32 %v767, 2147483648
    %v769 = vmul.f32 %v768, 1.442695
    %v770 = vpow.pop %v769
    %v771 = vadd.f32 %v770, 1.0
    %v772 = vrcp.pop %v771
    %v773 = vmul.f32 1.0, %v772
    %v774 = vmul.f32 %v766, %v757
    %v775 = vadd.f32 %v551, %v774
    %v776 = vtanh.pop %v775
    %v777 = vsub.f32 1.0, %v773
    %v778 = vmul.f32 %v777, %v776
    %v779 = vmul.f32 %v773, %v347
    %v780 = vadd.f32 %v778, %v779
    %781 = vst [vmem:[#allocation11] sm:$0xff] %v345
    %782 = vst [vmem:[%s346] sm:$0xff] %v780
    %v784 = vcombine.high %v780, %v780
    %v786 = vunpack.c.l.s4 1966171168
    %v787 = vunpack.c.0.s8 %v786
    %v788 = vlaneseq
    %v789 = vshrl.u32 %v788, 7
    %v790 = vsub.s32 %v787, %v789
    %v791 = vrot.slane %v780, %v790
    %v793 = vunpack.c.l.s4 1966171168
    %v794 = vunpack.c.0.s8 %v793
    %v795 = vlaneseq
    %v796 = vshrl.u32 %v795, 7
    %v797 = vsub.s32 %v794, %v796
    %v798 = vrot.slane %v784, %v797
    %v799 = vcombine.high %v791, %v791
    %v800 = vcombine.high %v798, %v798
    %v802 = vunpack.c.l.s4 1966171168
    %v803 = vunpack.c.0.s8 %v802
    %v804 = vlaneseq
    %v805 = vshrl.u32 %v804, 7
    %v806 = vsub.s32 %v803, %v805
    %v807 = vrot.slane %v791, %v806
    %v809 = vunpack.c.l.s4 1966171168
    %v810 = vunpack.c.0.s8 %v809
    %v811 = vlaneseq
    %v812 = vshrl.u32 %v811, 7
    %v813 = vsub.s32 %v810, %v812
    %v814 = vrot.slane %v798, %v813
    %v816 = vunpack.c.l.s4 1966171168
    %v817 = vunpack.c.0.s8 %v816
    %v818 = vlaneseq
    %v819 = vshrl.u32 %v818, 7
    %v820 = vsub.s32 %v817, %v819
    %v821 = vrot.slane %v799, %v820
    %v823 = vunpack.c.l.s4 1966171168
    %v824 = vunpack.c.0.s8 %v823
    %v825 = vlaneseq
    %v826 = vshrl.u32 %v825, 7
    %v827 = vsub.s32 %v824, %v826
    %v828 = vrot.slane %v800, %v827
    %v829 = vcombine.high %v807, %v807
    %v830 = vcombine.high %v814, %v814
    %v831 = vcombine.high %v821, %v821
    %v832 = vcombine.high %v828, %v828
    %v841 = vld [vmem:[%s3] sm:$0xff]
    %v842 = vld [vmem:[%s3 + $0x8] sm:$0xff]
    %v843 = vld [vmem:[%s3 + $0x10] sm:$0xff]
    %v844 = vld [vmem:[%s3 + $0x18] sm:$0xff]
    %v845 = vld [vmem:[%s3 + $0x20] sm:$0xff]
    %v846 = vld [vmem:[%s3 + $0x28] sm:$0xff]
    %v847 = vld [vmem:[%s3 + $0x30] sm:$0xff]
    %v848 = vld [vmem:[%s3 + $0x38] sm:$0xff]
    %v849 = vld [vmem:[%s3 + $0x40] sm:$0xff]
    %v850 = vld [vmem:[%s3 + $0x48] sm:$0xff]
    %v851 = vld [vmem:[%s3 + $0x50] sm:$0xff]
    %v852 = vld [vmem:[%s3 + $0x58] sm:$0xff]
    %v853 = vld [vmem:[%s3 + $0x60] sm:$0xff]
    %v854 = vld [vmem:[%s3 + $0x68] sm:$0xff]
    %v855 = vld [vmem:[%s3 + $0x70] sm:$0xff]
    %v856 = vld [vmem:[%s3 + $0x78] sm:$0xff]
    %v857 = vld [vmem:[%s3 + $0x80] sm:$0xff]
    %v858 = vld [vmem:[%s3 + $0x88] sm:$0xff]
    %v859 = vld [vmem:[%s3 + $0x90] sm:$0xff]
    %v860 = vld [vmem:[%s3 + $0x98] sm:$0xff]
    %v861 = vld [vmem:[%s3 + $0xa0] sm:$0xff]
    %v862 = vld [vmem:[%s3 + $0xa8] sm:$0xff]
    %v863 = vld [vmem:[%s3 + $0xb0] sm:$0xff]
    %v864 = vld [vmem:[%s3 + $0xb8] sm:$0xff]
    %v865 = vld [vmem:[%s3 + $0xc0] sm:$0xff]
    %v866 = vld [vmem:[%s3 + $0xc8] sm:$0xff]
    %v867 = vld [vmem:[%s3 + $0xd0] sm:$0xff]
    %v868 = vld [vmem:[%s3 + $0xd8] sm:$0xff]
    %v869 = vld [vmem:[%s3 + $0xe0] sm:$0xff]
    %v870 = vld [vmem:[%s3 + $0xe8] sm:$0xff]
    %v871 = vld [vmem:[%s3 + $0xf0] sm:$0xff]
    %v872 = vld [vmem:[%s3 + $0xf8] sm:$0xff]
    %v873 = vld [vmem:[%s3 + $0x100] sm:$0xff]
    %v874 = vld [vmem:[%s3 + $0x108] sm:$0xff]
    %v875 = vld [vmem:[%s3 + $0x110] sm:$0xff]
    %v876 = vld [vmem:[%s3 + $0x118] sm:$0xff]
    %v877 = vld [vmem:[%s3 + $0x120] sm:$0xff]
    %v878 = vld [vmem:[%s3 + $0x128] sm:$0xff]
    %v879 = vld [vmem:[%s3 + $0x130] sm:$0xff]
    %v880 = vld [vmem:[%s3 + $0x138] sm:$0xff]
    %v881 = vld [vmem:[%s3 + $0x140] sm:$0xff]
    %v882 = vld [vmem:[%s3 + $0x148] sm:$0xff]
    %v883 = vld [vmem:[%s3 + $0x150] sm:$0xff]
    %v884 = vld [vmem:[%s3 + $0x158] sm:$0xff]
    %v885 = vld [vmem:[%s3 + $0x160] sm:$0xff]
    %v886 = vld [vmem:[%s3 + $0x168] sm:$0xff]
    %v887 = vld [vmem:[%s3 + $0x170] sm:$0xff]
    %v888 = vld [vmem:[%s3 + $0x178] sm:$0xff]
    %v889 = vld [vmem:[%s3 + $0x180] sm:$0xff]
    %v890 = vld [vmem:[%s3 + $0x188] sm:$0xff]
    %v891 = vld [vmem:[%s3 + $0x190] sm:$0xff]
    %v892 = vld [vmem:[%s3 + $0x198] sm:$0xff]
    %v893 = vld [vmem:[%s3 + $0x1a0] sm:$0xff]
    %v894 = vld [vmem:[%s3 + $0x1a8] sm:$0xff]
    %v895 = vld [vmem:[%s3 + $0x1b0] sm:$0xff]
    %v896 = vld [vmem:[%s3 + $0x1b8] sm:$0xff]
    %v897 = vld [vmem:[%s3 + $0x1c0] sm:$0xff]
    %v898 = vld [vmem:[%s3 + $0x1c8] sm:$0xff]
    %v899 = vld [vmem:[%s3 + $0x1d0] sm:$0xff]
    %v900 = vld [vmem:[%s3 + $0x1d8] sm:$0xff]
    %v901 = vld [vmem:[%s3 + $0x1e0] sm:$0xff]
    %v902 = vld [vmem:[%s3 + $0x1e8] sm:$0xff]
    %v903 = vld [vmem:[%s3 + $0x1f0] sm:$0xff]
    %v904 = vld [vmem:[%s3 + $0x1f8] sm:$0xff]
    %v905 = vld [vmem:[%s3 + $0x200] sm:$0xff]
    %v906 = vld [vmem:[%s3 + $0x208] sm:$0xff]
    %v907 = vld [vmem:[%s3 + $0x210] sm:$0xff]
    %v908 = vld [vmem:[%s3 + $0x218] sm:$0xff]
    %v909 = vld [vmem:[%s3 + $0x220] sm:$0xff]
    %v910 = vld [vmem:[%s3 + $0x228] sm:$0xff]
    %v911 = vld [vmem:[%s3 + $0x230] sm:$0xff]
    %v912 = vld [vmem:[%s3 + $0x238] sm:$0xff]
    %v913 = vld [vmem:[%s3 + $0x240] sm:$0xff]
    %v914 = vld [vmem:[%s3 + $0x248] sm:$0xff]
    %v915 = vld [vmem:[%s3 + $0x250] sm:$0xff]
    %v916 = vld [vmem:[%s3 + $0x258] sm:$0xff]
    %v917 = vld [vmem:[%s3 + $0x260] sm:$0xff]
    %v918 = vld [vmem:[%s3 + $0x268] sm:$0xff]
    %v919 = vld [vmem:[%s3 + $0x270] sm:$0xff]
    %v920 = vld [vmem:[%s3 + $0x278] sm:$0xff]
    %v921 = vld [vmem:[%s3 + $0x280] sm:$0xff]
    %v922 = vld [vmem:[%s3 + $0x288] sm:$0xff]
    %v923 = vld [vmem:[%s3 + $0x290] sm:$0xff]
    %v924 = vld [vmem:[%s3 + $0x298] sm:$0xff]
    %v925 = vld [vmem:[%s3 + $0x2a0] sm:$0xff]
    %v926 = vld [vmem:[%s3 + $0x2a8] sm:$0xff]
    %v927 = vld [vmem:[%s3 + $0x2b0] sm:$0xff]
    %v928 = vld [vmem:[%s3 + $0x2b8] sm:$0xff]
    %v929 = vld [vmem:[%s3 + $0x2c0] sm:$0xff]
    %v930 = vld [vmem:[%s3 + $0x2c8] sm:$0xff]
    %v931 = vld [vmem:[%s3 + $0x2d0] sm:$0xff]
    %v932 = vld [vmem:[%s3 + $0x2d8] sm:$0xff]
    %v933 = vld [vmem:[%s3 + $0x2e0] sm:$0xff]
    %v934 = vld [vmem:[%s3 + $0x2e8] sm:$0xff]
    %v935 = vld [vmem:[%s3 + $0x2f0] sm:$0xff]
    %v936 = vld [vmem:[%s3 + $0x2f8] sm:$0xff]
    %v937 = vld [vmem:[%s3 + $0x300] sm:$0xff]
    %v938 = vld [vmem:[%s3 + $0x308] sm:$0xff]
    %v939 = vld [vmem:[%s3 + $0x310] sm:$0xff]
    %v940 = vld [vmem:[%s3 + $0x318] sm:$0xff]
    %v941 = vld [vmem:[%s3 + $0x320] sm:$0xff]
    %v942 = vld [vmem:[%s3 + $0x328] sm:$0xff]
    %v943 = vld [vmem:[%s3 + $0x330] sm:$0xff]
    %v944 = vld [vmem:[%s3 + $0x338] sm:$0xff]
    %v945 = vld [vmem:[%s3 + $0x340] sm:$0xff]
    %v946 = vld [vmem:[%s3 + $0x348] sm:$0xff]
    %v947 = vld [vmem:[%s3 + $0x350] sm:$0xff]
    %v948 = vld [vmem:[%s3 + $0x358] sm:$0xff]
    %v949 = vld [vmem:[%s3 + $0x360] sm:$0xff]
    %v950 = vld [vmem:[%s3 + $0x368] sm:$0xff]
    %v951 = vld [vmem:[%s3 + $0x370] sm:$0xff]
    %v952 = vld [vmem:[%s3 + $0x378] sm:$0xff]
    %v953 = vld [vmem:[%s3 + $0x380] sm:$0xff]
    %v954 = vld [vmem:[%s3 + $0x388] sm:$0xff]
    %v955 = vld [vmem:[%s3 + $0x390] sm:$0xff]
    %v956 = vld [vmem:[%s3 + $0x398] sm:$0xff]
    %v957 = vld [vmem:[%s3 + $0x3a0] sm:$0xff]
    %v958 = vld [vmem:[%s3 + $0x3a8] sm:$0xff]
    %v959 = vld [vmem:[%s3 + $0x3b0] sm:$0xff]
    %v960 = vld [vmem:[%s3 + $0x3b8] sm:$0xff]
    %v961 = vld [vmem:[%s3 + $0x3c0] sm:$0xff]
    %v962 = vld [vmem:[%s3 + $0x3c8] sm:$0xff]
    %v963 = vld [vmem:[%s3 + $0x3d0] sm:$0xff]
    %v964 = vld [vmem:[%s3 + $0x3d8] sm:$0xff]
    %v965 = vld [vmem:[%s3 + $0x3e0] sm:$0xff]
    %v966 = vld [vmem:[%s3 + $0x3e8] sm:$0xff]
    %v967 = vld [vmem:[%s3 + $0x3f0] sm:$0xff]
    %v968 = vld [vmem:[%s3 + $0x3f8] sm:$0xff]
    %969 = vmatprep.subr.mxu0 0.0
    %970 = vmatpush1.msra.mxu0 %v841
    %971 = vmatprep.subr.mxu0 0.0
    %972 = vmatpush1.msra.mxu0 %v842
    %973 = vmatprep.subr.mxu0 0.0
    %974 = vmatpush1.msra.mxu0 %v843
    %975 = vmatprep.subr.mxu0 0.0
    %976 = vmatpush1.msra.mxu0 %v844
    %977 = vmatprep.subr.mxu0 0.0
    %978 = vmatpush1.msra.mxu0 %v845
    %979 = vmatprep.subr.mxu0 0.0
    %980 = vmatpush1.msra.mxu0 %v846
    %981 = vmatprep.subr.mxu0 0.0
    %982 = vmatpush1.msra.mxu0 %v847
    %983 = vmatprep.subr.mxu0 0.0
    %984 = vmatpush1.msra.mxu0 %v848
    %985 = vmatprep.subr.mxu0 0.0
    %986 = vmatpush1.msra.mxu0 %v849
    %987 = vmatprep.subr.mxu0 0.0
    %988 = vmatpush1.msra.mxu0 %v850
    %989 = vmatprep.subr.mxu0 0.0
    %990 = vmatpush1.msra.mxu0 %v851
    %991 = vmatprep.subr.mxu0 0.0
    %992 = vmatpush1.msra.mxu0 %v852
    %993 = vmatprep.subr.mxu0 0.0
    %994 = vmatpush1.msra.mxu0 %v853
    %995 = vmatprep.subr.mxu0 0.0
    %996 = vmatpush1.msra.mxu0 %v854
    %997 = vmatprep.subr.mxu0 0.0
    %998 = vmatpush1.msra.mxu0 %v855
    %999 = vmatprep.subr.mxu0 0.0
    %1000 = vmatpush1.msra.mxu0 %v856
    %1001 = vmatprep.subr.mxu0 0.0
    %1002 = vmatpush1.msra.mxu0 0.0
    %1003 = vmatprep.subr.mxu0 0.0
    %1004 = vmatpush1.msra.mxu0 0.0
    %1005 = vmatprep.subr.mxu0 0.0
    %1006 = vmatpush1.msra.mxu0 0.0
    %1007 = vmatprep.subr.mxu0 0.0
    %1008 = vmatpush1.msra.mxu0 0.0
    %1009 = vmatprep.subr.mxu0 0.0
    %1010 = vmatpush1.msra.mxu0 0.0
    %1011 = vmatprep.subr.mxu0 0.0
    %1012 = vmatpush1.msra.mxu0 0.0
    %1013 = vmatprep.subr.mxu0 0.0
    %1014 = vmatpush1.msra.mxu0 0.0
    %1015 = vmatprep.subr.mxu0 0.0
    %1016 = vmatpush1.msra.mxu0 0.0
    %1017 = vmatprep.subr.mxu0 0.0
    %1018 = vmatpush1.msra.mxu0 0.0
    %1019 = vmatprep.subr.mxu0 0.0
    %1020 = vmatpush1.msra.mxu0 0.0
    %1021 = vmatprep.subr.mxu0 0.0
    %1022 = vmatpush1.msra.mxu0 0.0
    %1023 = vmatprep.subr.mxu0 0.0
    %1024 = vmatpush1.msra.mxu0 0.0
    %1025 = vmatprep.subr.mxu0 0.0
    %1026 = vmatpush1.msra.mxu0 0.0
    %1027 = vmatprep.subr.mxu0 0.0
    %1028 = vmatpush1.msra.mxu0 0.0
    %1029 = vmatprep.subr.mxu0 0.0
    %1030 = vmatpush1.msra.mxu0 0.0
    %1031 = vmatprep.subr.mxu0 0.0
    %1032 = vmatpush1.msra.mxu0 0.0
    %1033 = vmatprep.mubr.f32.mxu0 0.0
    %1034 = vmatmul.mubr.f32.gmra.mrb[0].mxu0 %v807
    %v1035 = vpop.f32.mrb[0].mxu0
    %v1036 = vadd.f32 0.0, %v1035
    %v1037 = vpop.f32.mrb[0].mxu0
    %1038 = vdwg.mxu0
    %1039 = vmatprep.subr.mxu0 0.0
    %1040 = vmatpush1.msra.mxu0 %v857
    %1041 = vmatprep.subr.mxu0 0.0
    %1042 = vmatpush1.msra.mxu0 %v858
    %1043 = vmatprep.subr.mxu0 0.0
    %1044 = vmatpush1.msra.mxu0 %v859
    %1045 = vmatprep.subr.mxu0 0.0
    %1046 = vmatpush1.msra.mxu0 %v860
    %1047 = vmatprep.subr.mxu0 0.0
    %1048 = vmatpush1.msra.mxu0 %v861
    %1049 = vmatprep.subr.mxu0 0.0
    %1050 = vmatpush1.msra.mxu0 %v862
    %1051 = vmatprep.subr.mxu0 0.0
    %1052 = vmatpush1.msra.mxu0 %v863
    %1053 = vmatprep.subr.mxu0 0.0
    %1054 = vmatpush1.msra.mxu0 %v864
    %1055 = vmatprep.subr.mxu0 0.0
    %1056 = vmatpush1.msra.mxu0 %v865
    %1057 = vmatprep.subr.mxu0 0.0
    %1058 = vmatpush1.msra.mxu0 %v866
    %1059 = vmatprep.subr.mxu0 0.0
    %1060 = vmatpush1.msra.mxu0 %v867
    %1061 = vmatprep.subr.mxu0 0.0
    %1062 = vmatpush1.msra.mxu0 %v868
    %1063 = vmatprep.subr.mxu0 0.0
    %1064 = vmatpush1.msra.mxu0 %v869
    %1065 = vmatprep.subr.mxu0 0.0
    %1066 = vmatpush1.msra.mxu0 %v870
    %1067 = vmatprep.subr.mxu0 0.0
    %1068 = vmatpush1.msra.mxu0 %v871
    %1069 = vmatprep.subr.mxu0 0.0
    %1070 = vmatpush1.msra.mxu0 %v872
    %1071 = vmatprep.subr.mxu0 0.0
    %1072 = vmatpush1.msra.mxu0 0.0
    %1073 = vmatprep.subr.mxu0 0.0
    %1074 = vmatpush1.msra.mxu0 0.0
    %1075 = vmatprep.subr.mxu0 0.0
    %1076 = vmatpush1.msra.mxu0 0.0
    %1077 = vmatprep.subr.mxu0 0.0
    %1078 = vmatpush1.msra.mxu0 0.0
    %1079 = vmatprep.subr.mxu0 0.0
    %1080 = vmatpush1.msra.mxu0 0.0
    %1081 = vmatprep.subr.mxu0 0.0
    %1082 = vmatpush1.msra.mxu0 0.0
    %1083 = vmatprep.subr.mxu0 0.0
    %1084 = vmatpush1.msra.mxu0 0.0
    %1085 = vmatprep.subr.mxu0 0.0
    %1086 = vmatpush1.msra.mxu0 0.0
    %1087 = vmatprep.subr.mxu0 0.0
    %1088 = vmatpush1.msra.mxu0 0.0
    %1089 = vmatprep.subr.mxu0 0.0
    %1090 = vmatpush1.msra.mxu0 0.0
    %1091 = vmatprep.subr.mxu0 0.0
    %1092 = vmatpush1.msra.mxu0 0.0
    %1093 = vmatprep.subr.mxu0 0.0
    %1094 = vmatpush1.msra.mxu0 0.0
    %1095 = vmatprep.subr.mxu0 0.0
    %1096 = vmatpush1.msra.mxu0 0.0
    %1097 = vmatprep.subr.mxu0 0.0
    %1098 = vmatpush1.msra.mxu0 0.0
    %1099 = vmatprep.subr.mxu0 0.0
    %1100 = vmatpush1.msra.mxu0 0.0
    %1101 = vmatprep.subr.mxu0 0.0
    %1102 = vmatpush1.msra.mxu0 0.0
    %1103 = vmatprep.mubr.f32.mxu0 0.0
    %1104 = vmatmul.mubr.f32.gmra.mrb[0].mxu0 %v821
    %v1105 = vpop.f32.mrb[0].mxu0
    %v1106 = vadd.f32 0.0, %v1105
    %v1107 = vpop.f32.mrb[0].mxu0
    %1108 = vdwg.mxu0
    %1109 = vmatprep.subr.mxu0 0.0
    %1110 = vmatpush1.msra.mxu0 %v873
    %1111 = vmatprep.subr.mxu0 0.0
    %1112 = vmatpush1.msra.mxu0 %v874
    %1113 = vmatprep.subr.mxu0 0.0
    %1114 = vmatpush1.msra.mxu0 %v875
    %1115 = vmatprep.subr.mxu0 0.0
    %1116 = vmatpush1.msra.mxu0 %v876
    %1117 = vmatprep.subr.mxu0 0.0
    %1118 = vmatpush1.msra.mxu0 %v877
    %1119 = vmatprep.subr.mxu0 0.0
    %1120 = vmatpush1.msra.mxu0 %v878
    %1121 = vmatprep.subr.mxu0 0.0
    %1122 = vmatpush1.msra.mxu0 %v879
    %1123 = vmatprep.subr.mxu0 0.0
    %1124 = vmatpush1.msra.mxu0 %v880
    %1125 = vmatprep.subr.mxu0 0.0
    %1126 = vmatpush1.msra.mxu0 %v881
    %1127 = vmatprep.subr.mxu0 0.0
    %1128 = vmatpush1.msra.mxu0 %v882
    %1129 = vmatprep.subr.mxu0 0.0
    %1130 = vmatpush1.msra.mxu0 %v883
    %1131 = vmatprep.subr.mxu0 0.0
    %1132 = vmatpush1.msra.mxu0 %v884
    %1133 = vmatprep.subr.mxu0 0.0
    %1134 = vmatpush1.msra.mxu0 %v885
    %1135 = vmatprep.subr.mxu0 0.0
    %1136 = vmatpush1.msra.mxu0 %v886
    %1137 = vmatprep.subr.mxu0 0.0
    %1138 = vmatpush1.msra.mxu0 %v887
    %1139 = vmatprep.subr.mxu0 0.0
    %1140 = vmatpush1.msra.mxu0 %v888
    %1141 = vmatprep.subr.mxu0 0.0
    %1142 = vmatpush1.msra.mxu0 0.0
    %1143 = vmatprep.subr.mxu0 0.0
    %1144 = vmatpush1.msra.mxu0 0.0
    %1145 = vmatprep.subr.mxu0 0.0
    %1146 = vmatpush1.msra.mxu0 0.0
    %1147 = vmatprep.subr.mxu0 0.0
    %1148 = vmatpush1.msra.mxu0 0.0
    %1149 = vmatprep.subr.mxu0 0.0
    %1150 = vmatpush1.msra.mxu0 0.0
    %1151 = vmatprep.subr.mxu0 0.0
    %1152 = vmatpush1.msra.mxu0 0.0
    %1153 = vmatprep.subr.mxu0 0.0
    %1154 = vmatpush1.msra.mxu0 0.0
    %1155 = vmatprep.subr.mxu0 0.0
    %1156 = vmatpush1.msra.mxu0 0.0
    %1157 = vmatprep.subr.mxu0 0.0
    %1158 = vmatpush1.msra.mxu0 0.0
    %1159 = vmatprep.subr.mxu0 0.0
    %1160 = vmatpush1.msra.mxu0 0.0
    %1161 = vmatprep.subr.mxu0 0.0
    %1162 = vmatpush1.msra.mxu0 0.0
    %1163 = vmatprep.subr.mxu0 0.0
    %1164 = vmatpush1.msra.mxu0 0.0
    %1165 = vmatprep.subr.mxu0 0.0
    %1166 = vmatpush1.msra.mxu0 0.0
    %1167 = vmatprep.subr.mxu0 0.0
    %1168 = vmatpush1.msra.mxu0 0.0
    %1169 = vmatprep.subr.mxu0 0.0
    %1170 = vmatpush1.msra.mxu0 0.0
    %1171 = vmatprep.subr.mxu0 0.0
    %1172 = vmatpush1.msra.mxu0 0.0
    %1173 = vmatprep.mubr.f32.mxu0 0.0
    %1174 = vmatmul.mubr.f32.gmra.mrb[0].mxu0 %v829
    %v1175 = vpop.f32.mrb[0].mxu0
    %v1176 = vadd.f32 0.0, %v1175
    %v1177 = vpop.f32.mrb[0].mxu0
    %1178 = vdwg.mxu0
    %1179 = vmatprep.subr.mxu0 0.0
    %1180 = vmatpush1.msra.mxu0 %v889
    %1181 = vmatprep.subr.mxu0 0.0
    %1182 = vmatpush1.msra.mxu0 %v890
    %1183 = vmatprep.subr.mxu0 0.0
    %1184 = vmatpush1.msra.mxu0 %v891
    %1185 = vmatprep.subr.mxu0 0.0
    %1186 = vmatpush1.msra.mxu0 %v892
    %1187 = vmatprep.subr.mxu0 0.0
    %1188 = vmatpush1.msra.mxu0 %v893
    %1189 = vmatprep.subr.mxu0 0.0
    %1190 = vmatpush1.msra.mxu0 %v894
    %1191 = vmatprep.subr.mxu0 0.0
    %1192 = vmatpush1.msra.mxu0 %v895
    %1193 = vmatprep.subr.mxu0 0.0
    %1194 = vmatpush1.msra.mxu0 %v896
    %1195 = vmatprep.subr.mxu0 0.0
    %1196 = vmatpush1.msra.mxu0 %v897
    %1197 = vmatprep.subr.mxu0 0.0
    %1198 = vmatpush1.msra.mxu0 %v898
    %1199 = vmatprep.subr.mxu0 0.0
    %1200 = vmatpush1.msra.mxu0 %v899
    %1201 = vmatprep.subr.mxu0 0.0
    %1202 = vmatpush1.msra.mxu0 %v900
    %1203 = vmatprep.subr.mxu0 0.0
    %1204 = vmatpush1.msra.mxu0 %v901
    %1205 = vmatprep.subr.mxu0 0.0
    %1206 = vmatpush1.msra.mxu0 %v902
    %1207 = vmatprep.subr.mxu0 0.0
    %1208 = vmatpush1.msra.mxu0 %v903
    %1209 = vmatprep.subr.mxu0 0.0
    %1210 = vmatpush1.msra.mxu0 %v904
    %1211 = vmatprep.subr.mxu0 0.0
    %1212 = vmatpush1.msra.mxu0 0.0
    %1213 = vmatprep.subr.mxu0 0.0
    %1214 = vmatpush1.msra.mxu0 0.0
    %1215 = vmatprep.subr.mxu0 0.0
    %1216 = vmatpush1.msra.mxu0 0.0
    %1217 = vmatprep.subr.mxu0 0.0
    %1218 = vmatpush1.msra.mxu0 0.0
    %1219 = vmatprep.subr.mxu0 0.0
    %1220 = vmatpush1.msra.mxu0 0.0
    %1221 = vmatprep.subr.mxu0 0.0
    %1222 = vmatpush1.msra.mxu0 0.0
    %1223 = vmatprep.subr.mxu0 0.0
    %1224 = vmatpush1.msra.mxu0 0.0
    %1225 = vmatprep.subr.mxu0 0.0
    %1226 = vmatpush1.msra.mxu0 0.0
    %1227 = vmatprep.subr.mxu0 0.0
    %1228 = vmatpush1.msra.mxu0 0.0
    %1229 = vmatprep.subr.mxu0 0.0
    %1230 = vmatpush1.msra.mxu0 0.0
    %1231 = vmatprep.subr.mxu0 0.0
    %1232 = vmatpush1.msra.mxu0 0.0
    %1233 = vmatprep.subr.mxu0 0.0
    %1234 = vmatpush1.msra.mxu0 0.0
    %1235 = vmatprep.subr.mxu0 0.0
    %1236 = vmatpush1.msra.mxu0 0.0
    %1237 = vmatprep.subr.mxu0 0.0
    %1238 = vmatpush1.msra.mxu0 0.0
    %1239 = vmatprep.subr.mxu0 0.0
    %1240 = vmatpush1.msra.mxu0 0.0
    %1241 = vmatprep.subr.mxu0 0.0
    %1242 = vmatpush1.msra.mxu0 0.0
    %1243 = vmatprep.mubr.f32.mxu0 0.0
    %1244 = vmatmul.mubr.f32.gmra.mrb[0].mxu0 %v831
    %v1245 = vpop.f32.mrb[0].mxu0
    %v1246 = vadd.f32 0.0, %v1245
    %v1247 = vpop.f32.mrb[0].mxu0
    %1248 = vdwg.mxu0
    %1249 = vmatprep.subr.mxu0 0.0
    %1250 = vmatpush1.msra.mxu0 %v905
    %1251 = vmatprep.subr.mxu0 0.0
    %1252 = vmatpush1.msra.mxu0 %v906
    %1253 = vmatprep.subr.mxu0 0.0
    %1254 = vmatpush1.msra.mxu0 %v907
    %1255 = vmatprep.subr.mxu0 0.0
    %1256 = vmatpush1.msra.mxu0 %v908
    %1257 = vmatprep.subr.mxu0 0.0
    %1258 = vmatpush1.msra.mxu0 %v909
    %1259 = vmatprep.subr.mxu0 0.0
    %1260 = vmatpush1.msra.mxu0 %v910
    %1261 = vmatprep.subr.mxu0 0.0
    %1262 = vmatpush1.msra.mxu0 %v911
    %1263 = vmatprep.subr.mxu0 0.0
    %1264 = vmatpush1.msra.mxu0 %v912
    %1265 = vmatprep.subr.mxu0 0.0
    %1266 = vmatpush1.msra.mxu0 %v913
    %1267 = vmatprep.subr.mxu0 0.0
    %1268 = vmatpush1.msra.mxu0 %v914
    %1269 = vmatprep.subr.mxu0 0.0
    %1270 = vmatpush1.msra.mxu0 %v915
    %1271 = vmatprep.subr.mxu0 0.0
    %1272 = vmatpush1.msra.mxu0 %v916
    %1273 = vmatprep.subr.mxu0 0.0
    %1274 = vmatpush1.msra.mxu0 %v917
    %1275 = vmatprep.subr.mxu0 0.0
    %1276 = vmatpush1.msra.mxu0 %v918
    %1277 = vmatprep.subr.mxu0 0.0
    %1278 = vmatpush1.msra.mxu0 %v919
    %1279 = vmatprep.subr.mxu0 0.0
    %1280 = vmatpush1.msra.mxu0 %v920
    %1281 = vmatprep.subr.mxu0 0.0
    %1282 = vmatpush1.msra.mxu0 0.0
    %1283 = vmatprep.subr.mxu0 0.0
    %1284 = vmatpush1.msra.mxu0 0.0
    %1285 = vmatprep.subr.mxu0 0.0
    %1286 = vmatpush1.msra.mxu0 0.0
    %1287 = vmatprep.subr.mxu0 0.0
    %1288 = vmatpush1.msra.mxu0 0.0
    %1289 = vmatprep.subr.mxu0 0.0
    %1290 = vmatpush1.msra.mxu0 0.0
    %1291 = vmatprep.subr.mxu0 0.0
    %1292 = vmatpush1.msra.mxu0 0.0
    %1293 = vmatprep.subr.mxu0 0.0
    %1294 = vmatpush1.msra.mxu0 0.0
    %1295 = vmatprep.subr.mxu0 0.0
    %1296 = vmatpush1.msra.mxu0 0.0
    %1297 = vmatprep.subr.mxu0 0.0
    %1298 = vmatpush1.msra.mxu0 0.0
    %1299 = vmatprep.subr.mxu0 0.0
    %1300 = vmatpush1.msra.mxu0 0.0
    %1301 = vmatprep.subr.mxu0 0.0
    %1302 = vmatpush1.msra.mxu0 0.0
    %1303 = vmatprep.subr.mxu0 0.0
    %1304 = vmatpush1.msra.mxu0 0.0
    %1305 = vmatprep.subr.mxu0 0.0
    %1306 = vmatpush1.msra.mxu0 0.0
    %1307 = vmatprep.subr.mxu0 0.0
    %1308 = vmatpush1.msra.mxu0 0.0
    %1309 = vmatprep.subr.mxu0 0.0
    %1310 = vmatpush1.msra.mxu0 0.0
    %1311 = vmatprep.subr.mxu0 0.0
    %1312 = vmatpush1.msra.mxu0 0.0
    %1313 = vmatprep.mubr.f32.mxu0 0.0
    %1314 = vmatmul.mubr.f32.gmra.mrb[0].mxu0 %v814
    %v1315 = vpop.f32.mrb[0].mxu0
    %v1316 = vadd.f32 0.0, %v1315
    %v1317 = vpop.f32.mrb[0].mxu0
    %1318 = vdwg.mxu0
    %1319 = vmatprep.subr.mxu0 0.0
    %1320 = vmatpush1.msra.mxu0 %v921
    %1321 = vmatprep.subr.mxu0 0.0
    %1322 = vmatpush1.msra.mxu0 %v922
    %1323 = vmatprep.subr.mxu0 0.0
    %1324 = vmatpush1.msra.mxu0 %v923
    %1325 = vmatprep.subr.mxu0 0.0
    %1326 = vmatpush1.msra.mxu0 %v924
    %1327 = vmatprep.subr.mxu0 0.0
    %1328 = vmatpush1.msra.mxu0 %v925
    %1329 = vmatprep.subr.mxu0 0.0
    %1330 = vmatpush1.msra.mxu0 %v926
    %1331 = vmatprep.subr.mxu0 0.0
    %1332 = vmatpush1.msra.mxu0 %v927
    %1333 = vmatprep.subr.mxu0 0.0
    %1334 = vmatpush1.msra.mxu0 %v928
    %1335 = vmatprep.subr.mxu0 0.0
    %1336 = vmatpush1.msra.mxu0 %v929
    %1337 = vmatprep.subr.mxu0 0.0
    %1338 = vmatpush1.msra.mxu0 %v930
    %1339 = vmatprep.subr.mxu0 0.0
    %1340 = vmatpush1.msra.mxu0 %v931
    %1341 = vmatprep.subr.mxu0 0.0
    %1342 = vmatpush1.msra.mxu0 %v932
    %1343 = vmatprep.subr.mxu0 0.0
    %1344 = vmatpush1.msra.mxu0 %v933
    %1345 = vmatprep.subr.mxu0 0.0
    %1346 = vmatpush1.msra.mxu0 %v934
    %1347 = vmatprep.subr.mxu0 0.0
    %1348 = vmatpush1.msra.mxu0 %v935
    %1349 = vmatprep.subr.mxu0 0.0
    %1350 = vmatpush1.msra.mxu0 %v936
    %1351 = vmatprep.subr.mxu0 0.0
    %1352 = vmatpush1.msra.mxu0 0.0
    %1353 = vmatprep.subr.mxu0 0.0
    %1354 = vmatpush1.msra.mxu0 0.0
    %1355 = vmatprep.subr.mxu0 0.0
    %1356 = vmatpush1.msra.mxu0 0.0
    %1357 = vmatprep.subr.mxu0 0.0
    %1358 = vmatpush1.msra.mxu0 0.0
    %1359 = vmatprep.subr.mxu0 0.0
    %1360 = vmatpush1.msra.mxu0 0.0
    %1361 = vmatprep.subr.mxu0 0.0
    %1362 = vmatpush1.msra.mxu0 0.0
    %1363 = vmatprep.subr.mxu0 0.0
    %1364 = vmatpush1.msra.mxu0 0.0
    %1365 = vmatprep.subr.mxu0 0.0
    %1366 = vmatpush1.msra.mxu0 0.0
    %1367 = vmatprep.subr.mxu0 0.0
    %1368 = vmatpush1.msra.mxu0 0.0
    %1369 = vmatprep.subr.mxu0 0.0
    %1370 = vmatpush1.msra.mxu0 0.0
    %1371 = vmatprep.subr.mxu0 0.0
    %1372 = vmatpush1.msra.mxu0 0.0
    %1373 = vmatprep.subr.mxu0 0.0
    %1374 = vmatpush1.msra.mxu0 0.0
    %1375 = vmatprep.subr.mxu0 0.0
    %1376 = vmatpush1.msra.mxu0 0.0
    %1377 = vmatprep.subr.mxu0 0.0
    %1378 = vmatpush1.msra.mxu0 0.0
    %1379 = vmatprep.subr.mxu0 0.0
    %1380 = vmatpush1.msra.mxu0 0.0
    %1381 = vmatprep.subr.mxu0 0.0
    %1382 = vmatpush1.msra.mxu0 0.0
    %1383 = vmatprep.mubr.f32.mxu0 0.0
    %1384 = vmatmul.mubr.f32.gmra.mrb[0].mxu0 %v828
    %v1385 = vpop.f32.mrb[0].mxu0
    %v1386 = vadd.f32 0.0, %v1385
    %v1387 = vpop.f32.mrb[0].mxu0
    %1388 = vdwg.mxu0
    %1389 = vmatprep.subr.mxu0 0.0
    %1390 = vmatpush1.msra.mxu0 %v937
    %1391 = vmatprep.subr.mxu0 0.0
    %1392 = vmatpush1.msra.mxu0 %v938
    %1393 = vmatprep.subr.mxu0 0.0
    %1394 = vmatpush1.msra.mxu0 %v939
    %1395 = vmatprep.subr.mxu0 0.0
    %1396 = vmatpush1.msra.mxu0 %v940
    %1397 = vmatprep.subr.mxu0 0.0
    %1398 = vmatpush1.msra.mxu0 %v941
    %1399 = vmatprep.subr.mxu0 0.0
    %1400 = vmatpush1.msra.mxu0 %v942
    %1401 = vmatprep.subr.mxu0 0.0
    %1402 = vmatpush1.msra.mxu0 %v943
    %1403 = vmatprep.subr.mxu0 0.0
    %1404 = vmatpush1.msra.mxu0 %v944
    %1405 = vmatprep.subr.mxu0 0.0
    %1406 = vmatpush1.msra.mxu0 %v945
    %1407 = vmatprep.subr.mxu0 0.0
    %1408 = vmatpush1.msra.mxu0 %v946
    %1409 = vmatprep.subr.mxu0 0.0
    %1410 = vmatpush1.msra.mxu0 %v947
    %1411 = vmatprep.subr.mxu0 0.0
    %1412 = vmatpush1.msra.mxu0 %v948
    %1413 = vmatprep.subr.mxu0 0.0
    %1414 = vmatpush1.msra.mxu0 %v949
    %1415 = vmatprep.subr.mxu0 0.0
    %1416 = vmatpush1.msra.mxu0 %v950
    %1417 = vmatprep.subr.mxu0 0.0
    %1418 = vmatpush1.msra.mxu0 %v951
    %1419 = vmatprep.subr.mxu0 0.0
    %1420 = vmatpush1.msra.mxu0 %v952
    %1421 = vmatprep.subr.mxu0 0.0
    %1422 = vmatpush1.msra.mxu0 0.0
    %1423 = vmatprep.subr.mxu0 0.0
    %1424 = vmatpush1.msra.mxu0 0.0
    %1425 = vmatprep.subr.mxu0 0.0
    %1426 = vmatpush1.msra.mxu0 0.0
    %1427 = vmatprep.subr.mxu0 0.0
    %1428 = vmatpush1.msra.mxu0 0.0
    %1429 = vmatprep.subr.mxu0 0.0
    %1430 = vmatpush1.msra.mxu0 0.0
    %1431 = vmatprep.subr.mxu0 0.0
    %1432 = vmatpush1.msra.mxu0 0.0
    %1433 = vmatprep.subr.mxu0 0.0
    %1434 = vmatpush1.msra.mxu0 0.0
    %1435 = vmatprep.subr.mxu0 0.0
    %1436 = vmatpush1.msra.mxu0 0.0
    %1437 = vmatprep.subr.mxu0 0.0
    %1438 = vmatpush1.msra.mxu0 0.0
    %1439 = vmatprep.subr.mxu0 0.0
    %1440 = vmatpush1.msra.mxu0 0.0
    %1441 = vmatprep.subr.mxu0 0.0
    %1442 = vmatpush1.msra.mxu0 0.0
    %1443 = vmatprep.subr.mxu0 0.0
    %1444 = vmatpush1.msra.mxu0 0.0
    %1445 = vmatprep.subr.mxu0 0.0
    %1446 = vmatpush1.msra.mxu0 0.0
    %1447 = vmatprep.subr.mxu0 0.0
    %1448 = vmatpush1.msra.mxu0 0.0
    %1449 = vmatprep.subr.mxu0 0.0
    %1450 = vmatpush1.msra.mxu0 0.0
    %1451 = vmatprep.subr.mxu0 0.0
    %1452 = vmatpush1.msra.mxu0 0.0
    %1453 = vmatprep.mubr.f32.mxu0 0.0
    %1454 = vmatmul.mubr.f32.gmra.mrb[0].mxu0 %v830
    %v1455 = vpop.f32.mrb[0].mxu0
    %v1456 = vadd.f32 0.0, %v1455
    %v1457 = vpop.f32.mrb[0].mxu0
    %1458 = vdwg.mxu0
    %1459 = vmatprep.subr.mxu0 0.0
    %1460 = vmatpush1.msra.mxu0 %v953
    %1461 = vmatprep.subr.mxu0 0.0
    %1462 = vmatpush1.msra.mxu0 %v954
    %1463 = vmatprep.subr.mxu0 0.0
    %1464 = vmatpush1.msra.mxu0 %v955
    %1465 = vmatprep.subr.mxu0 0.0
    %1466 = vmatpush1.msra.mxu0 %v956
    %1467 = vmatprep.subr.mxu0 0.0
    %1468 = vmatpush1.msra.mxu0 %v957
    %1469 = vmatprep.subr.mxu0 0.0
    %1470 = vmatpush1.msra.mxu0 %v958
    %1471 = vmatprep.subr.mxu0 0.0
    %1472 = vmatpush1.msra.mxu0 %v959
    %1473 = vmatprep.subr.mxu0 0.0
    %1474 = vmatpush1.msra.mxu0 %v960
    %1475 = vmatprep.subr.mxu0 0.0
    %1476 = vmatpush1.msra.mxu0 %v961
    %1477 = vmatprep.subr.mxu0 0.0
    %1478 = vmatpush1.msra.mxu0 %v962
    %1479 = vmatprep.subr.mxu0 0.0
    %1480 = vmatpush1.msra.mxu0 %v963
    %1481 = vmatprep.subr.mxu0 0.0
    %1482 = vmatpush1.msra.mxu0 %v964
    %1483 = vmatprep.subr.mxu0 0.0
    %1484 = vmatpush1.msra.mxu0 %v965
    %1485 = vmatprep.subr.mxu0 0.0
    %1486 = vmatpush1.msra.mxu0 %v966
    %1487 = vmatprep.subr.mxu0 0.0
    %1488 = vmatpush1.msra.mxu0 %v967
    %1489 = vmatprep.subr.mxu0 0.0
    %1490 = vmatpush1.msra.mxu0 %v968
    %1491 = vmatprep.subr.mxu0 0.0
    %1492 = vmatpush1.msra.mxu0 0.0
    %1493 = vmatprep.subr.mxu0 0.0
    %1494 = vmatpush1.msra.mxu0 0.0
    %1495 = vmatprep.subr.mxu0 0.0
    %1496 = vmatpush1.msra.mxu0 0.0
    %1497 = vmatprep.subr.mxu0 0.0
    %1498 = vmatpush1.msra.mxu0 0.0
    %1499 = vmatprep.subr.mxu0 0.0
    %1500 = vmatpush1.msra.mxu0 0.0
    %1501 = vmatprep.subr.mxu0 0.0
    %1502 = vmatpush1.msra.mxu0 0.0
    %1503 = vmatprep.subr.mxu0 0.0
    %1504 = vmatpush1.msra.mxu0 0.0
    %1505 = vmatprep.subr.mxu0 0.0
    %1506 = vmatpush1.msra.mxu0 0.0
    %1507 = vmatprep.subr.mxu0 0.0
    %1508 = vmatpush1.msra.mxu0 0.0
    %1509 = vmatprep.subr.mxu0 0.0
    %1510 = vmatpush1.msra.mxu0 0.0
    %1511 = vmatprep.subr.mxu0 0.0
    %1512 = vmatpush1.msra.mxu0 0.0
    %1513 = vmatprep.subr.mxu0 0.0
    %1514 = vmatpush1.msra.mxu0 0.0
    %1515 = vmatprep.subr.mxu0 0.0
    %1516 = vmatpush1.msra.mxu0 0.0
    %1517 = vmatprep.subr.mxu0 0.0
    %1518 = vmatpush1.msra.mxu0 0.0
    %1519 = vmatprep.subr.mxu0 0.0
    %1520 = vmatpush1.msra.mxu0 0.0
    %1521 = vmatprep.subr.mxu0 0.0
    %1522 = vmatpush1.msra.mxu0 0.0
    %1523 = vmatprep.mubr.f32.mxu0 0.0
    %1524 = vmatmul.mubr.f32.gmra.mrb[0].mxu0 %v832
    %v1525 = vpop.f32.mrb[0].mxu0
    %v1526 = vadd.f32 0.0, %v1525
    %v1527 = vpop.f32.mrb[0].mxu0
    %1528 = vdwg.mxu0
    %vm1529 = vcmask 57344
    %v1530 = vsel %vm1529, %v1036, -inf
    %1531 = vmax.xlane.f32.xlu0 %v1530
    %v1532 = vpop.xlane.xlu0 %1531
    %v1533 = vsel %vm1529, %v1106, -inf
    %1534 = vmax.xlane.f32.xlu0 %v1533
    %v1535 = vpop.xlane.xlu0 %1534
    %v1536 = vsel %vm1529, %v1176, -inf
    %1537 = vmax.xlane.f32.xlu0 %v1536
    %v1538 = vpop.xlane.xlu0 %1537
    %v1539 = vsel %vm1529, %v1246, -inf
    %1540 = vmax.xlane.f32.xlu0 %v1539
    %v1541 = vpop.xlane.xlu0 %1540
    %v1542 = vsel %vm1529, %v1316, -inf
    %1543 = vmax.xlane.f32.xlu0 %v1542
    %v1544 = vpop.xlane.xlu0 %1543
    %v1545 = vsel %vm1529, %v1386, -inf
    %1546 = vmax.xlane.f32.xlu0 %v1545
    %v1547 = vpop.xlane.xlu0 %1546
    %v1548 = vsel %vm1529, %v1456, -inf
    %1549 = vmax.xlane.f32.xlu0 %v1548
    %v1550 = vpop.xlane.xlu0 %1549
    %v1551 = vsel %vm1529, %v1526, -inf
    %1552 = vmax.xlane.f32.xlu0 %v1551
    %v1553 = vpop.xlane.xlu0 %1552
    %v1554 = vsub.f32 %v1036, %v1532
    %v1555 = vsub.f32 %v1106, %v1535
    %v1556 = vsub.f32 %v1176, %v1538
    %v1557 = vsub.f32 %v1246, %v1541
    %v1558 = vsub.f32 %v1316, %v1544
    %v1559 = vsub.f32 %v1386, %v1547
    %v1560 = vsub.f32 %v1456, %v1550
    %v1561 = vsub.f32 %v1526, %v1553
    %v1562 = vmul.f32 %v1554, 1.442695
    %v1563 = vpow.pop %v1562
    %v1564 = vmul.f32 %v1555, 1.442695
    %v1565 = vpow.pop %v1564
    %v1566 = vmul.f32 %v1556, 1.442695
    %v1567 = vpow.pop %v1566
    %v1568 = vmul.f32 %v1557, 1.442695
    %v1569 = vpow.pop %v1568
    %v1570 = vmul.f32 %v1558, 1.442695
    %v1571 = vpow.pop %v1570
    %v1572 = vmul.f32 %v1559, 1.442695
    %v1573 = vpow.pop %v1572
    %v1574 = vmul.f32 %v1560, 1.442695
    %v1575 = vpow.pop %v1574
    %v1576 = vmul.f32 %v1561, 1.442695
    %v1577 = vpow.pop %v1576
    %v1578 = vsel %vm1529, %v1563, 0.0
    %1579 = vadd.xlane.f32.xlu0 %v1578
    %v1580 = vpop.xlane.xlu0 %1579
    %v1581 = vsel %vm1529, %v1565, 0.0
    %1582 = vadd.xlane.f32.xlu0 %v1581
    %v1583 = vpop.xlane.xlu0 %1582
    %v1584 = vsel %vm1529, %v1567, 0.0
    %1585 = vadd.xlane.f32.xlu0 %v1584
    %v1586 = vpop.xlane.xlu0 %1585
    %v1587 = vsel %vm1529, %v1569, 0.0
    %1588 = vadd.xlane.f32.xlu0 %v1587
    %v1589 = vpop.xlane.xlu0 %1588
    %v1590 = vsel %vm1529, %v1571, 0.0
    %1591 = vadd.xlane.f32.xlu0 %v1590
    %v1592 = vpop.xlane.xlu0 %1591
    %v1593 = vsel %vm1529, %v1573, 0.0
    %1594 = vadd.xlane.f32.xlu0 %v1593
    %v1595 = vpop.xlane.xlu0 %1594
    %v1596 = vsel %vm1529, %v1575, 0.0
    %1597 = vadd.xlane.f32.xlu0 %v1596
    %v1598 = vpop.xlane.xlu0 %1597
    %v1599 = vsel %vm1529, %v1577, 0.0
    %1600 = vadd.xlane.f32.xlu0 %v1599
    %v1601 = vpop.xlane.xlu0 %1600
    %v1602 = vrcp.pop %v1580
    %v1603 = vrcp.pop %v1583
    %v1604 = vrcp.pop %v1586
    %v1605 = vrcp.pop %v1589
    %v1606 = vrcp.pop %v1592
    %v1607 = vrcp.pop %v1595
    %v1608 = vrcp.pop %v1598
    %v1609 = vrcp.pop %v1601
    %v1610 = vmul.f32 %v1563, %v1602
    %v1611 = vmul.f32 %v1565, %v1603
    %v1612 = vmul.f32 %v1567, %v1604
    %v1613 = vmul.f32 %v1569, %v1605
    %v1614 = vmul.f32 %v1571, %v1606
    %v1615 = vmul.f32 %v1573, %v1607
    %v1616 = vmul.f32 %v1575, %v1608
    %v1617 = vmul.f32 %v1577, %v1609
    %v1618 = vld [vmem:[%s2] sm:$0xff]
    %v1619 = vld [vmem:[%s2 + $0x8] sm:$0xff]
    %v1620 = vld [vmem:[%s2 + $0x10] sm:$0xff]
    %v1621 = vld [vmem:[%s2 + $0x18] sm:$0xff]
    %v1622 = vld [vmem:[%s2 + $0x20] sm:$0xff]
    %v1623 = vld [vmem:[%s2 + $0x28] sm:$0xff]
    %v1624 = vld [vmem:[%s2 + $0x30] sm:$0xff]
    %v1625 = vld [vmem:[%s2 + $0x38] sm:$0xff]
    %vm1626 = vcmask 64512
    %v1628 = vsel %vm1626, %v1610, 0
    %1630 = vmatprep.subr.mxu0 0.0
    %1631 = vmatpush1.msra.mxu0 %v1618
    %1632 = vmatprep.subr.mxu0 0.0
    %1633 = vmatpush1.msra.mxu0 0.0
    %1634 = vmatprep.subr.mxu0 0.0
    %1635 = vmatpush1.msra.mxu0 0.0
    %1636 = vmatprep.subr.mxu0 0.0
    %1637 = vmatpush1.msra.mxu0 0.0
    %1638 = vmatprep.subr.mxu0 0.0
    %1639 = vmatpush1.msra.mxu0 0.0
    %1640 = vmatprep.subr.mxu0 0.0
    %1641 = vmatpush1.msra.mxu0 0.0
    %1642 = vmatprep.subr.mxu0 0.0
    %1643 = vmatpush1.msra.mxu0 0.0
    %1644 = vmatprep.subr.mxu0 0.0
    %1645 = vmatpush1.msra.mxu0 0.0
    %1646 = vmatprep.subr.mxu0 0.0
    %1647 = vmatpush1.msra.mxu0 0.0
    %1648 = vmatprep.subr.mxu0 0.0
    %1649 = vmatpush1.msra.mxu0 0.0
    %1650 = vmatprep.subr.mxu0 0.0
    %1651 = vmatpush1.msra.mxu0 0.0
    %1652 = vmatprep.subr.mxu0 0.0
    %1653 = vmatpush1.msra.mxu0 0.0
    %1654 = vmatprep.subr.mxu0 0.0
    %1655 = vmatpush1.msra.mxu0 0.0
    %1656 = vmatprep.subr.mxu0 0.0
    %1657 = vmatpush1.msra.mxu0 0.0
    %1658 = vmatprep.subr.mxu0 0.0
    %1659 = vmatpush1.msra.mxu0 0.0
    %1660 = vmatprep.subr.mxu0 0.0
    %1661 = vmatpush1.msra.mxu0 0.0
    %1662 = vmatprep.subr.mxu0 0.0
    %1663 = vmatpush1.msra.mxu0 0.0
    %1664 = vmatprep.subr.mxu0 0.0
    %1665 = vmatpush1.msra.mxu0 0.0
    %1666 = vmatprep.subr.mxu0 0.0
    %1667 = vmatpush1.msra.mxu0 0.0
    %1668 = vmatprep.subr.mxu0 0.0
    %1669 = vmatpush1.msra.mxu0 0.0
    %1670 = vmatprep.subr.mxu0 0.0
    %1671 = vmatpush1.msra.mxu0 0.0
    %1672 = vmatprep.subr.mxu0 0.0
    %1673 = vmatpush1.msra.mxu0 0.0
    %1674 = vmatprep.subr.mxu0 0.0
    %1675 = vmatpush1.msra.mxu0 0.0
    %1676 = vmatprep.subr.mxu0 0.0
    %1677 = vmatpush1.msra.mxu0 0.0
    %1678 = vmatprep.subr.mxu0 0.0
    %1679 = vmatpush1.msra.mxu0 0.0
    %1680 = vmatprep.subr.mxu0 0.0
    %1681 = vmatpush1.msra.mxu0 0.0
    %1682 = vmatprep.subr.mxu0 0.0
    %1683 = vmatpush1.msra.mxu0 0.0
    %1684 = vmatprep.subr.mxu0 0.0
    %1685 = vmatpush1.msra.mxu0 0.0
    %1686 = vmatprep.subr.mxu0 0.0
    %1687 = vmatpush1.msra.mxu0 0.0
    %1688 = vmatprep.subr.mxu0 0.0
    %1689 = vmatpush1.msra.mxu0 0.0
    %1690 = vmatprep.subr.mxu0 0.0
    %1691 = vmatpush1.msra.mxu0 0.0
    %1692 = vmatprep.subr.mxu0 0.0
    %1693 = vmatpush1.msra.mxu0 0.0
    %1694 = vmatprep.mubr.f32.mxu0 0.0
    %1695 = vmatmul.mubr.f32.gmra.mrb[0].mxu0 %v1628
    %v1696 = vpop.f32.mrb[0].mxu0
    %v1697 = vadd.f32 0.0, %v1696
    %v1698 = vpop.f32.mrb[0].mxu0
    %1699 = vdwg.mxu0
    %v1701 = vsel %vm1626, %v1611, 0
    %1703 = vmatprep.subr.mxu0 0.0
    %1704 = vmatpush1.msra.mxu0 %v1619
    %1705 = vmatprep.subr.mxu0 0.0
    %1706 = vmatpush1.msra.mxu0 0.0
    %1707 = vmatprep.subr.mxu0 0.0
    %1708 = vmatpush1.msra.mxu0 0.0
    %1709 = vmatprep.subr.mxu0 0.0
    %1710 = vmatpush1.msra.mxu0 0.0
    %1711 = vmatprep.subr.mxu0 0.0
    %1712 = vmatpush1.msra.mxu0 0.0
    %1713 = vmatprep.subr.mxu0 0.0
    %1714 = vmatpush1.msra.mxu0 0.0
    %1715 = vmatprep.subr.mxu0 0.0
    %1716 = vmatpush1.msra.mxu0 0.0
    %1717 = vmatprep.subr.mxu0 0.0
    %1718 = vmatpush1.msra.mxu0 0.0
    %1719 = vmatprep.subr.mxu0 0.0
    %1720 = vmatpush1.msra.mxu0 0.0
    %1721 = vmatprep.subr.mxu0 0.0
    %1722 = vmatpush1.msra.mxu0 0.0
    %1723 = vmatprep.subr.mxu0 0.0
    %1724 = vmatpush1.msra.mxu0 0.0
    %1725 = vmatprep.subr.mxu0 0.0
    %1726 = vmatpush1.msra.mxu0 0.0
    %1727 = vmatprep.subr.mxu0 0.0
    %1728 = vmatpush1.msra.mxu0 0.0
    %1729 = vmatprep.subr.mxu0 0.0
    %1730 = vmatpush1.msra.mxu0 0.0
    %1731 = vmatprep.subr.mxu0 0.0
    %1732 = vmatpush1.msra.mxu0 0.0
    %1733 = vmatprep.subr.mxu0 0.0
    %1734 = vmatpush1.msra.mxu0 0.0
    %1735 = vmatprep.subr.mxu0 0.0
    %1736 = vmatpush1.msra.mxu0 0.0
    %1737 = vmatprep.subr.mxu0 0.0
    %1738 = vmatpush1.msra.mxu0 0.0
    %1739 = vmatprep.subr.mxu0 0.0
    %1740 = vmatpush1.msra.mxu0 0.0
    %1741 = vmatprep.subr.mxu0 0.0
    %1742 = vmatpush1.msra.mxu0 0.0
    %1743 = vmatprep.subr.mxu0 0.0
    %1744 = vmatpush1.msra.mxu0 0.0
    %1745 = vmatprep.subr.mxu0 0.0
    %1746 = vmatpush1.msra.mxu0 0.0
    %1747 = vmatprep.subr.mxu0 0.0
    %1748 = vmatpush1.msra.mxu0 0.0
    %1749 = vmatprep.subr.mxu0 0.0
    %1750 = vmatpush1.msra.mxu0 0.0
    %1751 = vmatprep.subr.mxu0 0.0
    %1752 = vmatpush1.msra.mxu0 0.0
    %1753 = vmatprep.subr.mxu0 0.0
    %1754 = vmatpush1.msra.mxu0 0.0
    %1755 = vmatprep.subr.mxu0 0.0
    %1756 = vmatpush1.msra.mxu0 0.0
    %1757 = vmatprep.subr.mxu0 0.0
    %1758 = vmatpush1.msra.mxu0 0.0
    %1759 = vmatprep.subr.mxu0 0.0
    %1760 = vmatpush1.msra.mxu0 0.0
    %1761 = vmatprep.subr.mxu0 0.0
    %1762 = vmatpush1.msra.mxu0 0.0
    %1763 = vmatprep.subr.mxu0 0.0
    %1764 = vmatpush1.msra.mxu0 0.0
    %1765 = vmatprep.subr.mxu0 0.0
    %1766 = vmatpush1.msra.mxu0 0.0
    %1767 = vmatprep.mubr.f32.mxu0 0.0
    %1768 = vmatmul.mubr.f32.gmra.mrb[0].mxu0 %v1701
    %v1769 = vpop.f32.mrb[0].mxu0
    %v1770 = vadd.f32 0.0, %v1769
    %v1771 = vpop.f32.mrb[0].mxu0
    %1772 = vdwg.mxu0
    %v1774 = vsel %vm1626, %v1612, 0
    %1776 = vmatprep.subr.mxu0 0.0
    %1777 = vmatpush1.msra.mxu0 %v1620
    %1778 = vmatprep.subr.mxu0 0.0
    %1779 = vmatpush1.msra.mxu0 0.0
    %1780 = vmatprep.subr.mxu0 0.0
    %1781 = vmatpush1.msra.mxu0 0.0
    %1782 = vmatprep.subr.mxu0 0.0
    %1783 = vmatpush1.msra.mxu0 0.0
    %1784 = vmatprep.subr.mxu0 0.0
    %1785 = vmatpush1.msra.mxu0 0.0
    %1786 = vmatprep.subr.mxu0 0.0
    %1787 = vmatpush1.msra.mxu0 0.0
    %1788 = vmatprep.subr.mxu0 0.0
    %1789 = vmatpush1.msra.mxu0 0.0
    %1790 = vmatprep.subr.mxu0 0.0
    %1791 = vmatpush1.msra.mxu0 0.0
    %1792 = vmatprep.subr.mxu0 0.0
    %1793 = vmatpush1.msra.mxu0 0.0
    %1794 = vmatprep.subr.mxu0 0.0
    %1795 = vmatpush1.msra.mxu0 0.0
    %1796 = vmatprep.subr.mxu0 0.0
    %1797 = vmatpush1.msra.mxu0 0.0
    %1798 = vmatprep.subr.mxu0 0.0
    %1799 = vmatpush1.msra.mxu0 0.0
    %1800 = vmatprep.subr.mxu0 0.0
    %1801 = vmatpush1.msra.mxu0 0.0
    %1802 = vmatprep.subr.mxu0 0.0
    %1803 = vmatpush1.msra.mxu0 0.0
    %1804 = vmatprep.subr.mxu0 0.0
    %1805 = vmatpush1.msra.mxu0 0.0
    %1806 = vmatprep.subr.mxu0 0.0
    %1807 = vmatpush1.msra.mxu0 0.0
    %1808 = vmatprep.subr.mxu0 0.0
    %1809 = vmatpush1.msra.mxu0 0.0
    %1810 = vmatprep.subr.mxu0 0.0
    %1811 = vmatpush1.msra.mxu0 0.0
    %1812 = vmatprep.subr.mxu0 0.0
    %1813 = vmatpush1.msra.mxu0 0.0
    %1814 = vmatprep.subr.mxu0 0.0
    %1815 = vmatpush1.msra.mxu0 0.0
    %1816 = vmatprep.subr.mxu0 0.0
    %1817 = vmatpush1.msra.mxu0 0.0
    %1818 = vmatprep.subr.mxu0 0.0
    %1819 = vmatpush1.msra.mxu0 0.0
    %1820 = vmatprep.subr.mxu0 0.0
    %1821 = vmatpush1.msra.mxu0 0.0
    %1822 = vmatprep.subr.mxu0 0.0
    %1823 = vmatpush1.msra.mxu0 0.0
    %1824 = vmatprep.subr.mxu0 0.0
    %1825 = vmatpush1.msra.mxu0 0.0
    %1826 = vmatprep.subr.mxu0 0.0
    %1827 = vmatpush1.msra.mxu0 0.0
    %1828 = vmatprep.subr.mxu0 0.0
    %1829 = vmatpush1.msra.mxu0 0.0
    %1830 = vmatprep.subr.mxu0 0.0
    %1831 = vmatpush1.msra.mxu0 0.0
    %1832 = vmatprep.subr.mxu0 0.0
    %1833 = vmatpush1.msra.mxu0 0.0
    %1834 = vmatprep.subr.mxu0 0.0
    %1835 = vmatpush1.msra.mxu0 0.0
    %1836 = vmatprep.subr.mxu0 0.0
    %1837 = vmatpush1.msra.mxu0 0.0
    %1838 = vmatprep.subr.mxu0 0.0
    %1839 = vmatpush1.msra.mxu0 0.0
    %1840 = vmatprep.mubr.f32.mxu0 0.0
    %1841 = vmatmul.mubr.f32.gmra.mrb[0].mxu0 %v1774
    %v1842 = vpop.f32.mrb[0].mxu0
    %v1843 = vadd.f32 0.0, %v1842
    %v1844 = vpop.f32.mrb[0].mxu0
    %1845 = vdwg.mxu0
    %v1847 = vsel %vm1626, %v1613, 0
    %1849 = vmatprep.subr.mxu0 0.0
    %1850 = vmatpush1.msra.mxu0 %v1621
    %1851 = vmatprep.subr.mxu0 0.0
    %1852 = vmatpush1.msra.mxu0 0.0
    %1853 = vmatprep.subr.mxu0 0.0
    %1854 = vmatpush1.msra.mxu0 0.0
    %1855 = vmatprep.subr.mxu0 0.0
    %1856 = vmatpush1.msra.mxu0 0.0
    %1857 = vmatprep.subr.mxu0 0.0
    %1858 = vmatpush1.msra.mxu0 0.0
    %1859 = vmatprep.subr.mxu0 0.0
    %1860 = vmatpush1.msra.mxu0 0.0
    %1861 = vmatprep.subr.mxu0 0.0
    %1862 = vmatpush1.msra.mxu0 0.0
    %1863 = vmatprep.subr.mxu0 0.0
    %1864 = vmatpush1.msra.mxu0 0.0
    %1865 = vmatprep.subr.mxu0 0.0
    %1866 = vmatpush1.msra.mxu0 0.0
    %1867 = vmatprep.subr.mxu0 0.0
    %1868 = vmatpush1.msra.mxu0 0.0
    %1869 = vmatprep.subr.mxu0 0.0
    %1870 = vmatpush1.msra.mxu0 0.0
    %1871 = vmatprep.subr.mxu0 0.0
    %1872 = vmatpush1.msra.mxu0 0.0
    %1873 = vmatprep.subr.mxu0 0.0
    %1874 = vmatpush1.msra.mxu0 0.0
    %1875 = vmatprep.subr.mxu0 0.0
    %1876 = vmatpush1.msra.mxu0 0.0
    %1877 = vmatprep.subr.mxu0 0.0
    %1878 = vmatpush1.msra.mxu0 0.0
    %1879 = vmatprep.subr.mxu0 0.0
    %1880 = vmatpush1.msra.mxu0 0.0
    %1881 = vmatprep.subr.mxu0 0.0
    %1882 = vmatpush1.msra.mxu0 0.0
    %1883 = vmatprep.subr.mxu0 0.0
    %1884 = vmatpush1.msra.mxu0 0.0
    %1885 = vmatprep.subr.mxu0 0.0
    %1886 = vmatpush1.msra.mxu0 0.0
    %1887 = vmatprep.subr.mxu0 0.0
    %1888 = vmatpush1.msra.mxu0 0.0
    %1889 = vmatprep.subr.mxu0 0.0
    %1890 = vmatpush1.msra.mxu0 0.0
    %1891 = vmatprep.subr.mxu0 0.0
    %1892 = vmatpush1.msra.mxu0 0.0
    %1893 = vmatprep.subr.mxu0 0.0
    %1894 = vmatpush1.msra.mxu0 0.0
    %1895 = vmatprep.subr.mxu0 0.0
    %1896 = vmatpush1.msra.mxu0 0.0
    %1897 = vmatprep.subr.mxu0 0.0
    %1898 = vmatpush1.msra.mxu0 0.0
    %1899 = vmatprep.subr.mxu0 0.0
    %1900 = vmatpush1.msra.mxu0 0.0
    %1901 = vmatprep.subr.mxu0 0.0
    %1902 = vmatpush1.msra.mxu0 0.0
    %1903 = vmatprep.subr.mxu0 0.0
    %1904 = vmatpush1.msra.mxu0 0.0
    %1905 = vmatprep.subr.mxu0 0.0
    %1906 = vmatpush1.msra.mxu0 0.0
    %1907 = vmatprep.subr.mxu0 0.0
    %1908 = vmatpush1.msra.mxu0 0.0
    %1909 = vmatprep.subr.mxu0 0.0
    %1910 = vmatpush1.msra.mxu0 0.0
    %1911 = vmatprep.subr.mxu0 0.0
    %1912 = vmatpush1.msra.mxu0 0.0
    %1913 = vmatprep.mubr.f32.mxu0 0.0
    %1914 = vmatmul.mubr.f32.gmra.mrb[0].mxu0 %v1847
    %v1915 = vpop.f32.mrb[0].mxu0
    %v1916 = vadd.f32 0.0, %v1915
    %v1917 = vpop.f32.mrb[0].mxu0
    %1918 = vdwg.mxu0
    %v1920 = vsel %vm1626, %v1614, 0
    %1922 = vmatprep.subr.mxu0 0.0
    %1923 = vmatpush1.msra.mxu0 %v1622
    %1924 = vmatprep.subr.mxu0 0.0
    %1925 = vmatpush1.msra.mxu0 0.0
    %1926 = vmatprep.subr.mxu0 0.0
    %1927 = vmatpush1.msra.mxu0 0.0
    %1928 = vmatprep.subr.mxu0 0.0
    %1929 = vmatpush1.msra.mxu0 0.0
    %1930 = vmatprep.subr.mxu0 0.0
    %1931 = vmatpush1.msra.mxu0 0.0
    %1932 = vmatprep.subr.mxu0 0.0
    %1933 = vmatpush1.msra.mxu0 0.0
    %1934 = vmatprep.subr.mxu0 0.0
    %1935 = vmatpush1.msra.mxu0 0.0
    %1936 = vmatprep.subr.mxu0 0.0
    %1937 = vmatpush1.msra.mxu0 0.0
    %1938 = vmatprep.subr.mxu0 0.0
    %1939 = vmatpush1.msra.mxu0 0.0
    %1940 = vmatprep.subr.mxu0 0.0
    %1941 = vmatpush1.msra.mxu0 0.0
    %1942 = vmatprep.subr.mxu0 0.0
    %1943 = vmatpush1.msra.mxu0 0.0
    %1944 = vmatprep.subr.mxu0 0.0
    %1945 = vmatpush1.msra.mxu0 0.0
    %1946 = vmatprep.subr.mxu0 0.0
    %1947 = vmatpush1.msra.mxu0 0.0
    %1948 = vmatprep.subr.mxu0 0.0
    %1949 = vmatpush1.msra.mxu0 0.0
    %1950 = vmatprep.subr.mxu0 0.0
    %1951 = vmatpush1.msra.mxu0 0.0
    %1952 = vmatprep.subr.mxu0 0.0
    %1953 = vmatpush1.msra.mxu0 0.0
    %1954 = vmatprep.subr.mxu0 0.0
    %1955 = vmatpush1.msra.mxu0 0.0
    %1956 = vmatprep.subr.mxu0 0.0
    %1957 = vmatpush1.msra.mxu0 0.0
    %1958 = vmatprep.subr.mxu0 0.0
    %1959 = vmatpush1.msra.mxu0 0.0
    %1960 = vmatprep.subr.mxu0 0.0
    %1961 = vmatpush1.msra.mxu0 0.0
    %1962 = vmatprep.subr.mxu0 0.0
    %1963 = vmatpush1.msra.mxu0 0.0
    %1964 = vmatprep.subr.mxu0 0.0
    %1965 = vmatpush1.msra.mxu0 0.0
    %1966 = vmatprep.subr.mxu0 0.0
    %1967 = vmatpush1.msra.mxu0 0.0
    %1968 = vmatprep.subr.mxu0 0.0
    %1969 = vmatpush1.msra.mxu0 0.0
    %1970 = vmatprep.subr.mxu0 0.0
    %1971 = vmatpush1.msra.mxu0 0.0
    %1972 = vmatprep.subr.mxu0 0.0
    %1973 = vmatpush1.msra.mxu0 0.0
    %1974 = vmatprep.subr.mxu0 0.0
    %1975 = vmatpush1.msra.mxu0 0.0
    %1976 = vmatprep.subr.mxu0 0.0
    %1977 = vmatpush1.msra.mxu0 0.0
    %1978 = vmatprep.subr.mxu0 0.0
    %1979 = vmatpush1.msra.mxu0 0.0
    %1980 = vmatprep.subr.mxu0 0.0
    %1981 = vmatpush1.msra.mxu0 0.0
    %1982 = vmatprep.subr.mxu0 0.0
    %1983 = vmatpush1.msra.mxu0 0.0
    %1984 = vmatprep.subr.mxu0 0.0
    %1985 = vmatpush1.msra.mxu0 0.0
    %1986 = vmatprep.mubr.f32.mxu0 0.0
    %1987 = vmatmul.mubr.f32.gmra.mrb[0].mxu0 %v1920
    %v1988 = vpop.f32.mrb[0].mxu0
    %v1989 = vadd.f32 0.0, %v1988
    %v1990 = vpop.f32.mrb[0].mxu0
    %1991 = vdwg.mxu0
    %v1993 = vsel %vm1626, %v1615, 0
    %1995 = vmatprep.subr.mxu0 0.0
    %1996 = vmatpush1.msra.mxu0 %v1623
    %1997 = vmatprep.subr.mxu0 0.0
    %1998 = vmatpush1.msra.mxu0 0.0
    %1999 = vmatprep.subr.mxu0 0.0
    %2000 = vmatpush1.msra.mxu0 0.0
    %2001 = vmatprep.subr.mxu0 0.0
    %2002 = vmatpush1.msra.mxu0 0.0
    %2003 = vmatprep.subr.mxu0 0.0
    %2004 = vmatpush1.msra.mxu0 0.0
    %2005 = vmatprep.subr.mxu0 0.0
    %2006 = vmatpush1.msra.mxu0 0.0
    %2007 = vmatprep.subr.mxu0 0.0
    %2008 = vmatpush1.msra.mxu0 0.0
    %2009 = vmatprep.subr.mxu0 0.0
    %2010 = vmatpush1.msra.mxu0 0.0
    %2011 = vmatprep.subr.mxu0 0.0
    %2012 = vmatpush1.msra.mxu0 0.0
    %2013 = vmatprep.subr.mxu0 0.0
    %2014 = vmatpush1.msra.mxu0 0.0
    %2015 = vmatprep.subr.mxu0 0.0
    %2016 = vmatpush1.msra.mxu0 0.0
    %2017 = vmatprep.subr.mxu0 0.0
    %2018 = vmatpush1.msra.mxu0 0.0
    %2019 = vmatprep.subr.mxu0 0.0
    %2020 = vmatpush1.msra.mxu0 0.0
    %2021 = vmatprep.subr.mxu0 0.0
    %2022 = vmatpush1.msra.mxu0 0.0
    %2023 = vmatprep.subr.mxu0 0.0
    %2024 = vmatpush1.msra.mxu0 0.0
    %2025 = vmatprep.subr.mxu0 0.0
    %2026 = vmatpush1.msra.mxu0 0.0
    %2027 = vmatprep.subr.mxu0 0.0
    %2028 = vmatpush1.msra.mxu0 0.0
    %2029 = vmatprep.subr.mxu0 0.0
    %2030 = vmatpush1.msra.mxu0 0.0
    %2031 = vmatprep.subr.mxu0 0.0
    %2032 = vmatpush1.msra.mxu0 0.0
    %2033 = vmatprep.subr.mxu0 0.0
    %2034 = vmatpush1.msra.mxu0 0.0
    %2035 = vmatprep.subr.mxu0 0.0
    %2036 = vmatpush1.msra.mxu0 0.0
    %2037 = vmatprep.subr.mxu0 0.0
    %2038 = vmatpush1.msra.mxu0 0.0
    %2039 = vmatprep.subr.mxu0 0.0
    %2040 = vmatpush1.msra.mxu0 0.0
    %2041 = vmatprep.subr.mxu0 0.0
    %2042 = vmatpush1.msra.mxu0 0.0
    %2043 = vmatprep.subr.mxu0 0.0
    %2044 = vmatpush1.msra.mxu0 0.0
    %2045 = vmatprep.subr.mxu0 0.0
    %2046 = vmatpush1.msra.mxu0 0.0
    %2047 = vmatprep.subr.mxu0 0.0
    %2048 = vmatpush1.msra.mxu0 0.0
    %2049 = vmatprep.subr.mxu0 0.0
    %2050 = vmatpush1.msra.mxu0 0.0
    %2051 = vmatprep.subr.mxu0 0.0
    %2052 = vmatpush1.msra.mxu0 0.0
    %2053 = vmatprep.subr.mxu0 0.0
    %2054 = vmatpush1.msra.mxu0 0.0
    %2055 = vmatprep.subr.mxu0 0.0
    %2056 = vmatpush1.msra.mxu0 0.0
    %2057 = vmatprep.subr.mxu0 0.0
    %2058 = vmatpush1.msra.mxu0 0.0
    %2059 = vmatprep.mubr.f32.mxu0 0.0
    %2060 = vmatmul.mubr.f32.gmra.mrb[0].mxu0 %v1993
    %v2061 = vpop.f32.mrb[0].mxu0
    %v2062 = vadd.f32 0.0, %v2061
    %v2063 = vpop.f32.mrb[0].mxu0
    %2064 = vdwg.mxu0
    %v2066 = vsel %vm1626, %v1616, 0
    %2068 = vmatprep.subr.mxu0 0.0
    %2069 = vmatpush1.msra.mxu0 %v1624
    %2070 = vmatprep.subr.mxu0 0.0
    %2071 = vmatpush1.msra.mxu0 0.0
    %2072 = vmatprep.subr.mxu0 0.0
    %2073 = vmatpush1.msra.mxu0 0.0
    %2074 = vmatprep.subr.mxu0 0.0
    %2075 = vmatpush1.msra.mxu0 0.0
    %2076 = vmatprep.subr.mxu0 0.0
    %2077 = vmatpush1.msra.mxu0 0.0
    %2078 = vmatprep.subr.mxu0 0.0
    %2079 = vmatpush1.msra.mxu0 0.0
    %2080 = vmatprep.subr.mxu0 0.0
    %2081 = vmatpush1.msra.mxu0 0.0
    %2082 = vmatprep.subr.mxu0 0.0
    %2083 = vmatpush1.msra.mxu0 0.0
    %2084 = vmatprep.subr.mxu0 0.0
    %2085 = vmatpush1.msra.mxu0 0.0
    %2086 = vmatprep.subr.mxu0 0.0
    %2087 = vmatpush1.msra.mxu0 0.0
    %2088 = vmatprep.subr.mxu0 0.0
    %2089 = vmatpush1.msra.mxu0 0.0
    %2090 = vmatprep.subr.mxu0 0.0
    %2091 = vmatpush1.msra.mxu0 0.0
    %2092 = vmatprep.subr.mxu0 0.0
    %2093 = vmatpush1.msra.mxu0 0.0
    %2094 = vmatprep.subr.mxu0 0.0
    %2095 = vmatpush1.msra.mxu0 0.0
    %2096 = vmatprep.subr.mxu0 0.0
    %2097 = vmatpush1.msra.mxu0 0.0
    %2098 = vmatprep.subr.mxu0 0.0
    %2099 = vmatpush1.msra.mxu0 0.0
    %2100 = vmatprep.subr.mxu0 0.0
    %2101 = vmatpush1.msra.mxu0 0.0
    %2102 = vmatprep.subr.mxu0 0.0
    %2103 = vmatpush1.msra.mxu0 0.0
    %2104 = vmatprep.subr.mxu0 0.0
    %2105 = vmatpush1.msra.mxu0 0.0
    %2106 = vmatprep.subr.mxu0 0.0
    %2107 = vmatpush1.msra.mxu0 0.0
    %2108 = vmatprep.subr.mxu0 0.0
    %2109 = vmatpush1.msra.mxu0 0.0
    %2110 = vmatprep.subr.mxu0 0.0
    %2111 = vmatpush1.msra.mxu0 0.0
    %2112 = vmatprep.subr.mxu0 0.0
    %2113 = vmatpush1.msra.mxu0 0.0
    %2114 = vmatprep.subr.mxu0 0.0
    %2115 = vmatpush1.msra.mxu0 0.0
    %2116 = vmatprep.subr.mxu0 0.0
    %2117 = vmatpush1.msra.mxu0 0.0
    %2118 = vmatprep.subr.mxu0 0.0
    %2119 = vmatpush1.msra.mxu0 0.0
    %2120 = vmatprep.subr.mxu0 0.0
    %2121 = vmatpush1.msra.mxu0 0.0
    %2122 = vmatprep.subr.mxu0 0.0
    %2123 = vmatpush1.msra.mxu0 0.0
    %2124 = vmatprep.subr.mxu0 0.0
    %2125 = vmatpush1.msra.mxu0 0.0
    %2126 = vmatprep.subr.mxu0 0.0
    %2127 = vmatpush1.msra.mxu0 0.0
    %2128 = vmatprep.subr.mxu0 0.0
    %2129 = vmatpush1.msra.mxu0 0.0
    %2130 = vmatprep.subr.mxu0 0.0
    %2131 = vmatpush1.msra.mxu0 0.0
    %2132 = vmatprep.mubr.f32.mxu0 0.0
    %2133 = vmatmul.mubr.f32.gmra.mrb[0].mxu0 %v2066
    %v2134 = vpop.f32.mrb[0].mxu0
    %v2135 = vadd.f32 0.0, %v2134
    %v2136 = vpop.f32.mrb[0].mxu0
    %2137 = vdwg.mxu0
    %v2139 = vsel %vm1626, %v1617, 0
    %2141 = vmatprep.subr.mxu0 0.0
    %2142 = vmatpush1.msra.mxu0 %v1625
    %2143 = vmatprep.subr.mxu0 0.0
    %2144 = vmatpush1.msra.mxu0 0.0
    %2145 = vmatprep.subr.mxu0 0.0
    %2146 = vmatpush1.msra.mxu0 0.0
    %2147 = vmatprep.subr.mxu0 0.0
    %2148 = vmatpush1.msra.mxu0 0.0
    %2149 = vmatprep.subr.mxu0 0.0
    %2150 = vmatpush1.msra.mxu0 0.0
    %2151 = vmatprep.subr.mxu0 0.0
    %2152 = vmatpush1.msra.mxu0 0.0
    %2153 = vmatprep.subr.mxu0 0.0
    %2154 = vmatpush1.msra.mxu0 0.0
    %2155 = vmatprep.subr.mxu0 0.0
    %2156 = vmatpush1.msra.mxu0 0.0
    %2157 = vmatprep.subr.mxu0 0.0
    %2158 = vmatpush1.msra.mxu0 0.0
    %2159 = vmatprep.subr.mxu0 0.0
    %2160 = vmatpush1.msra.mxu0 0.0
    %2161 = vmatprep.subr.mxu0 0.0
    %2162 = vmatpush1.msra.mxu0 0.0
    %2163 = vmatprep.subr.mxu0 0.0
    %2164 = vmatpush1.msra.mxu0 0.0
    %2165 = vmatprep.subr.mxu0 0.0
    %2166 = vmatpush1.msra.mxu0 0.0
    %2167 = vmatprep.subr.mxu0 0.0
    %2168 = vmatpush1.msra.mxu0 0.0
    %2169 = vmatprep.subr.mxu0 0.0
    %2170 = vmatpush1.msra.mxu0 0.0
    %2171 = vmatprep.subr.mxu0 0.0
    %2172 = vmatpush1.msra.mxu0 0.0
    %2173 = vmatprep.subr.mxu0 0.0
    %2174 = vmatpush1.msra.mxu0 0.0
    %2175 = vmatprep.subr.mxu0 0.0
    %2176 = vmatpush1.msra.mxu0 0.0
    %2177 = vmatprep.subr.mxu0 0.0
    %2178 = vmatpush1.msra.mxu0 0.0
    %2179 = vmatprep.subr.mxu0 0.0
    %2180 = vmatpush1.msra.mxu0 0.0
    %2181 = vmatprep.subr.mxu0 0.0
    %2182 = vmatpush1.msra.mxu0 0.0
    %2183 = vmatprep.subr.mxu0 0.0
    %2184 = vmatpush1.msra.mxu0 0.0
    %2185 = vmatprep.subr.mxu0 0.0
    %2186 = vmatpush1.msra.mxu0 0.0
    %2187 = vmatprep.subr.mxu0 0.0
    %2188 = vmatpush1.msra.mxu0 0.0
    %2189 = vmatprep.subr.mxu0 0.0
    %2190 = vmatpush1.msra.mxu0 0.0
    %2191 = vmatprep.subr.mxu0 0.0
    %2192 = vmatpush1.msra.mxu0 0.0
    %2193 = vmatprep.subr.mxu0 0.0
    %2194 = vmatpush1.msra.mxu0 0.0
    %2195 = vmatprep.subr.mxu0 0.0
    %2196 = vmatpush1.msra.mxu0 0.0
    %2197 = vmatprep.subr.mxu0 0.0
    %2198 = vmatpush1.msra.mxu0 0.0
    %2199 = vmatprep.subr.mxu0 0.0
    %2200 = vmatpush1.msra.mxu0 0.0
    %2201 = vmatprep.subr.mxu0 0.0
    %2202 = vmatpush1.msra.mxu0 0.0
    %2203 = vmatprep.subr.mxu0 0.0
    %2204 = vmatpush1.msra.mxu0 0.0
    %2205 = vmatprep.mubr.f32.mxu0 0.0
    %2206 = vmatmul.mubr.f32.gmra.mrb[0].mxu0 %v2139
    %v2207 = vpop.f32.mrb[0].mxu0
    %v2208 = vadd.f32 0.0, %v2207
    %v2209 = vpop.f32.mrb[0].mxu0
    %2210 = vdwg.mxu0
    %v2211 = vld [vmem:[%s10] sm:$0xff]
    %v2212 = vld [vmem:[%s10 + $0x8] sm:$0xff]
    %v2213 = vld [vmem:[%s10 + $0x10] sm:$0xff]
    %v2214 = vld [vmem:[%s10 + $0x18] sm:$0xff]
    %v2215 = vld [vmem:[%s10 + $0x20] sm:$0xff]
    %v2216 = vld [vmem:[%s10 + $0x28] sm:$0xff]
    %v2217 = vld [vmem:[%s10 + $0x30] sm:$0xff]
    %v2218 = vld [vmem:[%s10 + $0x38] sm:$0xff]
    %v2219 = vld [vmem:[%s10 + $0x40] sm:$0xff]
    %v2220 = vld [vmem:[%s10 + $0x48] sm:$0xff]
    %v2221 = vld [vmem:[%s10 + $0x50] sm:$0xff]
    %v2222 = vld [vmem:[%s10 + $0x58] sm:$0xff]
    %v2223 = vld [vmem:[%s10 + $0x60] sm:$0xff]
    %v2224 = vld [vmem:[%s10 + $0x68] sm:$0xff]
    %v2225 = vld [vmem:[%s10 + $0x70] sm:$0xff]
    %v2226 = vld [vmem:[%s10 + $0x78] sm:$0xff]
    %v2227 = vld [vmem:[%s11] sm:$0xff]
    %v2228 = vld [vmem:[%s11 + $0x8] sm:$0xff]
    %v2229 = vld [vmem:[%s11 + $0x10] sm:$0xff]
    %v2230 = vld [vmem:[%s11 + $0x18] sm:$0xff]
    %v2231 = vld [vmem:[%s11 + $0x20] sm:$0xff]
    %v2232 = vld [vmem:[%s11 + $0x28] sm:$0xff]
    %v2233 = vld [vmem:[%s11 + $0x30] sm:$0xff]
    %v2234 = vld [vmem:[%s11 + $0x38] sm:$0xff]
    %v2235 = vld [vmem:[%s11 + $0x40] sm:$0xff]
    %v2236 = vld [vmem:[%s11 + $0x48] sm:$0xff]
    %v2237 = vld [vmem:[%s11 + $0x50] sm:$0xff]
    %v2238 = vld [vmem:[%s11 + $0x58] sm:$0xff]
    %v2239 = vld [vmem:[%s11 + $0x60] sm:$0xff]
    %v2240 = vld [vmem:[%s11 + $0x68] sm:$0xff]
    %v2241 = vld [vmem:[%s11 + $0x70] sm:$0xff]
    %v2242 = vld [vmem:[%s11 + $0x78] sm:$0xff]
    %v2251 = vrot.slane %v1770, 7
    %vm2252 = vcmask 1041409
    %v2253 = vsel %vm2252, %v2251, %v1697
    %v2254 = vrot.slane %v1843, 6
    %vm2255 = vcmask 1042434
    %v2256 = vsel %vm2255, %v2254, %v2253
    %v2257 = vrot.slane %v1916, 5
    %vm2258 = vcmask 1043459
    %v2259 = vsel %vm2258, %v2257, %v2256
    %v2260 = vrot.slane %v1989, 4
    %vm2261 = vcmask 1044484
    %v2262 = vsel %vm2261, %v2260, %v2259
    %v2263 = vrot.slane %v2062, 3
    %vm2264 = vcmask 1045509
    %v2265 = vsel %vm2264, %v2263, %v2262
    %v2266 = vrot.slane %v2135, 2
    %vm2267 = vcmask 1046534
    %v2268 = vsel %vm2267, %v2266, %v2265
    %v2269 = vrot.slane %v2208, 1
    %vm2270 = vcmask 1047559
    %v2271 = vsel %vm2270, %v2269, %v2268
    %2273 = vmatprep.subr.mxu0 0.0
    %2274 = vmatpush1.msra.mxu0 %v2227
    %2275 = vmatprep.subr.mxu0 0.0
    %2276 = vmatpush1.msra.mxu0 %v2228
    %2277 = vmatprep.subr.mxu0 0.0
    %2278 = vmatpush1.msra.mxu0 %v2229
    %2279 = vmatprep.subr.mxu0 0.0
    %2280 = vmatpush1.msra.mxu0 %v2230
    %2281 = vmatprep.subr.mxu0 0.0
    %2282 = vmatpush1.msra.mxu0 %v2231
    %2283 = vmatprep.subr.mxu0 0.0
    %2284 = vmatpush1.msra.mxu0 %v2232
    %2285 = vmatprep.subr.mxu0 0.0
    %2286 = vmatpush1.msra.mxu0 %v2233
    %2287 = vmatprep.subr.mxu0 0.0
    %2288 = vmatpush1.msra.mxu0 %v2234
    %2289 = vmatprep.subr.mxu0 0.0
    %2290 = vmatpush1.msra.mxu0 %v2235
    %2291 = vmatprep.subr.mxu0 0.0
    %2292 = vmatpush1.msra.mxu0 %v2236
    %2293 = vmatprep.subr.mxu0 0.0
    %2294 = vmatpush1.msra.mxu0 %v2237
    %2295 = vmatprep.subr.mxu0 0.0
    %2296 = vmatpush1.msra.mxu0 %v2238
    %2297 = vmatprep.subr.mxu0 0.0
    %2298 = vmatpush1.msra.mxu0 %v2239
    %2299 = vmatprep.subr.mxu0 0.0
    %2300 = vmatpush1.msra.mxu0 %v2240
    %2301 = vmatprep.subr.mxu0 0.0
    %2302 = vmatpush1.msra.mxu0 %v2241
    %2303 = vmatprep.subr.mxu0 0.0
    %2304 = vmatpush1.msra.mxu0 %v2242
    %2305 = vmatprep.subr.mxu0 0.0
    %2306 = vmatpush1.msra.mxu0 0.0
    %2307 = vmatprep.subr.mxu0 0.0
    %2308 = vmatpush1.msra.mxu0 0.0
    %2309 = vmatprep.subr.mxu0 0.0
    %2310 = vmatpush1.msra.mxu0 0.0
    %2311 = vmatprep.subr.mxu0 0.0
    %2312 = vmatpush1.msra.mxu0 0.0
    %2313 = vmatprep.subr.mxu0 0.0
    %2314 = vmatpush1.msra.mxu0 0.0
    %2315 = vmatprep.subr.mxu0 0.0
    %2316 = vmatpush1.msra.mxu0 0.0
    %2317 = vmatprep.subr.mxu0 0.0
    %2318 = vmatpush1.msra.mxu0 0.0
    %2319 = vmatprep.subr.mxu0 0.0
    %2320 = vmatpush1.msra.mxu0 0.0
    %2321 = vmatprep.subr.mxu0 0.0
    %2322 = vmatpush1.msra.mxu0 0.0
    %2323 = vmatprep.subr.mxu0 0.0
    %2324 = vmatpush1.msra.mxu0 0.0
    %2325 = vmatprep.subr.mxu0 0.0
    %2326 = vmatpush1.msra.mxu0 0.0
    %2327 = vmatprep.subr.mxu0 0.0
    %2328 = vmatpush1.msra.mxu0 0.0
    %2329 = vmatprep.subr.mxu0 0.0
    %2330 = vmatpush1.msra.mxu0 0.0
    %2331 = vmatprep.subr.mxu0 0.0
    %2332 = vmatpush1.msra.mxu0 0.0
    %2333 = vmatprep.subr.mxu0 0.0
    %2334 = vmatpush1.msra.mxu0 0.0
    %2335 = vmatprep.subr.mxu0 0.0
    %2336 = vmatpush1.msra.mxu0 0.0
    %2337 = vmatprep.mubr.f32.mxu0 0.0
    %2338 = vmatmul.mubr.f32.gmra.mrb[0].mxu0 %v2271
    %v2339 = vpop.f32.mrb[0].mxu0
    %v2340 = vadd.f32 0.0, %v2339
    %v2341 = vpop.f32.mrb[0].mxu0
    %2342 = vdwg.mxu0
    %2343 = vmatprep.subr.mxu0 0.0
    %2344 = vmatpush1.msra.mxu0 %v2211
    %2345 = vmatprep.subr.mxu0 0.0
    %2346 = vmatpush1.msra.mxu0 %v2212
    %2347 = vmatprep.subr.mxu0 0.0
    %2348 = vmatpush1.msra.mxu0 %v2213
    %2349 = vmatprep.subr.mxu0 0.0
    %2350 = vmatpush1.msra.mxu0 %v2214
    %2351 = vmatprep.subr.mxu0 0.0
    %2352 = vmatpush1.msra.mxu0 %v2215
    %2353 = vmatprep.subr.mxu0 0.0
    %2354 = vmatpush1.msra.mxu0 %v2216
    %2355 = vmatprep.subr.mxu0 0.0
    %2356 = vmatpush1.msra.mxu0 %v2217
    %2357 = vmatprep.subr.mxu0 0.0
    %2358 = vmatpush1.msra.mxu0 %v2218
    %2359 = vmatprep.subr.mxu0 0.0
    %2360 = vmatpush1.msra.mxu0 %v2219
    %2361 = vmatprep.subr.mxu0 0.0
    %2362 = vmatpush1.msra.mxu0 %v2220
    %2363 = vmatprep.subr.mxu0 0.0
    %2364 = vmatpush1.msra.mxu0 %v2221
    %2365 = vmatprep.subr.mxu0 0.0
    %2366 = vmatpush1.msra.mxu0 %v2222
    %2367 = vmatprep.subr.mxu0 0.0
    %2368 = vmatpush1.msra.mxu0 %v2223
    %2369 = vmatprep.subr.mxu0 0.0
    %2370 = vmatpush1.msra.mxu0 %v2224
    %2371 = vmatprep.subr.mxu0 0.0
    %2372 = vmatpush1.msra.mxu0 %v2225
    %2373 = vmatprep.subr.mxu0 0.0
    %2374 = vmatpush1.msra.mxu0 %v2226
    %2375 = vmatprep.subr.mxu0 0.0
    %2376 = vmatpush1.msra.mxu0 0.0
    %2377 = vmatprep.subr.mxu0 0.0
    %2378 = vmatpush1.msra.mxu0 0.0
    %2379 = vmatprep.subr.mxu0 0.0
    %2380 = vmatpush1.msra.mxu0 0.0
    %2381 = vmatprep.subr.mxu0 0.0
    %2382 = vmatpush1.msra.mxu0 0.0
    %2383 = vmatprep.subr.mxu0 0.0
    %2384 = vmatpush1.msra.mxu0 0.0
    %2385 = vmatprep.subr.mxu0 0.0
    %2386 = vmatpush1.msra.mxu0 0.0
    %2387 = vmatprep.subr.mxu0 0.0
    %2388 = vmatpush1.msra.mxu0 0.0
    %2389 = vmatprep.subr.mxu0 0.0
    %2390 = vmatpush1.msra.mxu0 0.0
    %2391 = vmatprep.subr.mxu0 0.0
    %2392 = vmatpush1.msra.mxu0 0.0
    %2393 = vmatprep.subr.mxu0 0.0
    %2394 = vmatpush1.msra.mxu0 0.0
    %2395 = vmatprep.subr.mxu0 0.0
    %2396 = vmatpush1.msra.mxu0 0.0
    %2397 = vmatprep.subr.mxu0 0.0
    %2398 = vmatpush1.msra.mxu0 0.0
    %2399 = vmatprep.subr.mxu0 0.0
    %2400 = vmatpush1.msra.mxu0 0.0
    %2401 = vmatprep.subr.mxu0 0.0
    %2402 = vmatpush1.msra.mxu0 0.0
    %2403 = vmatprep.subr.mxu0 0.0
    %2404 = vmatpush1.msra.mxu0 0.0
    %2405 = vmatprep.subr.mxu0 0.0
    %2406 = vmatpush1.msra.mxu0 0.0
    %2407 = vmatprep.mubr.f32.mxu0 0.0
    %2408 = vmatmul.mubr.f32.gmra.mrb[0].mxu0 %v780
    %v2409 = vpop.f32.mrb[0].mxu0
    %v2410 = vadd.f32 %v2340, %v2409
    %v2411 = vpop.f32.mrb[0].mxu0
    %2412 = vdwg.mxu0
    %v2413 = vld [vmem:[%s12] sm:$0x1]
    %v2415 = vlaneseq
    %v2416 = vshrl.u32 %v2415, 7
    %v2417 = vsub.s32 0, %v2416
    %v2418 = vrot.slane %v2413, %v2417
    %v2420 = vadd.f32 %v2410, %v2418
    %v2421 = vtanh.pop %v2420
    %v2422 = vld [vmem:[#allocation8] sm:$0xff]
    %v2423 = vld [vmem:[#allocation8 + $0x8] sm:$0xff]
    %v2424 = vld [vmem:[#allocation8 + $0x10] sm:$0xff]
    %v2425 = vld [vmem:[#allocation8 + $0x18] sm:$0xff]
    %v2426 = vld [vmem:[#allocation8 + $0x20] sm:$0xff]
    %v2427 = vld [vmem:[#allocation8 + $0x28] sm:$0xff]
    %v2428 = vld [vmem:[#allocation8 + $0x30] sm:$0xff]
    %v2429 = vld [vmem:[#allocation8 + $0x38] sm:$0xff]
    %v2430 = vld [vmem:[#allocation8 + $0x40] sm:$0xff]
    %v2431 = vld [vmem:[#allocation8 + $0x48] sm:$0xff]
    %v2432 = vld [vmem:[#allocation8 + $0x50] sm:$0xff]
    %v2433 = vld [vmem:[#allocation8 + $0x58] sm:$0xff]
    %v2434 = vld [vmem:[#allocation8 + $0x60] sm:$0xff]
    %v2435 = vld [vmem:[#allocation8 + $0x68] sm:$0xff]
    %v2436 = vld [vmem:[#allocation8 + $0x70] sm:$0xff]
    %v2437 = vld [vmem:[#allocation8 + $0x78] sm:$0xff]
    %v2438 = vld [vmem:[%s14] sm:$0x1]
    %v2440 = vlaneseq
    %v2441 = vshrl.u32 %v2440, 7
    %v2442 = vsub.s32 0, %v2441
    %v2443 = vrot.slane %v2438, %v2442
    %2445 = vmatprep.subr.mxu0 0.0
    %2446 = vmatpush1.msra.mxu0 %v2422
    %2447 = vmatprep.subr.mxu0 0.0
    %2448 = vmatpush1.msra.mxu0 %v2423
    %2449 = vmatprep.subr.mxu0 0.0
    %2450 = vmatpush1.msra.mxu0 %v2424
    %2451 = vmatprep.subr.mxu0 0.0
    %2452 = vmatpush1.msra.mxu0 %v2425
    %2453 = vmatprep.subr.mxu0 0.0
    %2454 = vmatpush1.msra.mxu0 %v2426
    %2455 = vmatprep.subr.mxu0 0.0
    %2456 = vmatpush1.msra.mxu0 %v2427
    %2457 = vmatprep.subr.mxu0 0.0
    %2458 = vmatpush1.msra.mxu0 %v2428
    %2459 = vmatprep.subr.mxu0 0.0
    %2460 = vmatpush1.msra.mxu0 %v2429
    %2461 = vmatprep.subr.mxu0 0.0
    %2462 = vmatpush1.msra.mxu0 %v2430
    %2463 = vmatprep.subr.mxu0 0.0
    %2464 = vmatpush1.msra.mxu0 %v2431
    %2465 = vmatprep.subr.mxu0 0.0
    %2466 = vmatpush1.msra.mxu0 %v2432
    %2467 = vmatprep.subr.mxu0 0.0
    %2468 = vmatpush1.msra.mxu0 %v2433
    %2469 = vmatprep.subr.mxu0 0.0
    %2470 = vmatpush1.msra.mxu0 %v2434
    %2471 = vmatprep.subr.mxu0 0.0
    %2472 = vmatpush1.msra.mxu0 %v2435
    %2473 = vmatprep.subr.mxu0 0.0
    %2474 = vmatpush1.msra.mxu0 %v2436
    %2475 = vmatprep.subr.mxu0 0.0
    %2476 = vmatpush1.msra.mxu0 %v2437
    %2477 = vmatprep.subr.mxu0 0.0
    %2478 = vmatpush1.msra.mxu0 0.0
    %2479 = vmatprep.subr.mxu0 0.0
    %2480 = vmatpush1.msra.mxu0 0.0
    %2481 = vmatprep.subr.mxu0 0.0
    %2482 = vmatpush1.msra.mxu0 0.0
    %2483 = vmatprep.subr.mxu0 0.0
    %2484 = vmatpush1.msra.mxu0 0.0
    %2485 = vmatprep.subr.mxu0 0.0
    %2486 = vmatpush1.msra.mxu0 0.0
    %2487 = vmatprep.subr.mxu0 0.0
    %2488 = vmatpush1.msra.mxu0 0.0
    %2489 = vmatprep.subr.mxu0 0.0
    %2490 = vmatpush1.msra.mxu0 0.0
    %2491 = vmatprep.subr.mxu0 0.0
    %2492 = vmatpush1.msra.mxu0 0.0
    %2493 = vmatprep.subr.mxu0 0.0
    %2494 = vmatpush1.msra.mxu0 0.0
    %2495 = vmatprep.subr.mxu0 0.0
    %2496 = vmatpush1.msra.mxu0 0.0
    %2497 = vmatprep.subr.mxu0 0.0
    %2498 = vmatpush1.msra.mxu0 0.0
    %2499 = vmatprep.subr.mxu0 0.0
    %2500 = vmatpush1.msra.mxu0 0.0
    %2501 = vmatprep.subr.mxu0 0.0
    %2502 = vmatpush1.msra.mxu0 0.0
    %2503 = vmatprep.subr.mxu0 0.0
    %2504 = vmatpush1.msra.mxu0 0.0
    %2505 = vmatprep.subr.mxu0 0.0
    %2506 = vmatpush1.msra.mxu0 0.0
    %2507 = vmatprep.subr.mxu0 0.0
    %2508 = vmatpush1.msra.mxu0 0.0
    %2509 = vmatprep.mubr.f32.mxu0 0.0
    %2510 = vmatmul.mubr.f32.gmra.mrb[0].mxu0 %v2421
    %v2511 = vpop.f32.mrb[0].mxu0
    %v2512 = vadd.f32 %v2443, %v2511
    %v2513 = vpop.f32.mrb[0].mxu0
    %2514 = vdwg.mxu0
    %2515 = vmax.xlane.f32.xlu0 %v2512
    %v2516 = vpop.xlane.xlu0 %2515
    %v2517 = vsub.f32 %v2512, %v2516
    %v2518 = vmul.f32 %v2517, 1.442695
    %v2519 = vpow.pop %v2518
    %2520 = vadd.xlane.f32.xlu0 %v2519
    %v2521 = vpop.xlane.xlu0 %2520
    %v2522 = vrcp.pop %v2521
    %v2523 = vmul.f32 %v2519, %v2522
    %2524 = vst [vmem:[#allocation10] sm:$0xff] %v2523
    // Predicated region
    $region82: #{tpu_custom_call.1} parent=1 // pred_check
      _
    $region83: #{tpu_custom_call.1} parent=1 // pred_check_branch
      %2526 = sbr.rel (0) target = $region85
    $region84: #{tpu_custom_call.1} parent=1 // pred_region
      %s2528 = ssub.s32 128, 128
      %2529 = vsyncadd [#allocation4], %s2528
      %s2531 = sshll.u32 [#allocation10], 4
      %s2532 = int_to_ptr.vmem [resolvable:$true] %s2531
      %2534 = dma.vmem_to_hbm [thread:$0]  %s2532, 128, %s15, [#allocation4]
    $region85: #{tpu_custom_call.1} parent=1 // pred_fallthru
      _
    // Predicated region
    $region86: #{tpu_custom_call.1} parent=1 // pred_check
      _
    $region87: #{tpu_custom_call.1} parent=1 // pred_check_branch
      %2536 = sbr.rel (0) target = $region89
    $region88: #{tpu_custom_call.1} parent=1 // pred_region
      %s2538 = ssub.s32 256, 256
      %2539 = vsyncadd [#allocation12], %s2538
      %s2540 = sshll.u32 [#allocation11], 4
      %s2541 = int_to_ptr.vmem [resolvable:$true] %s2540
      %2546 = dma.vmem_to_hbm [thread:$0]  %s2541, 256, %s16, [#allocation12], 128, 128, 8
    $region89: #{tpu_custom_call.1} parent=1 // pred_fallthru
      _
    // Predicated region
    $region90: #{tpu_custom_call.1} parent=1 // pred_check
      _
    $region91: #{tpu_custom_call.1} parent=1 // pred_check_branch
      %2548 = sbr.rel (0) target = $region93
    $region92: #{tpu_custom_call.1} parent=1 // pred_region
      %2549 = dma.done [#allocation4], 128
    $region93: #{tpu_custom_call.1} parent=1 // pred_fallthru
      _
    // Predicated region
    $region94: #{tpu_custom_call.1} parent=1 // pred_check
      _
    $region95: #{tpu_custom_call.1} parent=1 // pred_check_branch
      %2551 = sbr.rel (0) target = $region97
    $region96: #{tpu_custom_call.1} parent=1 // pred_region
      %2552 = dma.done [#allocation12], 256
    $region97: #{tpu_custom_call.1} parent=1 // pred_fallthru
      _
    %2553 = vsyncpa [#allocation3], 1
    %2554 = vsyncpa [#allocation6], 1
    %2555 = vsyncpa [#allocation9], 1
    %2556 = vsyncpa [#allocation4], 1
    %2557 = vsyncpa [#allocation12], 1

// kernel: tpu_custom_call.1
$region0: #{tpu_custom_call.1}
  #allocation0 [shape = 'u32[]', space=smem, size = 0x4, offset = 0x4, fixed_abs, tag = 'smem constant byte address 0x4 - core index']
  #allocation1 [shape = 'u32[144,128]{1,0:T(1,128)}', space=vmem, size = 0x12000, scoped, tag = 'internal scratch']
  %s0 = inlined_call_operand.hbm [shape: f32[1,8,384], index: 0, kind: input, shape index: {}]
  %s1 = inlined_call_operand.hbm [shape: f32[2,8,128], index: 1, kind: input, shape index: {}]
  %s2 = inlined_call_operand.vmem [shape: f32[8,8,128], index: 2, kind: input, shape index: {}]
  %s3 = inlined_call_operand.vmem [shape: f32[8,128,8], index: 3, kind: input, shape index: {}]
  %s4 = inlined_call_operand.vmem [shape: f32[128,384], index: 4, kind: input, shape index: {}]
  %s5 = inlined_call_operand.vmem [shape: f32[1,384], index: 5, kind: input, shape index: {}]
  %s6 = inlined_call_operand.vmem [shape: f32[128,384], index: 6, kind: input, shape index: {}]
  %s7 = inlined_call_operand.vmem [shape: f32[1,384], index: 7, kind: input, shape index: {}]
  %s8 = inlined_call_operand.hbm [shape: f32[128,384], index: 8, kind: input, shape index: {}]
  %s9 = inlined_call_operand.vmem [shape: f32[1,384], index: 9, kind: input, shape index: {}]
  %s10 = inlined_call_operand.vmem [shape: f32[128,128], index: 10, kind: input, shape index: {}]
  %s11 = inlined_call_operand.vmem [shape: f32[128,128], index: 11, kind: input, shape index: {}]
  %s12 = inlined_call_operand.vmem [shape: f32[1,128], index: 12, kind: input, shape index: {}]
  %s13 = inlined_call_operand.hbm [shape: f32[128,128], index: 13, kind: input, shape index: {}]
  %s14 = inlined_call_operand.vmem [shape: f32[1,128], index: 14, kind: input, shape index: {}]
  %s15 = inlined_call_operand.hbm [shape: f32[1,8,128], index: 15, kind: output, shape index: {0}]
  %s16 = inlined_call_operand.hbm [shape: f32[2,8,128], index: 16, kind: output, shape index: {1}]
  %17 = xla_tuple %s15, %s16
  %s18 = sld [smem:[#allocation0]]
  $region98: #{tpu_custom_call.1} parent=0
    _
  %s20 = ssub.s32 1, %s18
  %s21 = scalar_select 0, %s20, %s18
  $region1: #{tpu_custom_call.1} parent=0
    #allocation2 [shape = 'u8[12288]{0}', space=vmem, size = 0x3000, scoped, tag = 'input window, operand 0, single buffered']
    #allocation3 [shape = 's32[1]{0}', space=sflag, size = 0x4, scoped, tag = 'scoped memory for tpu_custom_call.1']
    #allocation4 [shape = 's32[1]{0}', space=sflag, size = 0x4, scoped, tag = 'scoped memory for tpu_custom_call.1']
    #allocation5 [shape = 'u8[8192]{0}', space=vmem, size = 0x2000, scoped, tag = 'input window, operand 1, single buffered']
    #allocation6 [shape = 's32[1]{0}', space=sflag, size = 0x4, scoped, tag = 'scoped memory for tpu_custom_call.1']
    #allocation7 [shape = 'u8[196608]{0}', space=vmem, size = 0x30000, scoped, tag = 'input window, operand 8, single buffered']
    #allocation8 [shape = 'u8[65536]{0}', space=vmem, size = 0x10000, scoped, tag = 'input window, operand 13, single buffered']
    #allocation9 [shape = 's32[1]{0}', space=sflag, size = 0x4, scoped, tag = 'scoped memory for tpu_custom_call.1']
    #allocation10 [shape = 'u8[4096]{0}', space=vmem, size = 0x1000, scoped, tag = 'output window, operand 0, single buffered']
    #allocation11 [shape = 'u8[8192]{0}', space=vmem, size = 0x2000, scoped, tag = 'output window, operand 1, single buffered']
    #allocation12 [shape = 's32[1]{0}', space=sflag, size = 0x4, scoped, tag = 'scoped memory for tpu_custom_call.1']
    %22 = vsyncpa [#allocation3], 0
    %23 = vsyncpa [#allocation6], 0
    %24 = vsyncpa [#allocation9], 0
    %25 = vsyncpa [#allocation4], 0
    %26 = vsyncpa [#allocation12], 0
    // Predicated region
    $region2: #{tpu_custom_call.1} parent=1 // pred_check
      _
    $region3: #{tpu_custom_call.1} parent=1 // pred_check_branch
      %28 = sbr.rel (0) target = $region5
    $region4: #{tpu_custom_call.1} parent=1 // pred_region
      %s30 = ssub.s32 384, 384
      %31 = vsyncadd [#allocation3], %s30
      %s33 = sshll.u32 [#allocation2], 4
      %s34 = int_to_ptr.vmem [resolvable:$true] %s33
      %36 = dma.hbm_to_vmem [thread:$0]  %s0, 384, %s34, [#allocation3]
    $region5: #{tpu_custom_call.1} parent=1 // pred_fallthru
      _
    // Predicated region
    $region6: #{tpu_custom_call.1} parent=1 // pred_check
      _
    $region7: #{tpu_custom_call.1} parent=1 // pred_check_branch
      %38 = sbr.rel (0) target = $region9
    $region8: #{tpu_custom_call.1} parent=1 // pred_region
      %s40 = ssub.s32 256, 256
      %41 = vsyncadd [#allocation6], %s40
      %s42 = sshll.u32 [#allocation5], 4
      %s43 = int_to_ptr.vmem [resolvable:$true] %s42
      %48 = dma.hbm_to_vmem [thread:$0]  %s1, 256, %s43, [#allocation6], 128, 128, 8
    $region9: #{tpu_custom_call.1} parent=1 // pred_fallthru
      _
    // Predicated region
    $region10: #{tpu_custom_call.1} parent=1 // pred_check
      _
    $region11: #{tpu_custom_call.1} parent=1 // pred_check_branch
      %50 = sbr.rel (0) target = $region13
    $region12: #{tpu_custom_call.1} parent=1 // pred_region
      _
    $region13: #{tpu_custom_call.1} parent=1 // pred_fallthru
      _
    // Predicated region
    $region14: #{tpu_custom_call.1} parent=1 // pred_check
      _
    $region15: #{tpu_custom_call.1} parent=1 // pred_check_branch
      %52 = sbr.rel (0) target = $region17
    $region16: #{tpu_custom_call.1} parent=1 // pred_region
      _
    $region17: #{tpu_custom_call.1} parent=1 // pred_fallthru
      _
    // Predicated region
    $region18: #{tpu_custom_call.1} parent=1 // pred_check
      _
    $region19: #{tpu_custom_call.1} parent=1 // pred_check_branch
      %54 = sbr.rel (0) target = $region21
    $region20: #{tpu_custom_call.1} parent=1 // pred_region
      _
    $region21: #{tpu_custom_call.1} parent=1 // pred_fallthru
      _
    // Predicated region
    $region22: #{tpu_custom_call.1} parent=1 // pred_check
      _
    $region23: #{tpu_custom_call.1} parent=1 // pred_check_branch
      %56 = sbr.rel (0) target = $region25
    $region24: #{tpu_custom_call.1} parent=1 // pred_region
      _
    $region25: #{tpu_custom_call.1} parent=1 // pred_fallthru
      _
    // Predicated region
    $region26: #{tpu_custom_call.1} parent=1 // pred_check
      _
    $region27: #{tpu_custom_call.1} parent=1 // pred_check_branch
      %58 = sbr.rel (0) target = $region29
    $region28: #{tpu_custom_call.1} parent=1 // pred_region
      _
    $region29: #{tpu_custom_call.1} parent=1 // pred_fallthru
      _
    // Predicated region
    $region30: #{tpu_custom_call.1} parent=1 // pred_check
      _
    $region31: #{tpu_custom_call.1} parent=1 // pred_check_branch
      %60 = sbr.rel (0) target = $region33
    $region32: #{tpu_custom_call.1} parent=1 // pred_region
      _
    $region33: #{tpu_custom_call.1} parent=1 // pred_fallthru
      _
    // Predicated region
    $region34: #{tpu_custom_call.1} parent=1 // pred_check
      _
    $region35: #{tpu_custom_call.1} parent=1 // pred_check_branch
      %62 = sbr.rel (0) target = $region37
    $region36: #{tpu_custom_call.1} parent=1 // pred_region
      %s64 = ssub.s32 6144, 6144
      %65 = vsyncadd [#allocation6], %s64
      %s66 = sshll.u32 [#allocation7], 4
      %s67 = int_to_ptr.vmem [resolvable:$true] %s66
      %72 = dma.hbm_to_vmem [thread:$0]  %s8, 6144, %s67, [#allocation6], 384, 384, 24
    $region37: #{tpu_custom_call.1} parent=1 // pred_fallthru
      _
    // Predicated region
    $region38: #{tpu_custom_call.1} parent=1 // pred_check
      _
    $region39: #{tpu_custom_call.1} parent=1 // pred_check_branch
      %74 = sbr.rel (0) target = $region41
    $region40: #{tpu_custom_call.1} parent=1 // pred_region
      _
    $region41: #{tpu_custom_call.1} parent=1 // pred_fallthru
      _
    // Predicated region
    $region42: #{tpu_custom_call.1} parent=1 // pred_check
      _
    $region43: #{tpu_custom_call.1} parent=1 // pred_check_branch
      %76 = sbr.rel (0) target = $region45
    $region44: #{tpu_custom_call.1} parent=1 // pred_region
      _
    $region45: #{tpu_custom_call.1} parent=1 // pred_fallthru
      _
    // Predicated region
    $region46: #{tpu_custom_call.1} parent=1 // pred_check
      _
    $region47: #{tpu_custom_call.1} parent=1 // pred_check_branch
      %78 = sbr.rel (0) target = $region49
    $region48: #{tpu_custom_call.1} parent=1 // pred_region
      _
    $region49: #{tpu_custom_call.1} parent=1 // pred_fallthru
      _
    // Predicated region
    $region50: #{tpu_custom_call.1} parent=1 // pred_check
      _
    $region51: #{tpu_custom_call.1} parent=1 // pred_check_branch
      %80 = sbr.rel (0) target = $region53
    $region52: #{tpu_custom_call.1} parent=1 // pred_region
      _
    $region53: #{tpu_custom_call.1} parent=1 // pred_fallthru
      _
    // Predicated region
    $region54: #{tpu_custom_call.1} parent=1 // pred_check
      _
    $region55: #{tpu_custom_call.1} parent=1 // pred_check_branch
      %82 = sbr.rel (0) target = $region57
    $region56: #{tpu_custom_call.1} parent=1 // pred_region
      %s84 = ssub.s32 2048, 2048
      %85 = vsyncadd [#allocation9], %s84
      %s86 = sshll.u32 [#allocation8], 4
      %s87 = int_to_ptr.vmem [resolvable:$true] %s86
      %92 = dma.hbm_to_vmem [thread:$0]  %s13, 2048, %s87, [#allocation9], 128, 128, 8
    $region57: #{tpu_custom_call.1} parent=1 // pred_fallthru
      _
    // Predicated region
    $region58: #{tpu_custom_call.1} parent=1 // pred_check
      _
    $region59: #{tpu_custom_call.1} parent=1 // pred_check_branch
      %94 = sbr.rel (0) target = $region61
    $region60: #{tpu_custom_call.1} parent=1 // pred_region
      _
    $region61: #{tpu_custom_call.1} parent=1 // pred_fallthru
      _
    // Predicated region
    $region62: #{tpu_custom_call.1} parent=1 // pred_check
      _
    $region63: #{tpu_custom_call.1} parent=1 // pred_check_branch
      %96 = sbr.rel (0) target = $region65
    $region64: #{tpu_custom_call.1} parent=1 // pred_region
      %97 = dma.done [#allocation3], 384
    $region65: #{tpu_custom_call.1} parent=1 // pred_fallthru
      _
    // Predicated region
    $region66: #{tpu_custom_call.1} parent=1 // pred_check
      _
    $region67: #{tpu_custom_call.1} parent=1 // pred_check_branch
      %99 = sbr.rel (0) target = $region69
    $region68: #{tpu_custom_call.1} parent=1 // pred_region
      %100 = dma.done [#allocation6], 256
    $region69: #{tpu_custom_call.1} parent=1 // pred_fallthru
      _
    // Predicated region
    $region70: #{tpu_custom_call.1} parent=1 // pred_check
      _
    $region71: #{tpu_custom_call.1} parent=1 // pred_check_branch
      %102 = sbr.rel (0) target = $region73
    $region72: #{tpu_custom_call.1} parent=1 // pred_region
      %103 = dma.done [#allocation6], 6144
    $region73: #{tpu_custom_call.1} parent=1 // pred_fallthru
      _
    // Predicated region
    $region74: #{tpu_custom_call.1} parent=1 // pred_check
      _
    $region75: #{tpu_custom_call.1} parent=1 // pred_check_branch
      %105 = sbr.rel (0) target = $region77
    $region76: #{tpu_custom_call.1} parent=1 // pred_region
      %106 = dma.done [#allocation9], 2048
    $region77: #{tpu_custom_call.1} parent=1 // pred_fallthru
      _
    %p107 = scmp.eq.s32.totalorder 0, 0
    // Predicated region
    $region78: #{tpu_custom_call.1} parent=1 // pred_check
      %p108 = pneg %p107
    $region79: #{tpu_custom_call.1} parent=1 // pred_check_branch
      %110 = sbr.rel (%p108) target = $region81
    $region80: #{tpu_custom_call.1} parent=1 // pred_region
      %v111 = vld [vmem:[#allocation5] sm:$0xff]
      %v112 = vld [vmem:[#allocation5 + $0x8] sm:$0xff]
      %113 = vst [vmem:[#allocation11] sm:$0xff] %v111
      %114 = vst [vmem:[#allocation11 + $0x8] sm:$0xff] %v112
    $region81: #{tpu_custom_call.1} parent=1 // pred_fallthru
      _
    %v115 = vld [vmem:[#allocation11] sm:$0xff]
    %v116 = vld [vmem:[#allocation2] sm:$0xff]
    %v117 = vld [vmem:[#allocation2 + $0x8] sm:$0xff]
    %v118 = vld [vmem:[#allocation2 + $0x10] sm:$0xff]
    %v119 = vld [vmem:[%s4] sm:$0xff]
    %v120 = vld [vmem:[%s4 + $0x8] sm:$0xff]
    %v121 = vld [vmem:[%s4 + $0x10] sm:$0xff]
    %v122 = vld [vmem:[%s4 + $0x18] sm:$0xff]
    %v123 = vld [vmem:[%s4 + $0x20] sm:$0xff]
    %v124 = vld [vmem:[%s4 + $0x28] sm:$0xff]
    %v125 = vld [vmem:[%s4 + $0x30] sm:$0xff]
    %v126 = vld [vmem:[%s4 + $0x38] sm:$0xff]
    %v127 = vld [vmem:[%s4 + $0x40] sm:$0xff]
    %v128 = vld [vmem:[%s4 + $0x48] sm:$0xff]
    %v129 = vld [vmem:[%s4 + $0x50] sm:$0xff]
    %v130 = vld [vmem:[%s4 + $0x58] sm:$0xff]
    %v131 = vld [vmem:[%s4 + $0x60] sm:$0xff]
    %v132 = vld [vmem:[%s4 + $0x68] sm:$0xff]
    %v133 = vld [vmem:[%s4 + $0x70] sm:$0xff]
    %v134 = vld [vmem:[%s4 + $0x78] sm:$0xff]
    %v135 = vld [vmem:[%s4 + $0x80] sm:$0xff]
    %v136 = vld [vmem:[%s4 + $0x88] sm:$0xff]
    %v137 = vld [vmem:[%s4 + $0x90] sm:$0xff]
    %v138 = vld [vmem:[%s4 + $0x98] sm:$0xff]
    %v139 = vld [vmem:[%s4 + $0xa0] sm:$0xff]
    %v140 = vld [vmem:[%s4 + $0xa8] sm:$0xff]
    %v141 = vld [vmem:[%s4 + $0xb0] sm:$0xff]
    %v142 = vld [vmem:[%s4 + $0xb8] sm:$0xff]
    %v143 = vld [vmem:[%s4 + $0xc0] sm:$0xff]
    %v144 = vld [vmem:[%s4 + $0xc8] sm:$0xff]
    %v145 = vld [vmem:[%s4 + $0xd0] sm:$0xff]
    %v146 = vld [vmem:[%s4 + $0xd8] sm:$0xff]
    %v147 = vld [vmem:[%s4 + $0xe0] sm:$0xff]
    %v148 = vld [vmem:[%s4 + $0xe8] sm:$0xff]
    %v149 = vld [vmem:[%s4 + $0xf0] sm:$0xff]
    %v150 = vld [vmem:[%s4 + $0xf8] sm:$0xff]
    %v151 = vld [vmem:[%s4 + $0x100] sm:$0xff]
    %v152 = vld [vmem:[%s4 + $0x108] sm:$0xff]
    %v153 = vld [vmem:[%s4 + $0x110] sm:$0xff]
    %v154 = vld [vmem:[%s4 + $0x118] sm:$0xff]
    %v155 = vld [vmem:[%s4 + $0x120] sm:$0xff]
    %v156 = vld [vmem:[%s4 + $0x128] sm:$0xff]
    %v157 = vld [vmem:[%s4 + $0x130] sm:$0xff]
    %v158 = vld [vmem:[%s4 + $0x138] sm:$0xff]
    %v159 = vld [vmem:[%s4 + $0x140] sm:$0xff]
    %v160 = vld [vmem:[%s4 + $0x148] sm:$0xff]
    %v161 = vld [vmem:[%s4 + $0x150] sm:$0xff]
    %v162 = vld [vmem:[%s4 + $0x158] sm:$0xff]
    %v163 = vld [vmem:[%s4 + $0x160] sm:$0xff]
    %v164 = vld [vmem:[%s4 + $0x168] sm:$0xff]
    %v165 = vld [vmem:[%s4 + $0x170] sm:$0xff]
    %v166 = vld [vmem:[%s4 + $0x178] sm:$0xff]
    %v167 = vld [vmem:[%s5] sm:$0x7]
    %v169 = vlaneseq
    %v170 = vshrl.u32 %v169, 7
    %v171 = vsub.s32 0, %v170
    %v172 = vrot.slane %v167, %v171
    %v173 = vlaneseq
    %v174 = vshrl.u32 %v173, 7
    %v175 = vsub.s32 1, %v174
    %v176 = vrot.slane %v167, %v175
    %v177 = vlaneseq
    %v178 = vshrl.u32 %v177, 7
    %v179 = vsub.s32 2, %v178
    %v180 = vrot.slane %v167, %v179
    %184 = vmatprep.subr.mxu0 %v120
    %185 = vmatpush1.msra.mxu0 %v119
    %186 = vmatprep.subr.mxu0 %v123
    %187 = vmatpush1.msra.mxu0 %v122
    %188 = vmatprep.subr.mxu0 %v126
    %189 = vmatpush1.msra.mxu0 %v125
    %190 = vmatprep.subr.mxu0 %v129
    %191 = vmatpush1.msra.mxu0 %v128
    %192 = vmatprep.subr.mxu0 %v132
    %193 = vmatpush1.msra.mxu0 %v131
    %194 = vmatprep.subr.mxu0 %v135
    %195 = vmatpush1.msra.mxu0 %v134
    %196 = vmatprep.subr.mxu0 %v138
    %197 = vmatpush1.msra.mxu0 %v137
    %198 = vmatprep.subr.mxu0 %v141
    %199 = vmatpush1.msra.mxu0 %v140
    %200 = vmatprep.subr.mxu0 %v144
    %201 = vmatpush1.msra.mxu0 %v143
    %202 = vmatprep.subr.mxu0 %v147
    %203 = vmatpush1.msra.mxu0 %v146
    %204 = vmatprep.subr.mxu0 %v150
    %205 = vmatpush1.msra.mxu0 %v149
    %206 = vmatprep.subr.mxu0 %v153
    %207 = vmatpush1.msra.mxu0 %v152
    %208 = vmatprep.subr.mxu0 %v156
    %209 = vmatpush1.msra.mxu0 %v155
    %210 = vmatprep.subr.mxu0 %v159
    %211 = vmatpush1.msra.mxu0 %v158
    %212 = vmatprep.subr.mxu0 %v162
    %213 = vmatpush1.msra.mxu0 %v161
    %214 = vmatprep.subr.mxu0 %v165
    %215 = vmatpush1.msra.mxu0 %v164
    %216 = vmatprep.subr.mxu0 0.0
    %217 = vmatpush1.msra.mxu0 0.0
    %218 = vmatprep.subr.mxu0 0.0
    %219 = vmatpush1.msra.mxu0 0.0
    %220 = vmatprep.subr.mxu0 0.0
    %221 = vmatpush1.msra.mxu0 0.0
    %222 = vmatprep.subr.mxu0 0.0
    %223 = vmatpush1.msra.mxu0 0.0
    %224 = vmatprep.subr.mxu0 0.0
    %225 = vmatpush1.msra.mxu0 0.0
    %226 = vmatprep.subr.mxu0 0.0
    %227 = vmatpush1.msra.mxu0 0.0
    %228 = vmatprep.subr.mxu0 0.0
    %229 = vmatpush1.msra.mxu0 0.0
    %230 = vmatprep.subr.mxu0 0.0
    %231 = vmatpush1.msra.mxu0 0.0
    %232 = vmatprep.subr.mxu0 0.0
    %233 = vmatpush1.msra.mxu0 0.0
    %234 = vmatprep.subr.mxu0 0.0
    %235 = vmatpush1.msra.mxu0 0.0
    %236 = vmatprep.subr.mxu0 0.0
    %237 = vmatpush1.msra.mxu0 0.0
    %238 = vmatprep.subr.mxu0 0.0
    %239 = vmatpush1.msra.mxu0 0.0
    %240 = vmatprep.subr.mxu0 0.0
    %241 = vmatpush1.msra.mxu0 0.0
    %242 = vmatprep.subr.mxu0 0.0
    %243 = vmatpush1.msra.mxu0 0.0
    %244 = vmatprep.subr.mxu0 0.0
    %245 = vmatpush1.msra.mxu0 0.0
    %246 = vmatprep.subr.mxu0 0.0
    %247 = vmatpush1.msra.mxu0 0.0
    %248 = vmatprep.mubr.f32.mxu0 0.0
    %249 = vmatmul.mubr.f32.gmra.mrb[0].mxu0 %v115
    %v250 = vpop.f32.mrb[0].mxu0
    %v251 = vadd.f32 %v172, %v250
    %v252 = vpop.f32.mrb[0].mxu0
    %v253 = vadd.f32 %v176, %v252
    %254 = vdwg.mxu0
    %255 = vmatprep.subr.mxu0 0.0
    %256 = vmatpush1.msra.mxu0 %v121
    %257 = vmatprep.subr.mxu0 0.0
    %258 = vmatpush1.msra.mxu0 %v124
    %259 = vmatprep.subr.mxu0 0.0
    %260 = vmatpush1.msra.mxu0 %v127
    %261 = vmatprep.subr.mxu0 0.0
    %262 = vmatpush1.msra.mxu0 %v130
    %263 = vmatprep.subr.mxu0 0.0
    %264 = vmatpush1.msra.mxu0 %v133
    %265 = vmatprep.subr.mxu0 0.0
    %266 = vmatpush1.msra.mxu0 %v136
    %267 = vmatprep.subr.mxu0 0.0
    %268 = vmatpush1.msra.mxu0 %v139
    %269 = vmatprep.subr.mxu0 0.0
    %270 = vmatpush1.msra.mxu0 %v142
    %271 = vmatprep.subr.mxu0 0.0
    %272 = vmatpush1.msra.mxu0 %v145
    %273 = vmatprep.subr.mxu0 0.0
    %274 = vmatpush1.msra.mxu0 %v148
    %275 = vmatprep.subr.mxu0 0.0
    %276 = vmatpush1.msra.mxu0 %v151
    %277 = vmatprep.subr.mxu0 0.0
    %278 = vmatpush1.msra.mxu0 %v154
    %279 = vmatprep.subr.mxu0 0.0
    %280 = vmatpush1.msra.mxu0 %v157
    %281 = vmatprep.subr.mxu0 0.0
    %282 = vmatpush1.msra.mxu0 %v160
    %283 = vmatprep.subr.mxu0 0.0
    %284 = vmatpush1.msra.mxu0 %v163
    %285 = vmatprep.subr.mxu0 0.0
    %286 = vmatpush1.msra.mxu0 %v166
    %287 = vmatprep.subr.mxu0 0.0
    %288 = vmatpush1.msra.mxu0 0.0
    %289 = vmatprep.subr.mxu0 0.0
    %290 = vmatpush1.msra.mxu0 0.0
    %291 = vmatprep.subr.mxu0 0.0
    %292 = vmatpush1.msra.mxu0 0.0
    %293 = vmatprep.subr.mxu0 0.0
    %294 = vmatpush1.msra.mxu0 0.0
    %295 = vmatprep.subr.mxu0 0.0
    %296 = vmatpush1.msra.mxu0 0.0
    %297 = vmatprep.subr.mxu0 0.0
    %298 = vmatpush1.msra.mxu0 0.0
    %299 = vmatprep.subr.mxu0 0.0
    %300 = vmatpush1.msra.mxu0 0.0
    %301 = vmatprep.subr.mxu0 0.0
    %302 = vmatpush1.msra.mxu0 0.0
    %303 = vmatprep.subr.mxu0 0.0
    %304 = vmatpush1.msra.mxu0 0.0
    %305 = vmatprep.subr.mxu0 0.0
    %306 = vmatpush1.msra.mxu0 0.0
    %307 = vmatprep.subr.mxu0 0.0
    %308 = vmatpush1.msra.mxu0 0.0
    %309 = vmatprep.subr.mxu0 0.0
    %310 = vmatpush1.msra.mxu0 0.0
    %311 = vmatprep.subr.mxu0 0.0
    %312 = vmatpush1.msra.mxu0 0.0
    %313 = vmatprep.subr.mxu0 0.0
    %314 = vmatpush1.msra.mxu0 0.0
    %315 = vmatprep.subr.mxu0 0.0
    %316 = vmatpush1.msra.mxu0 0.0
    %317 = vmatprep.subr.mxu0 0.0
    %318 = vmatpush1.msra.mxu0 0.0
    %319 = vmatprep.mubr.f32.mxu0 0.0
    %320 = vmatmul.mubr.f32.gmra.mrb[0].mxu0 %v115
    %v321 = vpop.f32.mrb[0].mxu0
    %v322 = vadd.f32 %v180, %v321
    %v323 = vpop.f32.mrb[0].mxu0
    %324 = vdwg.mxu0
    %v325 = vadd.f32 %v116, %v251
    %v326 = vxor.u32 %v325, 2147483648
    %v327 = vmul.f32 %v326, 1.442695
    %v328 = vpow.pop %v327
    %v329 = vadd.f32 %v328, 1.0
    %v330 = vrcp.pop %v329
    %v331 = vmul.f32 1.0, %v330
    %v332 = vadd.f32 %v117, %v253
    %v333 = vxor.u32 %v332, 2147483648
    %v334 = vmul.f32 %v333, 1.442695
    %v335 = vpow.pop %v334
    %v336 = vadd.f32 %v335, 1.0
    %v337 = vrcp.pop %v336
    %v338 = vmul.f32 1.0, %v337
    %v339 = vmul.f32 %v331, %v322
    %v340 = vadd.f32 %v118, %v339
    %v341 = vtanh.pop %v340
    %v342 = vsub.f32 1.0, %v338
    %v343 = vmul.f32 %v342, %v341
    %v344 = vmul.f32 %v338, %v115
    %v345 = vadd.f32 %v343, %v344
    %s346 = scalar_lea.vmem [#allocation11], 8
    %v347 = vld [vmem:[%s346] sm:$0xff]
    %v348 = vld [vmem:[%s6] sm:$0xff]
    %v349 = vld [vmem:[%s6 + $0x8] sm:$0xff]
    %v350 = vld [vmem:[%s6 + $0x10] sm:$0xff]
    %v351 = vld [vmem:[%s6 + $0x18] sm:$0xff]
    %v352 = vld [vmem:[%s6 + $0x20] sm:$0xff]
    %v353 = vld [vmem:[%s6 + $0x28] sm:$0xff]
    %v354 = vld [vmem:[%s6 + $0x30] sm:$0xff]
    %v355 = vld [vmem:[%s6 + $0x38] sm:$0xff]
    %v356 = vld [vmem:[%s6 + $0x40] sm:$0xff]
    %v357 = vld [vmem:[%s6 + $0x48] sm:$0xff]
    %v358 = vld [vmem:[%s6 + $0x50] sm:$0xff]
    %v359 = vld [vmem:[%s6 + $0x58] sm:$0xff]
    %v360 = vld [vmem:[%s6 + $0x60] sm:$0xff]
    %v361 = vld [vmem:[%s6 + $0x68] sm:$0xff]
    %v362 = vld [vmem:[%s6 + $0x70] sm:$0xff]
    %v363 = vld [vmem:[%s6 + $0x78] sm:$0xff]
    %v364 = vld [vmem:[%s6 + $0x80] sm:$0xff]
    %v365 = vld [vmem:[%s6 + $0x88] sm:$0xff]
    %v366 = vld [vmem:[%s6 + $0x90] sm:$0xff]
    %v367 = vld [vmem:[%s6 + $0x98] sm:$0xff]
    %v368 = vld [vmem:[%s6 + $0xa0] sm:$0xff]
    %v369 = vld [vmem:[%s6 + $0xa8] sm:$0xff]
    %v370 = vld [vmem:[%s6 + $0xb0] sm:$0xff]
    %v371 = vld [vmem:[%s6 + $0xb8] sm:$0xff]
    %v372 = vld [vmem:[%s6 + $0xc0] sm:$0xff]
    %v373 = vld [vmem:[%s6 + $0xc8] sm:$0xff]
    %v374 = vld [vmem:[%s6 + $0xd0] sm:$0xff]
    %v375 = vld [vmem:[%s6 + $0xd8] sm:$0xff]
    %v376 = vld [vmem:[%s6 + $0xe0] sm:$0xff]
    %v377 = vld [vmem:[%s6 + $0xe8] sm:$0xff]
    %v378 = vld [vmem:[%s6 + $0xf0] sm:$0xff]
    %v379 = vld [vmem:[%s6 + $0xf8] sm:$0xff]
    %v380 = vld [vmem:[%s6 + $0x100] sm:$0xff]
    %v381 = vld [vmem:[%s6 + $0x108] sm:$0xff]
    %v382 = vld [vmem:[%s6 + $0x110] sm:$0xff]
    %v383 = vld [vmem:[%s6 + $0x118] sm:$0xff]
    %v384 = vld [vmem:[%s6 + $0x120] sm:$0xff]
    %v385 = vld [vmem:[%s6 + $0x128] sm:$0xff]
    %v386 = vld [vmem:[%s6 + $0x130] sm:$0xff]
    %v387 = vld [vmem:[%s6 + $0x138] sm:$0xff]
    %v388 = vld [vmem:[%s6 + $0x140] sm:$0xff]
    %v389 = vld [vmem:[%s6 + $0x148] sm:$0xff]
    %v390 = vld [vmem:[%s6 + $0x150] sm:$0xff]
    %v391 = vld [vmem:[%s6 + $0x158] sm:$0xff]
    %v392 = vld [vmem:[%s6 + $0x160] sm:$0xff]
    %v393 = vld [vmem:[%s6 + $0x168] sm:$0xff]
    %v394 = vld [vmem:[%s6 + $0x170] sm:$0xff]
    %v395 = vld [vmem:[%s6 + $0x178] sm:$0xff]
    %v396 = vld [vmem:[%s7] sm:$0x7]
    %v398 = vlaneseq
    %v399 = vshrl.u32 %v398, 7
    %v400 = vsub.s32 0, %v399
    %v401 = vrot.slane %v396, %v400
    %v402 = vlaneseq
    %v403 = vshrl.u32 %v402, 7
    %v404 = vsub.s32 1, %v403
    %v405 = vrot.slane %v396, %v404
    %v406 = vlaneseq
    %v407 = vshrl.u32 %v406, 7
    %v408 = vsub.s32 2, %v407
    %v409 = vrot.slane %v396, %v408
    %413 = vmatprep.subr.mxu0 %v349
    %414 = vmatpush1.msra.mxu0 %v348
    %415 = vmatprep.subr.mxu0 %v352
    %416 = vmatpush1.msra.mxu0 %v351
    %417 = vmatprep.subr.mxu0 %v355
    %418 = vmatpush1.msra.mxu0 %v354
    %419 = vmatprep.subr.mxu0 %v358
    %420 = vmatpush1.msra.mxu0 %v357
    %421 = vmatprep.subr.mxu0 %v361
    %422 = vmatpush1.msra.mxu0 %v360
    %423 = vmatprep.subr.mxu0 %v364
    %424 = vmatpush1.msra.mxu0 %v363
    %425 = vmatprep.subr.mxu0 %v367
    %426 = vmatpush1.msra.mxu0 %v366
    %427 = vmatprep.subr.mxu0 %v370
    %428 = vmatpush1.msra.mxu0 %v369
    %429 = vmatprep.subr.mxu0 %v373
    %430 = vmatpush1.msra.mxu0 %v372
    %431 = vmatprep.subr.mxu0 %v376
    %432 = vmatpush1.msra.mxu0 %v375
    %433 = vmatprep.subr.mxu0 %v379
    %434 = vmatpush1.msra.mxu0 %v378
    %435 = vmatprep.subr.mxu0 %v382
    %436 = vmatpush1.msra.mxu0 %v381
    %437 = vmatprep.subr.mxu0 %v385
    %438 = vmatpush1.msra.mxu0 %v384
    %439 = vmatprep.subr.mxu0 %v388
    %440 = vmatpush1.msra.mxu0 %v387
    %441 = vmatprep.subr.mxu0 %v391
    %442 = vmatpush1.msra.mxu0 %v390
    %443 = vmatprep.subr.mxu0 %v394
    %444 = vmatpush1.msra.mxu0 %v393
    %445 = vmatprep.subr.mxu0 0.0
    %446 = vmatpush1.msra.mxu0 0.0
    %447 = vmatprep.subr.mxu0 0.0
    %448 = vmatpush1.msra.mxu0 0.0
    %449 = vmatprep.subr.mxu0 0.0
    %450 = vmatpush1.msra.mxu0 0.0
    %451 = vmatprep.subr.mxu0 0.0
    %452 = vmatpush1.msra.mxu0 0.0
    %453 = vmatprep.subr.mxu0 0.0
    %454 = vmatpush1.msra.mxu0 0.0
    %455 = vmatprep.subr.mxu0 0.0
    %456 = vmatpush1.msra.mxu0 0.0
    %457 = vmatprep.subr.mxu0 0.0
    %458 = vmatpush1.msra.mxu0 0.0
    %459 = vmatprep.subr.mxu0 0.0
    %460 = vmatpush1.msra.mxu0 0.0
    %461 = vmatprep.subr.mxu0 0.0
    %462 = vmatpush1.msra.mxu0 0.0
    %463 = vmatprep.subr.mxu0 0.0
    %464 = vmatpush1.msra.mxu0 0.0
    %465 = vmatprep.subr.mxu0 0.0
    %466 = vmatpush1.msra.mxu0 0.0
    %467 = vmatprep.subr.mxu0 0.0
    %468 = vmatpush1.msra.mxu0 0.0
    %469 = vmatprep.subr.mxu0 0.0
    %470 = vmatpush1.msra.mxu0 0.0
    %471 = vmatprep.subr.mxu0 0.0
    %472 = vmatpush1.msra.mxu0 0.0
    %473 = vmatprep.subr.mxu0 0.0
    %474 = vmatpush1.msra.mxu0 0.0
    %475 = vmatprep.subr.mxu0 0.0
    %476 = vmatpush1.msra.mxu0 0.0
    %477 = vmatprep.mubr.f32.mxu0 0.0
    %478 = vmatmul.mubr.f32.gmra.mrb[0].mxu0 %v345
    %v479 = vpop.f32.mrb[0].mxu0
    %v480 = vadd.f32 %v401, %v479
    %v481 = vpop.f32.mrb[0].mxu0
    %v482 = vadd.f32 %v405, %v481
    %483 = vdwg.mxu0
    %484 = vmatprep.subr.mxu0 0.0
    %485 = vmatpush1.msra.mxu0 %v350
    %486 = vmatprep.subr.mxu0 0.0
    %487 = vmatpush1.msra.mxu0 %v353
    %488 = vmatprep.subr.mxu0 0.0
    %489 = vmatpush1.msra.mxu0 %v356
    %490 = vmatprep.subr.mxu0 0.0
    %491 = vmatpush1.msra.mxu0 %v359
    %492 = vmatprep.subr.mxu0 0.0
    %493 = vmatpush1.msra.mxu0 %v362
    %494 = vmatprep.subr.mxu0 0.0
    %495 = vmatpush1.msra.mxu0 %v365
    %496 = vmatprep.subr.mxu0 0.0
    %497 = vmatpush1.msra.mxu0 %v368
    %498 = vmatprep.subr.mxu0 0.0
    %499 = vmatpush1.msra.mxu0 %v371
    %500 = vmatprep.subr.mxu0 0.0
    %501 = vmatpush1.msra.mxu0 %v374
    %502 = vmatprep.subr.mxu0 0.0
    %503 = vmatpush1.msra.mxu0 %v377
    %504 = vmatprep.subr.mxu0 0.0
    %505 = vmatpush1.msra.mxu0 %v380
    %506 = vmatprep.subr.mxu0 0.0
    %507 = vmatpush1.msra.mxu0 %v383
    %508 = vmatprep.subr.mxu0 0.0
    %509 = vmatpush1.msra.mxu0 %v386
    %510 = vmatprep.subr.mxu0 0.0
    %511 = vmatpush1.msra.mxu0 %v389
    %512 = vmatprep.subr.mxu0 0.0
    %513 = vmatpush1.msra.mxu0 %v392
    %514 = vmatprep.subr.mxu0 0.0
    %515 = vmatpush1.msra.mxu0 %v395
    %516 = vmatprep.subr.mxu0 0.0
    %517 = vmatpush1.msra.mxu0 0.0
    %518 = vmatprep.subr.mxu0 0.0
    %519 = vmatpush1.msra.mxu0 0.0
    %520 = vmatprep.subr.mxu0 0.0
    %521 = vmatpush1.msra.mxu0 0.0
    %522 = vmatprep.subr.mxu0 0.0
    %523 = vmatpush1.msra.mxu0 0.0
    %524 = vmatprep.subr.mxu0 0.0
    %525 = vmatpush1.msra.mxu0 0.0
    %526 = vmatprep.subr.mxu0 0.0
    %527 = vmatpush1.msra.mxu0 0.0
    %528 = vmatprep.subr.mxu0 0.0
    %529 = vmatpush1.msra.mxu0 0.0
    %530 = vmatprep.subr.mxu0 0.0
    %531 = vmatpush1.msra.mxu0 0.0
    %532 = vmatprep.subr.mxu0 0.0
    %533 = vmatpush1.msra.mxu0 0.0
    %534 = vmatprep.subr.mxu0 0.0
    %535 = vmatpush1.msra.mxu0 0.0
    %536 = vmatprep.subr.mxu0 0.0
    %537 = vmatpush1.msra.mxu0 0.0
    %538 = vmatprep.subr.mxu0 0.0
    %539 = vmatpush1.msra.mxu0 0.0
    %540 = vmatprep.subr.mxu0 0.0
    %541 = vmatpush1.msra.mxu0 0.0
    %542 = vmatprep.subr.mxu0 0.0
    %543 = vmatpush1.msra.mxu0 0.0
    %544 = vmatprep.subr.mxu0 0.0
    %545 = vmatpush1.msra.mxu0 0.0
    %546 = vmatprep.subr.mxu0 0.0
    %547 = vmatpush1.msra.mxu0 0.0
    %548 = vmatprep.mubr.f32.mxu0 0.0
    %549 = vmatmul.mubr.f32.gmra.mrb[0].mxu0 %v345
    %v550 = vpop.f32.mrb[0].mxu0
    %v551 = vadd.f32 %v409, %v550
    %v552 = vpop.f32.mrb[0].mxu0
    %553 = vdwg.mxu0
    %v554 = vld [vmem:[#allocation7] sm:$0xff]
    %v555 = vld [vmem:[#allocation7 + $0x8] sm:$0xff]
    %v556 = vld [vmem:[#allocation7 + $0x10] sm:$0xff]
    %v557 = vld [vmem:[#allocation7 + $0x18] sm:$0xff]
    %v558 = vld [vmem:[#allocation7 + $0x20] sm:$0xff]
    %v559 = vld [vmem:[#allocation7 + $0x28] sm:$0xff]
    %v560 = vld [vmem:[#allocation7 + $0x30] sm:$0xff]
    %v561 = vld [vmem:[#allocation7 + $0x38] sm:$0xff]
    %v562 = vld [vmem:[#allocation7 + $0x40] sm:$0xff]
    %v563 = vld [vmem:[#allocation7 + $0x48] sm:$0xff]
    %v564 = vld [vmem:[#allocation7 + $0x50] sm:$0xff]
    %v565 = vld [vmem:[#allocation7 + $0x58] sm:$0xff]
    %v566 = vld [vmem:[#allocation7 + $0x60] sm:$0xff]
    %v567 = vld [vmem:[#allocation7 + $0x68] sm:$0xff]
    %v568 = vld [vmem:[#allocation7 + $0x70] sm:$0xff]
    %v569 = vld [vmem:[#allocation7 + $0x78] sm:$0xff]
    %v570 = vld [vmem:[#allocation7 + $0x80] sm:$0xff]
    %v571 = vld [vmem:[#allocation7 + $0x88] sm:$0xff]
    %v572 = vld [vmem:[#allocation7 + $0x90] sm:$0xff]
    %v573 = vld [vmem:[#allocation7 + $0x98] sm:$0xff]
    %v574 = vld [vmem:[#allocation7 + $0xa0] sm:$0xff]
    %v575 = vld [vmem:[#allocation7 + $0xa8] sm:$0xff]
    %v576 = vld [vmem:[#allocation7 + $0xb0] sm:$0xff]
    %v577 = vld [vmem:[#allocation7 + $0xb8] sm:$0xff]
    %v578 = vld [vmem:[#allocation7 + $0xc0] sm:$0xff]
    %v579 = vld [vmem:[#allocation7 + $0xc8] sm:$0xff]
    %v580 = vld [vmem:[#allocation7 + $0xd0] sm:$0xff]
    %v581 = vld [vmem:[#allocation7 + $0xd8] sm:$0xff]
    %v582 = vld [vmem:[#allocation7 + $0xe0] sm:$0xff]
    %v583 = vld [vmem:[#allocation7 + $0xe8] sm:$0xff]
    %v584 = vld [vmem:[#allocation7 + $0xf0] sm:$0xff]
    %v585 = vld [vmem:[#allocation7 + $0xf8] sm:$0xff]
    %v586 = vld [vmem:[#allocation7 + $0x100] sm:$0xff]
    %v587 = vld [vmem:[#allocation7 + $0x108] sm:$0xff]
    %v588 = vld [vmem:[#allocation7 + $0x110] sm:$0xff]
    %v589 = vld [vmem:[#allocation7 + $0x118] sm:$0xff]
    %v590 = vld [vmem:[#allocation7 + $0x120] sm:$0xff]
    %v591 = vld [vmem:[#allocation7 + $0x128] sm:$0xff]
    %v592 = vld [vmem:[#allocation7 + $0x130] sm:$0xff]
    %v593 = vld [vmem:[#allocation7 + $0x138] sm:$0xff]
    %v594 = vld [vmem:[#allocation7 + $0x140] sm:$0xff]
    %v595 = vld [vmem:[#allocation7 + $0x148] sm:$0xff]
    %v596 = vld [vmem:[#allocation7 + $0x150] sm:$0xff]
    %v597 = vld [vmem:[#allocation7 + $0x158] sm:$0xff]
    %v598 = vld [vmem:[#allocation7 + $0x160] sm:$0xff]
    %v599 = vld [vmem:[#allocation7 + $0x168] sm:$0xff]
    %v600 = vld [vmem:[#allocation7 + $0x170] sm:$0xff]
    %v601 = vld [vmem:[#allocation7 + $0x178] sm:$0xff]
    %v602 = vld [vmem:[%s9] sm:$0x7]
    %v604 = vlaneseq
    %v605 = vshrl.u32 %v604, 7
    %v606 = vsub.s32 0, %v605
    %v607 = vrot.slane %v602, %v606
    %v608 = vlaneseq
    %v609 = vshrl.u32 %v608, 7
    %v610 = vsub.s32 1, %v609
    %v611 = vrot.slane %v602, %v610
    %v612 = vlaneseq
    %v613 = vshrl.u32 %v612, 7
    %v614 = vsub.s32 2, %v613
    %v615 = vrot.slane %v602, %v614
    %619 = vmatprep.subr.mxu0 %v555
    %620 = vmatpush1.msra.mxu0 %v554
    %621 = vmatprep.subr.mxu0 %v558
    %622 = vmatpush1.msra.mxu0 %v557
    %623 = vmatprep.subr.mxu0 %v561
    %624 = vmatpush1.msra.mxu0 %v560
    %625 = vmatprep.subr.mxu0 %v564
    %626 = vmatpush1.msra.mxu0 %v563
    %627 = vmatprep.subr.mxu0 %v567
    %628 = vmatpush1.msra.mxu0 %v566
    %629 = vmatprep.subr.mxu0 %v570
    %630 = vmatpush1.msra.mxu0 %v569
    %631 = vmatprep.subr.mxu0 %v573
    %632 = vmatpush1.msra.mxu0 %v572
    %633 = vmatprep.subr.mxu0 %v576
    %634 = vmatpush1.msra.mxu0 %v575
    %635 = vmatprep.subr.mxu0 %v579
    %636 = vmatpush1.msra.mxu0 %v578
    %637 = vmatprep.subr.mxu0 %v582
    %638 = vmatpush1.msra.mxu0 %v581
    %639 = vmatprep.subr.mxu0 %v585
    %640 = vmatpush1.msra.mxu0 %v584
    %641 = vmatprep.subr.mxu0 %v588
    %642 = vmatpush1.msra.mxu0 %v587
    %643 = vmatprep.subr.mxu0 %v591
    %644 = vmatpush1.msra.mxu0 %v590
    %645 = vmatprep.subr.mxu0 %v594
    %646 = vmatpush1.msra.mxu0 %v593
    %647 = vmatprep.subr.mxu0 %v597
    %648 = vmatpush1.msra.mxu0 %v596
    %649 = vmatprep.subr.mxu0 %v600
    %650 = vmatpush1.msra.mxu0 %v599
    %651 = vmatprep.subr.mxu0 0.0
    %652 = vmatpush1.msra.mxu0 0.0
    %653 = vmatprep.subr.mxu0 0.0
    %654 = vmatpush1.msra.mxu0 0.0
    %655 = vmatprep.subr.mxu0 0.0
    %656 = vmatpush1.msra.mxu0 0.0
    %657 = vmatprep.subr.mxu0 0.0
    %658 = vmatpush1.msra.mxu0 0.0
    %659 = vmatprep.subr.mxu0 0.0
    %660 = vmatpush1.msra.mxu0 0.0
    %661 = vmatprep.subr.mxu0 0.0
    %662 = vmatpush1.msra.mxu0 0.0
    %663 = vmatprep.subr.mxu0 0.0
    %664 = vmatpush1.msra.mxu0 0.0
    %665 = vmatprep.subr.mxu0 0.0
    %666 = vmatpush1.msra.mxu0 0.0
    %667 = vmatprep.subr.mxu0 0.0
    %668 = vmatpush1.msra.mxu0 0.0
    %669 = vmatprep.subr.mxu0 0.0
    %670 = vmatpush1.msra.mxu0 0.0
    %671 = vmatprep.subr.mxu0 0.0
    %672 = vmatpush1.msra.mxu0 0.0
    %673 = vmatprep.subr.mxu0 0.0
    %674 = vmatpush1.msra.mxu0 0.0
    %675 = vmatprep.subr.mxu0 0.0
    %676 = vmatpush1.msra.mxu0 0.0
    %677 = vmatprep.subr.mxu0 0.0
    %678 = vmatpush1.msra.mxu0 0.0
    %679 = vmatprep.subr.mxu0 0.0
    %680 = vmatpush1.msra.mxu0 0.0
    %681 = vmatprep.subr.mxu0 0.0
    %682 = vmatpush1.msra.mxu0 0.0
    %683 = vmatprep.mubr.f32.mxu0 0.0
    %684 = vmatmul.mubr.f32.gmra.mrb[0].mxu0 %v347
    %v685 = vpop.f32.mrb[0].mxu0
    %v686 = vadd.f32 %v607, %v685
    %v687 = vpop.f32.mrb[0].mxu0
    %v688 = vadd.f32 %v611, %v687
    %689 = vdwg.mxu0
    %690 = vmatprep.subr.mxu0 0.0
    %691 = vmatpush1.msra.mxu0 %v556
    %692 = vmatprep.subr.mxu0 0.0
    %693 = vmatpush1.msra.mxu0 %v559
    %694 = vmatprep.subr.mxu0 0.0
    %695 = vmatpush1.msra.mxu0 %v562
    %696 = vmatprep.subr.mxu0 0.0
    %697 = vmatpush1.msra.mxu0 %v565
    %698 = vmatprep.subr.mxu0 0.0
    %699 = vmatpush1.msra.mxu0 %v568
    %700 = vmatprep.subr.mxu0 0.0
    %701 = vmatpush1.msra.mxu0 %v571
    %702 = vmatprep.subr.mxu0 0.0
    %703 = vmatpush1.msra.mxu0 %v574
    %704 = vmatprep.subr.mxu0 0.0
    %705 = vmatpush1.msra.mxu0 %v577
    %706 = vmatprep.subr.mxu0 0.0
    %707 = vmatpush1.msra.mxu0 %v580
    %708 = vmatprep.subr.mxu0 0.0
    %709 = vmatpush1.msra.mxu0 %v583
    %710 = vmatprep.subr.mxu0 0.0
    %711 = vmatpush1.msra.mxu0 %v586
    %712 = vmatprep.subr.mxu0 0.0
    %713 = vmatpush1.msra.mxu0 %v589
    %714 = vmatprep.subr.mxu0 0.0
    %715 = vmatpush1.msra.mxu0 %v592
    %716 = vmatprep.subr.mxu0 0.0
    %717 = vmatpush1.msra.mxu0 %v595
    %718 = vmatprep.subr.mxu0 0.0
    %719 = vmatpush1.msra.mxu0 %v598
    %720 = vmatprep.subr.mxu0 0.0
    %721 = vmatpush1.msra.mxu0 %v601
    %722 = vmatprep.subr.mxu0 0.0
    %723 = vmatpush1.msra.mxu0 0.0
    %724 = vmatprep.subr.mxu0 0.0
    %725 = vmatpush1.msra.mxu0 0.0
    %726 = vmatprep.subr.mxu0 0.0
    %727 = vmatpush1.msra.mxu0 0.0
    %728 = vmatprep.subr.mxu0 0.0
    %729 = vmatpush1.msra.mxu0 0.0
    %730 = vmatprep.subr.mxu0 0.0
    %731 = vmatpush1.msra.mxu0 0.0
    %732 = vmatprep.subr.mxu0 0.0
    %733 = vmatpush1.msra.mxu0 0.0
    %734 = vmatprep.subr.mxu0 0.0
    %735 = vmatpush1.msra.mxu0 0.0
    %736 = vmatprep.subr.mxu0 0.0
    %737 = vmatpush1.msra.mxu0 0.0
    %738 = vmatprep.subr.mxu0 0.0
    %739 = vmatpush1.msra.mxu0 0.0
    %740 = vmatprep.subr.mxu0 0.0
    %741 = vmatpush1.msra.mxu0 0.0
    %742 = vmatprep.subr.mxu0 0.0
    %743 = vmatpush1.msra.mxu0 0.0
    %744 = vmatprep.subr.mxu0 0.0
    %745 = vmatpush1.msra.mxu0 0.0
    %746 = vmatprep.subr.mxu0 0.0
    %747 = vmatpush1.msra.mxu0 0.0
    %748 = vmatprep.subr.mxu0 0.0
    %749 = vmatpush1.msra.mxu0 0.0
    %750 = vmatprep.subr.mxu0 0.0
    %751 = vmatpush1.msra.mxu0 0.0
    %752 = vmatprep.subr.mxu0 0.0
    %753 = vmatpush1.msra.mxu0 0.0
    %754 = vmatprep.mubr.f32.mxu0 0.0
    %755 = vmatmul.mubr.f32.gmra.mrb[0].mxu0 %v347
    %v756 = vpop.f32.mrb[0].mxu0
    %v757 = vadd.f32 %v615, %v756
    %v758 = vpop.f32.mrb[0].mxu0
    %759 = vdwg.mxu0
    %v760 = vadd.f32 %v480, %v686
    %v761 = vxor.u32 %v760, 2147483648
    %v762 = vmul.f32 %v761, 1.442695
    %v763 = vpow.pop %v762
    %v764 = vadd.f32 %v763, 1.0
    %v765 = vrcp.pop %v764
    %v766 = vmul.f32 1.0, %v765
    %v767 = vadd.f32 %v482, %v688
    %v768 = vxor.u32 %v767, 2147483648
    %v769 = vmul.f32 %v768, 1.442695
    %v770 = vpow.pop %v769
    %v771 = vadd.f32 %v770, 1.0
    %v772 = vrcp.pop %v771
    %v773 = vmul.f32 1.0, %v772
    %v774 = vmul.f32 %v766, %v757
    %v775 = vadd.f32 %v551, %v774
    %v776 = vtanh.pop %v775
    %v777 = vsub.f32 1.0, %v773
    %v778 = vmul.f32 %v777, %v776
    %v779 = vmul.f32 %v773, %v347
    %v780 = vadd.f32 %v778, %v779
    %781 = vst [vmem:[#allocation11] sm:$0xff] %v345
    %782 = vst [vmem:[%s346] sm:$0xff] %v780
    %v784 = vcombine.high %v780, %v780
    %v786 = vunpack.c.l.s4 1966171168
    %v787 = vunpack.c.0.s8 %v786
    %v788 = vlaneseq
    %v789 = vshrl.u32 %v788, 7
    %v790 = vsub.s32 %v787, %v789
    %v791 = vrot.slane %v780, %v790
    %v793 = vunpack.c.l.s4 1966171168
    %v794 = vunpack.c.0.s8 %v793
    %v795 = vlaneseq
    %v796 = vshrl.u32 %v795, 7
    %v797 = vsub.s32 %v794, %v796
    %v798 = vrot.slane %v784, %v797
    %v799 = vcombine.high %v791, %v791
    %v800 = vcombine.high %v798, %v798
    %v802 = vunpack.c.l.s4 1966171168
    %v803 = vunpack.c.0.s8 %v802
    %v804 = vlaneseq
    %v805 = vshrl.u32 %v804, 7
    %v806 = vsub.s32 %v803, %v805
    %v807 = vrot.slane %v791, %v806
    %v809 = vunpack.c.l.s4 1966171168
    %v810 = vunpack.c.0.s8 %v809
    %v811 = vlaneseq
    %v812 = vshrl.u32 %v811, 7
    %v813 = vsub.s32 %v810, %v812
    %v814 = vrot.slane %v798, %v813
    %v816 = vunpack.c.l.s4 1966171168
    %v817 = vunpack.c.0.s8 %v816
    %v818 = vlaneseq
    %v819 = vshrl.u32 %v818, 7
    %v820 = vsub.s32 %v817, %v819
    %v821 = vrot.slane %v799, %v820
    %v823 = vunpack.c.l.s4 1966171168
    %v824 = vunpack.c.0.s8 %v823
    %v825 = vlaneseq
    %v826 = vshrl.u32 %v825, 7
    %v827 = vsub.s32 %v824, %v826
    %v828 = vrot.slane %v800, %v827
    %v829 = vcombine.high %v807, %v807
    %v830 = vcombine.high %v814, %v814
    %v831 = vcombine.high %v821, %v821
    %v832 = vcombine.high %v828, %v828
    %v841 = vld [vmem:[%s3] sm:$0xff]
    %v842 = vld [vmem:[%s3 + $0x8] sm:$0xff]
    %v843 = vld [vmem:[%s3 + $0x10] sm:$0xff]
    %v844 = vld [vmem:[%s3 + $0x18] sm:$0xff]
    %v845 = vld [vmem:[%s3 + $0x20] sm:$0xff]
    %v846 = vld [vmem:[%s3 + $0x28] sm:$0xff]
    %v847 = vld [vmem:[%s3 + $0x30] sm:$0xff]
    %v848 = vld [vmem:[%s3 + $0x38] sm:$0xff]
    %v849 = vld [vmem:[%s3 + $0x40] sm:$0xff]
    %v850 = vld [vmem:[%s3 + $0x48] sm:$0xff]
    %v851 = vld [vmem:[%s3 + $0x50] sm:$0xff]
    %v852 = vld [vmem:[%s3 + $0x58] sm:$0xff]
    %v853 = vld [vmem:[%s3 + $0x60] sm:$0xff]
    %v854 = vld [vmem:[%s3 + $0x68] sm:$0xff]
    %v855 = vld [vmem:[%s3 + $0x70] sm:$0xff]
    %v856 = vld [vmem:[%s3 + $0x78] sm:$0xff]
    %v857 = vld [vmem:[%s3 + $0x80] sm:$0xff]
    %v858 = vld [vmem:[%s3 + $0x88] sm:$0xff]
    %v859 = vld [vmem:[%s3 + $0x90] sm:$0xff]
    %v860 = vld [vmem:[%s3 + $0x98] sm:$0xff]
    %v861 = vld [vmem:[%s3 + $0xa0] sm:$0xff]
    %v862 = vld [vmem:[%s3 + $0xa8] sm:$0xff]
    %v863 = vld [vmem:[%s3 + $0xb0] sm:$0xff]
    %v864 = vld [vmem:[%s3 + $0xb8] sm:$0xff]
    %v865 = vld [vmem:[%s3 + $0xc0] sm:$0xff]
    %v866 = vld [vmem:[%s3 + $0xc8] sm:$0xff]
    %v867 = vld [vmem:[%s3 + $0xd0] sm:$0xff]
    %v868 = vld [vmem:[%s3 + $0xd8] sm:$0xff]
    %v869 = vld [vmem:[%s3 + $0xe0] sm:$0xff]
    %v870 = vld [vmem:[%s3 + $0xe8] sm:$0xff]
    %v871 = vld [vmem:[%s3 + $0xf0] sm:$0xff]
    %v872 = vld [vmem:[%s3 + $0xf8] sm:$0xff]
    %v873 = vld [vmem:[%s3 + $0x100] sm:$0xff]
    %v874 = vld [vmem:[%s3 + $0x108] sm:$0xff]
    %v875 = vld [vmem:[%s3 + $0x110] sm:$0xff]
    %v876 = vld [vmem:[%s3 + $0x118] sm:$0xff]
    %v877 = vld [vmem:[%s3 + $0x120] sm:$0xff]
    %v878 = vld [vmem:[%s3 + $0x128] sm:$0xff]
    %v879 = vld [vmem:[%s3 + $0x130] sm:$0xff]
    %v880 = vld [vmem:[%s3 + $0x138] sm:$0xff]
    %v881 = vld [vmem:[%s3 + $0x140] sm:$0xff]
    %v882 = vld [vmem:[%s3 + $0x148] sm:$0xff]
    %v883 = vld [vmem:[%s3 + $0x150] sm:$0xff]
    %v884 = vld [vmem:[%s3 + $0x158] sm:$0xff]
    %v885 = vld [vmem:[%s3 + $0x160] sm:$0xff]
    %v886 = vld [vmem:[%s3 + $0x168] sm:$0xff]
    %v887 = vld [vmem:[%s3 + $0x170] sm:$0xff]
    %v888 = vld [vmem:[%s3 + $0x178] sm:$0xff]
    %v889 = vld [vmem:[%s3 + $0x180] sm:$0xff]
    %v890 = vld [vmem:[%s3 + $0x188] sm:$0xff]
    %v891 = vld [vmem:[%s3 + $0x190] sm:$0xff]
    %v892 = vld [vmem:[%s3 + $0x198] sm:$0xff]
    %v893 = vld [vmem:[%s3 + $0x1a0] sm:$0xff]
    %v894 = vld [vmem:[%s3 + $0x1a8] sm:$0xff]
    %v895 = vld [vmem:[%s3 + $0x1b0] sm:$0xff]
    %v896 = vld [vmem:[%s3 + $0x1b8] sm:$0xff]
    %v897 = vld [vmem:[%s3 + $0x1c0] sm:$0xff]
    %v898 = vld [vmem:[%s3 + $0x1c8] sm:$0xff]
    %v899 = vld [vmem:[%s3 + $0x1d0] sm:$0xff]
    %v900 = vld [vmem:[%s3 + $0x1d8] sm:$0xff]
    %v901 = vld [vmem:[%s3 + $0x1e0] sm:$0xff]
    %v902 = vld [vmem:[%s3 + $0x1e8] sm:$0xff]
    %v903 = vld [vmem:[%s3 + $0x1f0] sm:$0xff]
    %v904 = vld [vmem:[%s3 + $0x1f8] sm:$0xff]
    %v905 = vld [vmem:[%s3 + $0x200] sm:$0xff]
    %v906 = vld [vmem:[%s3 + $0x208] sm:$0xff]
    %v907 = vld [vmem:[%s3 + $0x210] sm:$0xff]
    %v908 = vld [vmem:[%s3 + $0x218] sm:$0xff]
    %v909 = vld [vmem:[%s3 + $0x220] sm:$0xff]
    %v910 = vld [vmem:[%s3 + $0x228] sm:$0xff]
    %v911 = vld [vmem:[%s3 + $0x230] sm:$0xff]
    %v912 = vld [vmem:[%s3 + $0x238] sm:$0xff]
    %v913 = vld [vmem:[%s3 + $0x240] sm:$0xff]
    %v914 = vld [vmem:[%s3 + $0x248] sm:$0xff]
    %v915 = vld [vmem:[%s3 + $0x250] sm:$0xff]
    %v916 = vld [vmem:[%s3 + $0x258] sm:$0xff]
    %v917 = vld [vmem:[%s3 + $0x260] sm:$0xff]
    %v918 = vld [vmem:[%s3 + $0x268] sm:$0xff]
    %v919 = vld [vmem:[%s3 + $0x270] sm:$0xff]
    %v920 = vld [vmem:[%s3 + $0x278] sm:$0xff]
    %v921 = vld [vmem:[%s3 + $0x280] sm:$0xff]
    %v922 = vld [vmem:[%s3 + $0x288] sm:$0xff]
    %v923 = vld [vmem:[%s3 + $0x290] sm:$0xff]
    %v924 = vld [vmem:[%s3 + $0x298] sm:$0xff]
    %v925 = vld [vmem:[%s3 + $0x2a0] sm:$0xff]
    %v926 = vld [vmem:[%s3 + $0x2a8] sm:$0xff]
    %v927 = vld [vmem:[%s3 + $0x2b0] sm:$0xff]
    %v928 = vld [vmem:[%s3 + $0x2b8] sm:$0xff]
    %v929 = vld [vmem:[%s3 + $0x2c0] sm:$0xff]
    %v930 = vld [vmem:[%s3 + $0x2c8] sm:$0xff]
    %v931 = vld [vmem:[%s3 + $0x2d0] sm:$0xff]
    %v932 = vld [vmem:[%s3 + $0x2d8] sm:$0xff]
    %v933 = vld [vmem:[%s3 + $0x2e0] sm:$0xff]
    %v934 = vld [vmem:[%s3 + $0x2e8] sm:$0xff]
    %v935 = vld [vmem:[%s3 + $0x2f0] sm:$0xff]
    %v936 = vld [vmem:[%s3 + $0x2f8] sm:$0xff]
    %v937 = vld [vmem:[%s3 + $0x300] sm:$0xff]
    %v938 = vld [vmem:[%s3 + $0x308] sm:$0xff]
    %v939 = vld [vmem:[%s3 + $0x310] sm:$0xff]
    %v940 = vld [vmem:[%s3 + $0x318] sm:$0xff]
    %v941 = vld [vmem:[%s3 + $0x320] sm:$0xff]
    %v942 = vld [vmem:[%s3 + $0x328] sm:$0xff]
    %v943 = vld [vmem:[%s3 + $0x330] sm:$0xff]
    %v944 = vld [vmem:[%s3 + $0x338] sm:$0xff]
    %v945 = vld [vmem:[%s3 + $0x340] sm:$0xff]
    %v946 = vld [vmem:[%s3 + $0x348] sm:$0xff]
    %v947 = vld [vmem:[%s3 + $0x350] sm:$0xff]
    %v948 = vld [vmem:[%s3 + $0x358] sm:$0xff]
    %v949 = vld [vmem:[%s3 + $0x360] sm:$0xff]
    %v950 = vld [vmem:[%s3 + $0x368] sm:$0xff]
    %v951 = vld [vmem:[%s3 + $0x370] sm:$0xff]
    %v952 = vld [vmem:[%s3 + $0x378] sm:$0xff]
    %v953 = vld [vmem:[%s3 + $0x380] sm:$0xff]
    %v954 = vld [vmem:[%s3 + $0x388] sm:$0xff]
    %v955 = vld [vmem:[%s3 + $0x390] sm:$0xff]
    %v956 = vld [vmem:[%s3 + $0x398] sm:$0xff]
    %v957 = vld [vmem:[%s3 + $0x3a0] sm:$0xff]
    %v958 = vld [vmem:[%s3 + $0x3a8] sm:$0xff]
    %v959 = vld [vmem:[%s3 + $0x3b0] sm:$0xff]
    %v960 = vld [vmem:[%s3 + $0x3b8] sm:$0xff]
    %v961 = vld [vmem:[%s3 + $0x3c0] sm:$0xff]
    %v962 = vld [vmem:[%s3 + $0x3c8] sm:$0xff]
    %v963 = vld [vmem:[%s3 + $0x3d0] sm:$0xff]
    %v964 = vld [vmem:[%s3 + $0x3d8] sm:$0xff]
    %v965 = vld [vmem:[%s3 + $0x3e0] sm:$0xff]
    %v966 = vld [vmem:[%s3 + $0x3e8] sm:$0xff]
    %v967 = vld [vmem:[%s3 + $0x3f0] sm:$0xff]
    %v968 = vld [vmem:[%s3 + $0x3f8] sm:$0xff]
    %969 = vmatprep.subr.mxu0 0.0
    %970 = vmatpush1.msra.mxu0 %v841
    %971 = vmatprep.subr.mxu0 0.0
    %972 = vmatpush1.msra.mxu0 %v842
    %973 = vmatprep.subr.mxu0 0.0
    %974 = vmatpush1.msra.mxu0 %v843
    %975 = vmatprep.subr.mxu0 0.0
    %976 = vmatpush1.msra.mxu0 %v844
    %977 = vmatprep.subr.mxu0 0.0
    %978 = vmatpush1.msra.mxu0 %v845
    %979 = vmatprep.subr.mxu0 0.0
    %980 = vmatpush1.msra.mxu0 %v846
    %981 = vmatprep.subr.mxu0 0.0
    %982 = vmatpush1.msra.mxu0 %v847
    %983 = vmatprep.subr.mxu0 0.0
    %984 = vmatpush1.msra.mxu0 %v848
    %985 = vmatprep.subr.mxu0 0.0
    %986 = vmatpush1.msra.mxu0 %v849
    %987 = vmatprep.subr.mxu0 0.0
    %988 = vmatpush1.msra.mxu0 %v850
    %989 = vmatprep.subr.mxu0 0.0
    %990 = vmatpush1.msra.mxu0 %v851
    %991 = vmatprep.subr.mxu0 0.0
    %992 = vmatpush1.msra.mxu0 %v852
    %993 = vmatprep.subr.mxu0 0.0
    %994 = vmatpush1.msra.mxu0 %v853
    %995 = vmatprep.subr.mxu0 0.0
    %996 = vmatpush1.msra.mxu0 %v854
    %997 = vmatprep.subr.mxu0 0.0
    %998 = vmatpush1.msra.mxu0 %v855
    %999 = vmatprep.subr.mxu0 0.0
    %1000 = vmatpush1.msra.mxu0 %v856
    %1001 = vmatprep.subr.mxu0 0.0
    %1002 = vmatpush1.msra.mxu0 0.0
    %1003 = vmatprep.subr.mxu0 0.0
    %1004 = vmatpush1.msra.mxu0 0.0
    %1005 = vmatprep.subr.mxu0 0.0
    %1006 = vmatpush1.msra.mxu0 0.0
    %1007 = vmatprep.subr.mxu0 0.0
    %1008 = vmatpush1.msra.mxu0 0.0
    %1009 = vmatprep.subr.mxu0 0.0
    %1010 = vmatpush1.msra.mxu0 0.0
    %1011 = vmatprep.subr.mxu0 0.0
    %1012 = vmatpush1.msra.mxu0 0.0
    %1013 = vmatprep.subr.mxu0 0.0
    %1014 = vmatpush1.msra.mxu0 0.0
    %1015 = vmatprep.subr.mxu0 0.0
    %1016 = vmatpush1.msra.mxu0 0.0
    %1017 = vmatprep.subr.mxu0 0.0
    %1018 = vmatpush1.msra.mxu0 0.0
    %1019 = vmatprep.subr.mxu0 0.0
    %1020 = vmatpush1.msra.mxu0 0.0
    %1021 = vmatprep.subr.mxu0 0.0
    %1022 = vmatpush1.msra.mxu0 0.0
    %1023 = vmatprep.subr.mxu0 0.0
    %1024 = vmatpush1.msra.mxu0 0.0
    %1025 = vmatprep.subr.mxu0 0.0
    %1026 = vmatpush1.msra.mxu0 0.0
    %1027 = vmatprep.subr.mxu0 0.0
    %1028 = vmatpush1.msra.mxu0 0.0
    %1029 = vmatprep.subr.mxu0 0.0
    %1030 = vmatpush1.msra.mxu0 0.0
    %1031 = vmatprep.subr.mxu0 0.0
    %1032 = vmatpush1.msra.mxu0 0.0
    %1033 = vmatprep.mubr.f32.mxu0 0.0
    %1034 = vmatmul.mubr.f32.gmra.mrb[0].mxu0 %v807
    %v1035 = vpop.f32.mrb[0].mxu0
    %v1036 = vadd.f32 0.0, %v1035
    %v1037 = vpop.f32.mrb[0].mxu0
    %1038 = vdwg.mxu0
    %1039 = vmatprep.subr.mxu0 0.0
    %1040 = vmatpush1.msra.mxu0 %v857
    %1041 = vmatprep.subr.mxu0 0.0
    %1042 = vmatpush1.msra.mxu0 %v858
    %1043 = vmatprep.subr.mxu0 0.0
    %1044 = vmatpush1.msra.mxu0 %v859
    %1045 = vmatprep.subr.mxu0 0.0
    %1046 = vmatpush1.msra.mxu0 %v860
    %1047 = vmatprep.subr.mxu0 0.0
    %1048 = vmatpush1.msra.mxu0 %v861
    %1049 = vmatprep.subr.mxu0 0.0
    %1050 = vmatpush1.msra.mxu0 %v862
    %1051 = vmatprep.subr.mxu0 0.0
    %1052 = vmatpush1.msra.mxu0 %v863
    %1053 = vmatprep.subr.mxu0 0.0
    %1054 = vmatpush1.msra.mxu0 %v864
    %1055 = vmatprep.subr.mxu0 0.0
    %1056 = vmatpush1.msra.mxu0 %v865
    %1057 = vmatprep.subr.mxu0 0.0
    %1058 = vmatpush1.msra.mxu0 %v866
    %1059 = vmatprep.subr.mxu0 0.0
    %1060 = vmatpush1.msra.mxu0 %v867
    %1061 = vmatprep.subr.mxu0 0.0
    %1062 = vmatpush1.msra.mxu0 %v868
    %1063 = vmatprep.subr.mxu0 0.0
    %1064 = vmatpush1.msra.mxu0 %v869
    %1065 = vmatprep.subr.mxu0 0.0
    %1066 = vmatpush1.msra.mxu0 %v870
    %1067 = vmatprep.subr.mxu0 0.0
    %1068 = vmatpush1.msra.mxu0 %v871
    %1069 = vmatprep.subr.mxu0 0.0
    %1070 = vmatpush1.msra.mxu0 %v872
    %1071 = vmatprep.subr.mxu0 0.0
    %1072 = vmatpush1.msra.mxu0 0.0
    %1073 = vmatprep.subr.mxu0 0.0
    %1074 = vmatpush1.msra.mxu0 0.0
    %1075 = vmatprep.subr.mxu0 0.0
    %1076 = vmatpush1.msra.mxu0 0.0
    %1077 = vmatprep.subr.mxu0 0.0
    %1078 = vmatpush1.msra.mxu0 0.0
    %1079 = vmatprep.subr.mxu0 0.0
    %1080 = vmatpush1.msra.mxu0 0.0
    %1081 = vmatprep.subr.mxu0 0.0
    %1082 = vmatpush1.msra.mxu0 0.0
    %1083 = vmatprep.subr.mxu0 0.0
    %1084 = vmatpush1.msra.mxu0 0.0
    %1085 = vmatprep.subr.mxu0 0.0
    %1086 = vmatpush1.msra.mxu0 0.0
    %1087 = vmatprep.subr.mxu0 0.0
    %1088 = vmatpush1.msra.mxu0 0.0
    %1089 = vmatprep.subr.mxu0 0.0
    %1090 = vmatpush1.msra.mxu0 0.0
    %1091 = vmatprep.subr.mxu0 0.0
    %1092 = vmatpush1.msra.mxu0 0.0
    %1093 = vmatprep.subr.mxu0 0.0
    %1094 = vmatpush1.msra.mxu0 0.0
    %1095 = vmatprep.subr.mxu0 0.0
    %1096 = vmatpush1.msra.mxu0 0.0
    %1097 = vmatprep.subr.mxu0 0.0
    %1098 = vmatpush1.msra.mxu0 0.0
    %1099 = vmatprep.subr.mxu0 0.0
    %1100 = vmatpush1.msra.mxu0 0.0
    %1101 = vmatprep.subr.mxu0 0.0
    %1102 = vmatpush1.msra.mxu0 0.0
    %1103 = vmatprep.mubr.f32.mxu0 0.0
    %1104 = vmatmul.mubr.f32.gmra.mrb[0].mxu0 %v821
    %v1105 = vpop.f32.mrb[0].mxu0
    %v1106 = vadd.f32 0.0, %v1105
    %v1107 = vpop.f32.mrb[0].mxu0
    %1108 = vdwg.mxu0
    %1109 = vmatprep.subr.mxu0 0.0
    %1110 = vmatpush1.msra.mxu0 %v873
    %1111 = vmatprep.subr.mxu0 0.0
    %1112 = vmatpush1.msra.mxu0 %v874
    %1113 = vmatprep.subr.mxu0 0.0
    %1114 = vmatpush1.msra.mxu0 %v875
    %1115 = vmatprep.subr.mxu0 0.0
    %1116 = vmatpush1.msra.mxu0 %v876
    %1117 = vmatprep.subr.mxu0 0.0
    %1118 = vmatpush1.msra.mxu0 %v877
    %1119 = vmatprep.subr.mxu0 0.0
    %1120 = vmatpush1.msra.mxu0 %v878
    %1121 = vmatprep.subr.mxu0 0.0
    %1122 = vmatpush1.msra.mxu0 %v879
    %1123 = vmatprep.subr.mxu0 0.0
    %1124 = vmatpush1.msra.mxu0 %v880
    %1125 = vmatprep.subr.mxu0 0.0
    %1126 = vmatpush1.msra.mxu0 %v881
    %1127 = vmatprep.subr.mxu0 0.0
    %1128 = vmatpush1.msra.mxu0 %v882
    %1129 = vmatprep.subr.mxu0 0.0
    %1130 = vmatpush1.msra.mxu0 %v883
    %1131 = vmatprep.subr.mxu0 0.0
    %1132 = vmatpush1.msra.mxu0 %v884
    %1133 = vmatprep.subr.mxu0 0.0
    %1134 = vmatpush1.msra.mxu0 %v885
    %1135 = vmatprep.subr.mxu0 0.0
    %1136 = vmatpush1.msra.mxu0 %v886
    %1137 = vmatprep.subr.mxu0 0.0
    %1138 = vmatpush1.msra.mxu0 %v887
    %1139 = vmatprep.subr.mxu0 0.0
    %1140 = vmatpush1.msra.mxu0 %v888
    %1141 = vmatprep.subr.mxu0 0.0
    %1142 = vmatpush1.msra.mxu0 0.0
    %1143 = vmatprep.subr.mxu0 0.0
    %1144 = vmatpush1.msra.mxu0 0.0
    %1145 = vmatprep.subr.mxu0 0.0
    %1146 = vmatpush1.msra.mxu0 0.0
    %1147 = vmatprep.subr.mxu0 0.0
    %1148 = vmatpush1.msra.mxu0 0.0
    %1149 = vmatprep.subr.mxu0 0.0
    %1150 = vmatpush1.msra.mxu0 0.0
    %1151 = vmatprep.subr.mxu0 0.0
    %1152 = vmatpush1.msra.mxu0 0.0
    %1153 = vmatprep.subr.mxu0 0.0
    %1154 = vmatpush1.msra.mxu0 0.0
    %1155 = vmatprep.subr.mxu0 0.0
    %1156 = vmatpush1.msra.mxu0 0.0
    %1157 = vmatprep.subr.mxu0 0.0
    %1158 = vmatpush1.msra.mxu0 0.0
    %1159 = vmatprep.subr.mxu0 0.0
    %1160 = vmatpush1.msra.mxu0 0.0
    %1161 = vmatprep.subr.mxu0 0.0
    %1162 = vmatpush1.msra.mxu0 0.0
    %1163 = vmatprep.subr.mxu0 0.0
    %1164 = vmatpush1.msra.mxu0 0.0
    %1165 = vmatprep.subr.mxu0 0.0
    %1166 = vmatpush1.msra.mxu0 0.0
    %1167 = vmatprep.subr.mxu0 0.0
    %1168 = vmatpush1.msra.mxu0 0.0
    %1169 = vmatprep.subr.mxu0 0.0
    %1170 = vmatpush1.msra.mxu0 0.0
    %1171 = vmatprep.subr.mxu0 0.0
    %1172 = vmatpush1.msra.mxu0 0.0
    %1173 = vmatprep.mubr.f32.mxu0 0.0
    %1174 = vmatmul.mubr.f32.gmra.mrb[0].mxu0 %v829
    %v1175 = vpop.f32.mrb[0].mxu0
    %v1176 = vadd.f32 0.0, %v1175
    %v1177 = vpop.f32.mrb[0].mxu0
    %1178 = vdwg.mxu0
    %1179 = vmatprep.subr.mxu0 0.0
    %1180 = vmatpush1.msra.mxu0 %v889
    %1181 = vmatprep.subr.mxu0 0.0
    %1182 = vmatpush1.msra.mxu0 %v890
    %1183 = vmatprep.subr.mxu0 0.0
    %1184 = vmatpush1.msra.mxu0 %v891
    %1185 = vmatprep.subr.mxu0 0.0
    %1186 = vmatpush1.msra.mxu0 %v892
    %1187 = vmatprep.subr.mxu0 0.0
    %1188 = vmatpush1.msra.mxu0 %v893
    %1189 = vmatprep.subr.mxu0 0.0
    %1190 = vmatpush1.msra.mxu0 %v894
    %1191 = vmatprep.subr.mxu0 0.0
    %1192 = vmatpush1.msra.mxu0 %v895
    %1193 = vmatprep.subr.mxu0 0.0
    %1194 = vmatpush1.msra.mxu0 %v896
    %1195 = vmatprep.subr.mxu0 0.0
    %1196 = vmatpush1.msra.mxu0 %v897
    %1197 = vmatprep.subr.mxu0 0.0
    %1198 = vmatpush1.msra.mxu0 %v898
    %1199 = vmatprep.subr.mxu0 0.0
    %1200 = vmatpush1.msra.mxu0 %v899
    %1201 = vmatprep.subr.mxu0 0.0
    %1202 = vmatpush1.msra.mxu0 %v900
    %1203 = vmatprep.subr.mxu0 0.0
    %1204 = vmatpush1.msra.mxu0 %v901
    %1205 = vmatprep.subr.mxu0 0.0
    %1206 = vmatpush1.msra.mxu0 %v902
    %1207 = vmatprep.subr.mxu0 0.0
    %1208 = vmatpush1.msra.mxu0 %v903
    %1209 = vmatprep.subr.mxu0 0.0
    %1210 = vmatpush1.msra.mxu0 %v904
    %1211 = vmatprep.subr.mxu0 0.0
    %1212 = vmatpush1.msra.mxu0 0.0
    %1213 = vmatprep.subr.mxu0 0.0
    %1214 = vmatpush1.msra.mxu0 0.0
    %1215 = vmatprep.subr.mxu0 0.0
    %1216 = vmatpush1.msra.mxu0 0.0
    %1217 = vmatprep.subr.mxu0 0.0
    %1218 = vmatpush1.msra.mxu0 0.0
    %1219 = vmatprep.subr.mxu0 0.0
    %1220 = vmatpush1.msra.mxu0 0.0
    %1221 = vmatprep.subr.mxu0 0.0
    %1222 = vmatpush1.msra.mxu0 0.0
    %1223 = vmatprep.subr.mxu0 0.0
    %1224 = vmatpush1.msra.mxu0 0.0
    %1225 = vmatprep.subr.mxu0 0.0
    %1226 = vmatpush1.msra.mxu0 0.0
    %1227 = vmatprep.subr.mxu0 0.0
    %1228 = vmatpush1.msra.mxu0 0.0
    %1229 = vmatprep.subr.mxu0 0.0
    %1230 = vmatpush1.msra.mxu0 0.0
    %1231 = vmatprep.subr.mxu0 0.0
    %1232 = vmatpush1.msra.mxu0 0.0
    %1233 = vmatprep.subr.mxu0 0.0
    %1234 = vmatpush1.msra.mxu0 0.0
    %1235 = vmatprep.subr.mxu0 0.0
    %1236 = vmatpush1.msra.mxu0 0.0
    %1237 = vmatprep.subr.mxu0 0.0
    %1238 = vmatpush1.msra.mxu0 0.0
    %1239 = vmatprep.subr.mxu0 0.0
    %1240 = vmatpush1.msra.mxu0 0.0
    %1241 = vmatprep.subr.mxu0 0.0
    %1242 = vmatpush1.msra.mxu0 0.0
    %1243 = vmatprep.mubr.f32.mxu0 0.0
    %1244 = vmatmul.mubr.f32.gmra.mrb[0].mxu0 %v831
    %v1245 = vpop.f32.mrb[0].mxu0
    %v1246 = vadd.f32 0.0, %v1245
    %v1247 = vpop.f32.mrb[0].mxu0
    %1248 = vdwg.mxu0
    %1249 = vmatprep.subr.mxu0 0.0
    %1250 = vmatpush1.msra.mxu0 %v905
    %1251 = vmatprep.subr.mxu0 0.0
    %1252 = vmatpush1.msra.mxu0 %v906
    %1253 = vmatprep.subr.mxu0 0.0
    %1254 = vmatpush1.msra.mxu0 %v907
    %1255 = vmatprep.subr.mxu0 0.0
    %1256 = vmatpush1.msra.mxu0 %v908
    %1257 = vmatprep.subr.mxu0 0.0
    %1258 = vmatpush1.msra.mxu0 %v909
    %1259 = vmatprep.subr.mxu0 0.0
    %1260 = vmatpush1.msra.mxu0 %v910
    %1261 = vmatprep.subr.mxu0 0.0
    %1262 = vmatpush1.msra.mxu0 %v911
    %1263 = vmatprep.subr.mxu0 0.0
    %1264 = vmatpush1.msra.mxu0 %v912
    %1265 = vmatprep.subr.mxu0 0.0
    %1266 = vmatpush1.msra.mxu0 %v913
    %1267 = vmatprep.subr.mxu0 0.0
    %1268 = vmatpush1.msra.mxu0 %v914
    %1269 = vmatprep.subr.mxu0 0.0
    %1270 = vmatpush1.msra.mxu0 %v915
    %1271 = vmatprep.subr.mxu0 0.0
    %1272 = vmatpush1.msra.mxu0 %v916
    %1273 = vmatprep.subr.mxu0 0.0
    %1274 = vmatpush1.msra.mxu0 %v917
    %1275 = vmatprep.subr.mxu0 0.0
    %1276 = vmatpush1.msra.mxu0 %v918
    %1277 = vmatprep.subr.mxu0 0.0
    %1278 = vmatpush1.msra.mxu0 %v919
    %1279 = vmatprep.subr.mxu0 0.0
    %1280 = vmatpush1.msra.mxu0 %v920
    %1281 = vmatprep.subr.mxu0 0.0
    %1282 = vmatpush1.msra.mxu0 0.0
    %1283 = vmatprep.subr.mxu0 0.0
    %1284 = vmatpush1.msra.mxu0 0.0
    %1285 = vmatprep.subr.mxu0 0.0
    %1286 = vmatpush1.msra.mxu0 0.0
    %1287 = vmatprep.subr.mxu0 0.0
    %1288 = vmatpush1.msra.mxu0 0.0
    %1289 = vmatprep.subr.mxu0 0.0
    %1290 = vmatpush1.msra.mxu0 0.0
    %1291 = vmatprep.subr.mxu0 0.0
    %1292 = vmatpush1.msra.mxu0 0.0
    %1293 = vmatprep.subr.mxu0 0.0
    %1294 = vmatpush1.msra.mxu0 0.0
    %1295 = vmatprep.subr.mxu0 0.0
    %1296 = vmatpush1.msra.mxu0 0.0
    %1297 = vmatprep.subr.mxu0 0.0
    %1298 = vmatpush1.msra.mxu0 0.0
    %1299 = vmatprep.subr.mxu0 0.0
    %1300 = vmatpush1.msra.mxu0 0.0
    %1301 = vmatprep.subr.mxu0 0.0
    %1302 = vmatpush1.msra.mxu0 0.0
    %1303 = vmatprep.subr.mxu0 0.0
    %1304 = vmatpush1.msra.mxu0 0.0
    %1305 = vmatprep.subr.mxu0 0.0
    %1306 = vmatpush1.msra.mxu0 0.0
    %1307 = vmatprep.subr.mxu0 0.0
    %1308 = vmatpush1.msra.mxu0 0.0
    %1309 = vmatprep.subr.mxu0 0.0
    %1310 = vmatpush1.msra.mxu0 0.0
    %1311 = vmatprep.subr.mxu0 0.0
    %1312 = vmatpush1.msra.mxu0 0.0
    %1313 = vmatprep.mubr.f32.mxu0 0.0
    %1314 = vmatmul.mubr.f32.gmra.mrb[0].mxu0 %v814
    %v1315 = vpop.f32.mrb[0].mxu0
    %v1316 = vadd.f32 0.0, %v1315
    %v1317 = vpop.f32.mrb[0].mxu0
    %1318 = vdwg.mxu0
    %1319 = vmatprep.subr.mxu0 0.0
    %1320 = vmatpush1.msra.mxu0 %v921
    %1321 = vmatprep.subr.mxu0 0.0
    %1322 = vmatpush1.msra.mxu0 %v922
    %1323 = vmatprep.subr.mxu0 0.0
    %1324 = vmatpush1.msra.mxu0 %v923
    %1325 = vmatprep.subr.mxu0 0.0
    %1326 = vmatpush1.msra.mxu0 %v924
    %1327 = vmatprep.subr.mxu0 0.0
    %1328 = vmatpush1.msra.mxu0 %v925
    %1329 = vmatprep.subr.mxu0 0.0
    %1330 = vmatpush1.msra.mxu0 %v926
    %1331 = vmatprep.subr.mxu0 0.0
    %1332 = vmatpush1.msra.mxu0 %v927
    %1333 = vmatprep.subr.mxu0 0.0
    %1334 = vmatpush1.msra.mxu0 %v928
    %1335 = vmatprep.subr.mxu0 0.0
    %1336 = vmatpush1.msra.mxu0 %v929
    %1337 = vmatprep.subr.mxu0 0.0
    %1338 = vmatpush1.msra.mxu0 %v930
    %1339 = vmatprep.subr.mxu0 0.0
    %1340 = vmatpush1.msra.mxu0 %v931
    %1341 = vmatprep.subr.mxu0 0.0
    %1342 = vmatpush1.msra.mxu0 %v932
    %1343 = vmatprep.subr.mxu0 0.0
    %1344 = vmatpush1.msra.mxu0 %v933
    %1345 = vmatprep.subr.mxu0 0.0
    %1346 = vmatpush1.msra.mxu0 %v934
    %1347 = vmatprep.subr.mxu0 0.0
    %1348 = vmatpush1.msra.mxu0 %v935
    %1349 = vmatprep.subr.mxu0 0.0
    %1350 = vmatpush1.msra.mxu0 %v936
    %1351 = vmatprep.subr.mxu0 0.0
    %1352 = vmatpush1.msra.mxu0 0.0
    %1353 = vmatprep.subr.mxu0 0.0
    %1354 = vmatpush1.msra.mxu0 0.0
    %1355 = vmatprep.subr.mxu0 0.0
    %1356 = vmatpush1.msra.mxu0 0.0
    %1357 = vmatprep.subr.mxu0 0.0
    %1358 = vmatpush1.msra.mxu0 0.0
    %1359 = vmatprep.subr.mxu0 0.0
    %1360 = vmatpush1.msra.mxu0 0.0
    %1361 = vmatprep.subr.mxu0 0.0
    %1362 = vmatpush1.msra.mxu0 0.0
    %1363 = vmatprep.subr.mxu0 0.0
    %1364 = vmatpush1.msra.mxu0 0.0
    %1365 = vmatprep.subr.mxu0 0.0
    %1366 = vmatpush1.msra.mxu0 0.0
    %1367 = vmatprep.subr.mxu0 0.0
    %1368 = vmatpush1.msra.mxu0 0.0
    %1369 = vmatprep.subr.mxu0 0.0
    %1370 = vmatpush1.msra.mxu0 0.0
    %1371 = vmatprep.subr.mxu0 0.0
    %1372 = vmatpush1.msra.mxu0 0.0
    %1373 = vmatprep.subr.mxu0 0.0
    %1374 = vmatpush1.msra.mxu0 0.0
    %1375 = vmatprep.subr.mxu0 0.0
    %1376 = vmatpush1.msra.mxu0 0.0
    %1377 = vmatprep.subr.mxu0 0.0
    %1378 = vmatpush1.msra.mxu0 0.0
    %1379 = vmatprep.subr.mxu0 0.0
    %1380 = vmatpush1.msra.mxu0 0.0
    %1381 = vmatprep.subr.mxu0 0.0
    %1382 = vmatpush1.msra.mxu0 0.0
    %1383 = vmatprep.mubr.f32.mxu0 0.0
    %1384 = vmatmul.mubr.f32.gmra.mrb[0].mxu0 %v828
    %v1385 = vpop.f32.mrb[0].mxu0
    %v1386 = vadd.f32 0.0, %v1385
    %v1387 = vpop.f32.mrb[0].mxu0
    %1388 = vdwg.mxu0
    %1389 = vmatprep.subr.mxu0 0.0
    %1390 = vmatpush1.msra.mxu0 %v937
    %1391 = vmatprep.subr.mxu0 0.0
    %1392 = vmatpush1.msra.mxu0 %v938
    %1393 = vmatprep.subr.mxu0 0.0
    %1394 = vmatpush1.msra.mxu0 %v939
    %1395 = vmatprep.subr.mxu0 0.0
    %1396 = vmatpush1.msra.mxu0 %v940
    %1397 = vmatprep.subr.mxu0 0.0
    %1398 = vmatpush1.msra.mxu0 %v941
    %1399 = vmatprep.subr.mxu0 0.0
    %1400 = vmatpush1.msra.mxu0 %v942
    %1401 = vmatprep.subr.mxu0 0.0
    %1402 = vmatpush1.msra.mxu0 %v943
    %1403 = vmatprep.subr.mxu0 0.0
    %1404 = vmatpush1.msra.mxu0 %v944
    %1405 = vmatprep.subr.mxu0 0.0
    %1406 = vmatpush1.msra.mxu0 %v945
    %1407 = vmatprep.subr.mxu0 0.0
    %1408 = vmatpush1.msra.mxu0 %v946
    %1409 = vmatprep.subr.mxu0 0.0
    %1410 = vmatpush1.msra.mxu0 %v947
    %1411 = vmatprep.subr.mxu0 0.0
    %1412 = vmatpush1.msra.mxu0 %v948
    %1413 = vmatprep.subr.mxu0 0.0
    %1414 = vmatpush1.msra.mxu0 %v949
    %1415 = vmatprep.subr.mxu0 0.0
    %1416 = vmatpush1.msra.mxu0 %v950
    %1417 = vmatprep.subr.mxu0 0.0
    %1418 = vmatpush1.msra.mxu0 %v951
    %1419 = vmatprep.subr.mxu0 0.0
    %1420 = vmatpush1.msra.mxu0 %v952
    %1421 = vmatprep.subr.mxu0 0.0
    %1422 = vmatpush1.msra.mxu0 0.0
    %1423 = vmatprep.subr.mxu0 0.0
    %1424 = vmatpush1.msra.mxu0 0.0
    %1425 = vmatprep.subr.mxu0 0.0
    %1426 = vmatpush1.msra.mxu0 0.0
    %1427 = vmatprep.subr.mxu0 0.0
    %1428 = vmatpush1.msra.mxu0 0.0
    %1429 = vmatprep.subr.mxu0 0.0
    %1430 = vmatpush1.msra.mxu0 0.0
    %1431 = vmatprep.subr.mxu0 0.0
    %1432 = vmatpush1.msra.mxu0 0.0
    %1433 = vmatprep.subr.mxu0 0.0
    %1434 = vmatpush1.msra.mxu0 0.0
    %1435 = vmatprep.subr.mxu0 0.0
    %1436 = vmatpush1.msra.mxu0 0.0
    %1437 = vmatprep.subr.mxu0 0.0
    %1438 = vmatpush1.msra.mxu0 0.0
    %1439 = vmatprep.subr.mxu0 0.0
    %1440 = vmatpush1.msra.mxu0 0.0
    %1441 = vmatprep.subr.mxu0 0.0
    %1442 = vmatpush1.msra.mxu0 0.0
    %1443 = vmatprep.subr.mxu0 0.0
    %1444 = vmatpush1.msra.mxu0 0.0
    %1445 = vmatprep.subr.mxu0 0.0
    %1446 = vmatpush1.msra.mxu0 0.0
    %1447 = vmatprep.subr.mxu0 0.0
    %1448 = vmatpush1.msra.mxu0 0.0
    %1449 = vmatprep.subr.mxu0 0.0
    %1450 = vmatpush1.msra.mxu0 0.0
    %1451 = vmatprep.subr.mxu0 0.0
    %1452 = vmatpush1.msra.mxu0 0.0
    %1453 = vmatprep.mubr.f32.mxu0 0.0
    %1454 = vmatmul.mubr.f32.gmra.mrb[0].mxu0 %v830
    %v1455 = vpop.f32.mrb[0].mxu0
    %v1456 = vadd.f32 0.0, %v1455
    %v1457 = vpop.f32.mrb[0].mxu0
    %1458 = vdwg.mxu0
    %1459 = vmatprep.subr.mxu0 0.0
    %1460 = vmatpush1.msra.mxu0 %v953
    %1461 = vmatprep.subr.mxu0 0.0
    %1462 = vmatpush1.msra.mxu0 %v954
    %1463 = vmatprep.subr.mxu0 0.0
    %1464 = vmatpush1.msra.mxu0 %v955
    %1465 = vmatprep.subr.mxu0 0.0
    %1466 = vmatpush1.msra.mxu0 %v956
    %1467 = vmatprep.subr.mxu0 0.0
    %1468 = vmatpush1.msra.mxu0 %v957
    %1469 = vmatprep.subr.mxu0 0.0
    %1470 = vmatpush1.msra.mxu0 %v958
    %1471 = vmatprep.subr.mxu0 0.0
    %1472 = vmatpush1.msra.mxu0 %v959
    %1473 = vmatprep.subr.mxu0 0.0
    %1474 = vmatpush1.msra.mxu0 %v960
    %1475 = vmatprep.subr.mxu0 0.0
    %1476 = vmatpush1.msra.mxu0 %v961
    %1477 = vmatprep.subr.mxu0 0.0
    %1478 = vmatpush1.msra.mxu0 %v962
    %1479 = vmatprep.subr.mxu0 0.0
    %1480 = vmatpush1.msra.mxu0 %v963
    %1481 = vmatprep.subr.mxu0 0.0
    %1482 = vmatpush1.msra.mxu0 %v964
    %1483 = vmatprep.subr.mxu0 0.0
    %1484 = vmatpush1.msra.mxu0 %v965
    %1485 = vmatprep.subr.mxu0 0.0
    %1486 = vmatpush1.msra.mxu0 %v966
    %1487 = vmatprep.subr.mxu0 0.0
    %1488 = vmatpush1.msra.mxu0 %v967
    %1489 = vmatprep.subr.mxu0 0.0
    %1490 = vmatpush1.msra.mxu0 %v968
    %1491 = vmatprep.subr.mxu0 0.0
    %1492 = vmatpush1.msra.mxu0 0.0
    %1493 = vmatprep.subr.mxu0 0.0
    %1494 = vmatpush1.msra.mxu0 0.0
    %1495 = vmatprep.subr.mxu0 0.0
    %1496 = vmatpush1.msra.mxu0 0.0
    %1497 = vmatprep.subr.mxu0 0.0
    %1498 = vmatpush1.msra.mxu0 0.0
    %1499 = vmatprep.subr.mxu0 0.0
    %1500 = vmatpush1.msra.mxu0 0.0
    %1501 = vmatprep.subr.mxu0 0.0
    %1502 = vmatpush1.msra.mxu0 0.0
    %1503 = vmatprep.subr.mxu0 0.0
    %1504 = vmatpush1.msra.mxu0 0.0
    %1505 = vmatprep.subr.mxu0 0.0
    %1506 = vmatpush1.msra.mxu0 0.0
    %1507 = vmatprep.subr.mxu0 0.0
    %1508 = vmatpush1.msra.mxu0 0.0
    %1509 = vmatprep.subr.mxu0 0.0
    %1510 = vmatpush1.msra.mxu0 0.0
    %1511 = vmatprep.subr.mxu0 0.0
    %1512 = vmatpush1.msra.mxu0 0.0
    %1513 = vmatprep.subr.mxu0 0.0
    %1514 = vmatpush1.msra.mxu0 0.0
    %1515 = vmatprep.subr.mxu0 0.0
    %1516 = vmatpush1.msra.mxu0 0.0
    %1517 = vmatprep.subr.mxu0 0.0
    %1518 = vmatpush1.msra.mxu0 0.0
    %1519 = vmatprep.subr.mxu0 0.0
    %1520 = vmatpush1.msra.mxu0 0.0
    %1521 = vmatprep.subr.mxu0 0.0
    %1522 = vmatpush1.msra.mxu0 0.0
    %1523 = vmatprep.mubr.f32.mxu0 0.0
    %1524 = vmatmul.mubr.f32.gmra.mrb[0].mxu0 %v832
    %v1525 = vpop.f32.mrb[0].mxu0
    %v1526 = vadd.f32 0.0, %v1525
    %v1527 = vpop.f32.mrb[0].mxu0
    %1528 = vdwg.mxu0
    %vm1529 = vcmask 57344
    %v1530 = vsel %vm1529, %v1036, -inf
    %1531 = vmax.xlane.f32.xlu0 %v1530
    %v1532 = vpop.xlane.xlu0 %1531
    %v1533 = vsel %vm1529, %v1106, -inf
    %1534 = vmax.xlane.f32.xlu0 %v1533
    %v1535 = vpop.xlane.xlu0 %1534
    %v1536 = vsel %vm1529, %v1176, -inf
    %1537 = vmax.xlane.f32.xlu0 %v1536
    %v1538 = vpop.xlane.xlu0 %1537
    %v1539 = vsel %vm1529, %v1246, -inf
    %1540 = vmax.xlane.f32.xlu0 %v1539
    %v1541 = vpop.xlane.xlu0 %1540
    %v1542 = vsel %vm1529, %v1316, -inf
    %1543 = vmax.xlane.f32.xlu0 %v1542
    %v1544 = vpop.xlane.xlu0 %1543
    %v1545 = vsel %vm1529, %v1386, -inf
    %1546 = vmax.xlane.f32.xlu0 %v1545
    %v1547 = vpop.xlane.xlu0 %1546
    %v1548 = vsel %vm1529, %v1456, -inf
    %1549 = vmax.xlane.f32.xlu0 %v1548
    %v1550 = vpop.xlane.xlu0 %1549
    %v1551 = vsel %vm1529, %v1526, -inf
    %1552 = vmax.xlane.f32.xlu0 %v1551
    %v1553 = vpop.xlane.xlu0 %1552
    %v1554 = vsub.f32 %v1036, %v1532
    %v1555 = vsub.f32 %v1106, %v1535
    %v1556 = vsub.f32 %v1176, %v1538
    %v1557 = vsub.f32 %v1246, %v1541
    %v1558 = vsub.f32 %v1316, %v1544
    %v1559 = vsub.f32 %v1386, %v1547
    %v1560 = vsub.f32 %v1456, %v1550
    %v1561 = vsub.f32 %v1526, %v1553
    %v1562 = vmul.f32 %v1554, 1.442695
    %v1563 = vpow.pop %v1562
    %v1564 = vmul.f32 %v1555, 1.442695
    %v1565 = vpow.pop %v1564
    %v1566 = vmul.f32 %v1556, 1.442695
    %v1567 = vpow.pop %v1566
    %v1568 = vmul.f32 %v1557, 1.442695
    %v1569 = vpow.pop %v1568
    %v1570 = vmul.f32 %v1558, 1.442695
    %v1571 = vpow.pop %v1570
    %v1572 = vmul.f32 %v1559, 1.442695
    %v1573 = vpow.pop %v1572
    %v1574 = vmul.f32 %v1560, 1.442695
    %v1575 = vpow.pop %v1574
    %v1576 = vmul.f32 %v1561, 1.442695
    %v1577 = vpow.pop %v1576
    %v1578 = vsel %vm1529, %v1563, 0.0
    %1579 = vadd.xlane.f32.xlu0 %v1578
    %v1580 = vpop.xlane.xlu0 %1579
    %v1581 = vsel %vm1529, %v1565, 0.0
    %1582 = vadd.xlane.f32.xlu0 %v1581
    %v1583 = vpop.xlane.xlu0 %1582
    %v1584 = vsel %vm1529, %v1567, 0.0
    %1585 = vadd.xlane.f32.xlu0 %v1584
    %v1586 = vpop.xlane.xlu0 %1585
    %v1587 = vsel %vm1529, %v1569, 0.0
    %1588 = vadd.xlane.f32.xlu0 %v1587
    %v1589 = vpop.xlane.xlu0 %1588
    %v1590 = vsel %vm1529, %v1571, 0.0
    %1591 = vadd.xlane.f32.xlu0 %v1590
    %v1592 = vpop.xlane.xlu0 %1591
    %v1593 = vsel %vm1529, %v1573, 0.0
    %1594 = vadd.xlane.f32.xlu0 %v1593
    %v1595 = vpop.xlane.xlu0 %1594
    %v1596 = vsel %vm1529, %v1575, 0.0
    %1597 = vadd.xlane.f32.xlu0 %v1596
    %v1598 = vpop.xlane.xlu0 %1597
    %v1599 = vsel %vm1529, %v1577, 0.0
    %1600 = vadd.xlane.f32.xlu0 %v1599
    %v1601 = vpop.xlane.xlu0 %1600
    %v1602 = vrcp.pop %v1580
    %v1603 = vrcp.pop %v1583
    %v1604 = vrcp.pop %v1586
    %v1605 = vrcp.pop %v1589
    %v1606 = vrcp.pop %v1592
    %v1607 = vrcp.pop %v1595
    %v1608 = vrcp.pop %v1598
    %v1609 = vrcp.pop %v1601
    %v1610 = vmul.f32 %v1563, %v1602
    %v1611 = vmul.f32 %v1565, %v1603
    %v1612 = vmul.f32 %v1567, %v1604
    %v1613 = vmul.f32 %v1569, %v1605
    %v1614 = vmul.f32 %v1571, %v1606
    %v1615 = vmul.f32 %v1573, %v1607
    %v1616 = vmul.f32 %v1575, %v1608
    %v1617 = vmul.f32 %v1577, %v1609
    %v1618 = vld [vmem:[%s2] sm:$0xff]
    %v1619 = vld [vmem:[%s2 + $0x8] sm:$0xff]
    %v1620 = vld [vmem:[%s2 + $0x10] sm:$0xff]
    %v1621 = vld [vmem:[%s2 + $0x18] sm:$0xff]
    %v1622 = vld [vmem:[%s2 + $0x20] sm:$0xff]
    %v1623 = vld [vmem:[%s2 + $0x28] sm:$0xff]
    %v1624 = vld [vmem:[%s2 + $0x30] sm:$0xff]
    %v1625 = vld [vmem:[%s2 + $0x38] sm:$0xff]
    %vm1626 = vcmask 64512
    %v1628 = vsel %vm1626, %v1610, 0
    %1630 = vmatprep.subr.mxu0 0.0
    %1631 = vmatpush1.msra.mxu0 %v1618
    %1632 = vmatprep.subr.mxu0 0.0
    %1633 = vmatpush1.msra.mxu0 0.0
    %1634 = vmatprep.subr.mxu0 0.0
    %1635 = vmatpush1.msra.mxu0 0.0
    %1636 = vmatprep.subr.mxu0 0.0
    %1637 = vmatpush1.msra.mxu0 0.0
    %1638 = vmatprep.subr.mxu0 0.0
    %1639 = vmatpush1.msra.mxu0 0.0
    %1640 = vmatprep.subr.mxu0 0.0
    %1641 = vmatpush1.msra.mxu0 0.0
    %1642 = vmatprep.subr.mxu0 0.0
    %1643 = vmatpush1.msra.mxu0 0.0
    %1644 = vmatprep.subr.mxu0 0.0
    %1645 = vmatpush1.msra.mxu0 0.0
    %1646 = vmatprep.subr.mxu0 0.0
    %1647 = vmatpush1.msra.mxu0 0.0
    %1648 = vmatprep.subr.mxu0 0.0
    %1649 = vmatpush1.msra.mxu0 0.0
    %1650 = vmatprep.subr.mxu0 0.0
    %1651 = vmatpush1.msra.mxu0 0.0
    %1652 = vmatprep.subr.mxu0 0.0
    %1653 = vmatpush1.msra.mxu0 0.0
    %1654 = vmatprep.subr.mxu0 0.0
    %1655 = vmatpush1.msra.mxu0 0.0
    %1656 = vmatprep.subr.mxu0 0.0
    %1657 = vmatpush1.msra.mxu0 0.0
    %1658 = vmatprep.subr.mxu0 0.0
    %1659 = vmatpush1.msra.mxu0 0.0
    %1660 = vmatprep.subr.mxu0 0.0
    %1661 = vmatpush1.msra.mxu0 0.0
    %1662 = vmatprep.subr.mxu0 0.0
    %1663 = vmatpush1.msra.mxu0 0.0
    %1664 = vmatprep.subr.mxu0 0.0
    %1665 = vmatpush1.msra.mxu0 0.0
    %1666 = vmatprep.subr.mxu0 0.0
    %1667 = vmatpush1.msra.mxu0 0.0
    %1668 = vmatprep.subr.mxu0 0.0
    %1669 = vmatpush1.msra.mxu0 0.0
    %1670 = vmatprep.subr.mxu0 0.0
    %1671 = vmatpush1.msra.mxu0 0.0
    %1672 = vmatprep.subr.mxu0 0.0
    %1673 = vmatpush1.msra.mxu0 0.0
    %1674 = vmatprep.subr.mxu0 0.0
    %1675 = vmatpush1.msra.mxu0 0.0
    %1676 = vmatprep.subr.mxu0 0.0
    %1677 = vmatpush1.msra.mxu0 0.0
    %1678 = vmatprep.subr.mxu0 0.0
    %1679 = vmatpush1.msra.mxu0 0.0
    %1680 = vmatprep.subr.mxu0 0.0
    %1681 = vmatpush1.msra.mxu0 0.0
    %1682 = vmatprep.subr.mxu0 0.0
    %1683 = vmatpush1.msra.mxu0 0.0
    %1684 = vmatprep.subr.mxu0 0.0
    %1685 = vmatpush1.msra.mxu0 0.0
    %1686 = vmatprep.subr.mxu0 0.0
    %1687 = vmatpush1.msra.mxu0 0.0
    %1688 = vmatprep.subr.mxu0 0.0
    %1689 = vmatpush1.msra.mxu0 0.0
    %1690 = vmatprep.subr.mxu0 0.0
    %1691 = vmatpush1.msra.mxu0 0.0
    %1692 = vmatprep.subr.mxu0 0.0
    %1693 = vmatpush1.msra.mxu0 0.0
    %1694 = vmatprep.mubr.f32.mxu0 0.0
    %1695 = vmatmul.mubr.f32.gmra.mrb[0].mxu0 %v1628
    %v1696 = vpop.f32.mrb[0].mxu0
    %v1697 = vadd.f32 0.0, %v1696
    %v1698 = vpop.f32.mrb[0].mxu0
    %1699 = vdwg.mxu0
    %v1701 = vsel %vm1626, %v1611, 0
    %1703 = vmatprep.subr.mxu0 0.0
    %1704 = vmatpush1.msra.mxu0 %v1619
    %1705 = vmatprep.subr.mxu0 0.0
    %1706 = vmatpush1.msra.mxu0 0.0
    %1707 = vmatprep.subr.mxu0 0.0
    %1708 = vmatpush1.msra.mxu0 0.0
    %1709 = vmatprep.subr.mxu0 0.0
    %1710 = vmatpush1.msra.mxu0 0.0
    %1711 = vmatprep.subr.mxu0 0.0
    %1712 = vmatpush1.msra.mxu0 0.0
    %1713 = vmatprep.subr.mxu0 0.0
    %1714 = vmatpush1.msra.mxu0 0.0
    %1715 = vmatprep.subr.mxu0 0.0
    %1716 = vmatpush1.msra.mxu0 0.0
    %1717 = vmatprep.subr.mxu0 0.0
    %1718 = vmatpush1.msra.mxu0 0.0
    %1719 = vmatprep.subr.mxu0 0.0
    %1720 = vmatpush1.msra.mxu0 0.0
    %1721 = vmatprep.subr.mxu0 0.0
    %1722 = vmatpush1.msra.mxu0 0.0
    %1723 = vmatprep.subr.mxu0 0.0
    %1724 = vmatpush1.msra.mxu0 0.0
    %1725 = vmatprep.subr.mxu0 0.0
    %1726 = vmatpush1.msra.mxu0 0.0
    %1727 = vmatprep.subr.mxu0 0.0
    %1728 = vmatpush1.msra.mxu0 0.0
    %1729 = vmatprep.subr.mxu0 0.0
    %1730 = vmatpush1.msra.mxu0 0.0
    %1731 = vmatprep.subr.mxu0 0.0
    %1732 = vmatpush1.msra.mxu0 0.0
    %1733 = vmatprep.subr.mxu0 0.0
    %1734 = vmatpush1.msra.mxu0 0.0
    %1735 = vmatprep.subr.mxu0 0.0
    %1736 = vmatpush1.msra.mxu0 0.0
    %1737 = vmatprep.subr.mxu0 0.0
    %1738 = vmatpush1.msra.mxu0 0.0
    %1739 = vmatprep.subr.mxu0 0.0
    %1740 = vmatpush1.msra.mxu0 0.0
    %1741 = vmatprep.subr.mxu0 0.0
    %1742 = vmatpush1.msra.mxu0 0.0
    %1743 = vmatprep.subr.mxu0 0.0
    %1744 = vmatpush1.msra.mxu0 0.0
    %1745 = vmatprep.subr.mxu0 0.0
    %1746 = vmatpush1.msra.mxu0 0.0
    %1747 = vmatprep.subr.mxu0 0.0
    %1748 = vmatpush1.msra.mxu0 0.0
    %1749 = vmatprep.subr.mxu0 0.0
    %1750 = vmatpush1.msra.mxu0 0.0
    %1751 = vmatprep.subr.mxu0 0.0
    %1752 = vmatpush1.msra.mxu0 0.0
    %1753 = vmatprep.subr.mxu0 0.0
    %1754 = vmatpush1.msra.mxu0 0.0
    %1755 = vmatprep.subr.mxu0 0.0
    %1756 = vmatpush1.msra.mxu0 0.0
    %1757 = vmatprep.subr.mxu0 0.0
    %1758 = vmatpush1.msra.mxu0 0.0
    %1759 = vmatprep.subr.mxu0 0.0
    %1760 = vmatpush1.msra.mxu0 0.0
    %1761 = vmatprep.subr.mxu0 0.0
    %1762 = vmatpush1.msra.mxu0 0.0
    %1763 = vmatprep.subr.mxu0 0.0
    %1764 = vmatpush1.msra.mxu0 0.0
    %1765 = vmatprep.subr.mxu0 0.0
    %1766 = vmatpush1.msra.mxu0 0.0
    %1767 = vmatprep.mubr.f32.mxu0 0.0
    %1768 = vmatmul.mubr.f32.gmra.mrb[0].mxu0 %v1701
    %v1769 = vpop.f32.mrb[0].mxu0
    %v1770 = vadd.f32 0.0, %v1769
    %v1771 = vpop.f32.mrb[0].mxu0
    %1772 = vdwg.mxu0
    %v1774 = vsel %vm1626, %v1612, 0
    %1776 = vmatprep.subr.mxu0 0.0
    %1777 = vmatpush1.msra.mxu0 %v1620
    %1778 = vmatprep.subr.mxu0 0.0
    %1779 = vmatpush1.msra.mxu0 0.0
    %1780 = vmatprep.subr.mxu0 0.0
    %1781 = vmatpush1.msra.mxu0 0.0
    %1782 = vmatprep.subr.mxu0 0.0
    %1783 = vmatpush1.msra.mxu0 0.0
    %1784 = vmatprep.subr.mxu0 0.0
    %1785 = vmatpush1.msra.mxu0 0.0
    %1786 = vmatprep.subr.mxu0 0.0
    %1787 = vmatpush1.msra.mxu0 0.0
    %1788 = vmatprep.subr.mxu0 0.0
    %1789 = vmatpush1.msra.mxu0 0.0
    %1790 = vmatprep.subr.mxu0 0.0
    %1791 = vmatpush1.msra.mxu0 0.0
    %1792 = vmatprep.subr.mxu0 0.0
    %1793 = vmatpush1.msra.mxu0 0.0
    %1794 = vmatprep.subr.mxu0 0.0
    %1795 = vmatpush1.msra.mxu0 0.0
    %1796 = vmatprep.subr.mxu0 0.0
    %1797 = vmatpush1.msra.mxu0 0.0
    %1798 = vmatprep.subr.mxu0 0.0
    %1799 = vmatpush1.msra.mxu0 0.0
    %1800 = vmatprep.subr.mxu0 0.0
    %1801 = vmatpush1.msra.mxu0 0.0
    %1802 = vmatprep.subr.mxu0 0.0
    %1803 = vmatpush1.msra.mxu0 0.0
    %1804 = vmatprep.subr.mxu0 0.0
    %1805 = vmatpush1.msra.mxu0 0.0
    %1806 = vmatprep.subr.mxu0 0.0
    %1807 = vmatpush1.msra.mxu0 0.0
    %1808 = vmatprep.subr.mxu0 0.0
    %1809 = vmatpush1.msra.mxu0 0.0
    %1810 = vmatprep.subr.mxu0 0.0
    %1811 = vmatpush1.msra.mxu0 0.0
    %1812 = vmatprep.subr.mxu0 0.0
    %1813 = vmatpush1.msra.mxu0 0.0
    %1814 = vmatprep.subr.mxu0 0.0
    %1815 = vmatpush1.msra.mxu0 0.0
    %1816 = vmatprep.subr.mxu0 0.0
    %1817 = vmatpush1.msra.mxu0 0.0
    %1818 = vmatprep.subr.mxu0 0.0
    %1819 = vmatpush1.msra.mxu0 0.0
    %1820 = vmatprep.subr.mxu0 0.0
    %1821 = vmatpush1.msra.mxu0 0.0
    %1822 = vmatprep.subr.mxu0 0.0
    %1823 = vmatpush1.msra.mxu0 0.0
    %1824 = vmatprep.subr.mxu0 0.0
    %1825 = vmatpush1.msra.mxu0 0.0
    %1826 = vmatprep.subr.mxu0 0.0
    %1827 = vmatpush1.msra.mxu0 0.0
    %1828 = vmatprep.subr.mxu0 0.0
    %1829 = vmatpush1.msra.mxu0 0.0
    %1830 = vmatprep.subr.mxu0 0.0
    %1831 = vmatpush1.msra.mxu0 0.0
    %1832 = vmatprep.subr.mxu0 0.0
    %1833 = vmatpush1.msra.mxu0 0.0
    %1834 = vmatprep.subr.mxu0 0.0
    %1835 = vmatpush1.msra.mxu0 0.0
    %1836 = vmatprep.subr.mxu0 0.0
    %1837 = vmatpush1.msra.mxu0 0.0
    %1838 = vmatprep.subr.mxu0 0.0
    %1839 = vmatpush1.msra.mxu0 0.0
    %1840 = vmatprep.mubr.f32.mxu0 0.0
    %1841 = vmatmul.mubr.f32.gmra.mrb[0].mxu0 %v1774
    %v1842 = vpop.f32.mrb[0].mxu0
    %v1843 = vadd.f32 0.0, %v1842
    %v1844 = vpop.f32.mrb[0].mxu0
    %1845 = vdwg.mxu0
    %v1847 = vsel %vm1626, %v1613, 0
    %1849 = vmatprep.subr.mxu0 0.0
    %1850 = vmatpush1.msra.mxu0 %v1621
    %1851 = vmatprep.subr.mxu0 0.0
    %1852 = vmatpush1.msra.mxu0 0.0
    %1853 = vmatprep.subr.mxu0 0.0
    %1854 = vmatpush1.msra.mxu0 0.0
    %1855 = vmatprep.subr.mxu0 0.0
    %1856 = vmatpush1.msra.mxu0 0.0
    %1857 = vmatprep.subr.mxu0 0.0
    %1858 = vmatpush1.msra.mxu0 0.0
    %1859 = vmatprep.subr.mxu0 0.0
    %1860 = vmatpush1.msra.mxu0 0.0
    %1861 = vmatprep.subr.mxu0 0.0
    %1862 = vmatpush1.msra.mxu0 0.0
    %1863 = vmatprep.subr.mxu0 0.0
    %1864 = vmatpush1.msra.mxu0 0.0
    %1865 = vmatprep.subr.mxu0 0.0
    %1866 = vmatpush1.msra.mxu0 0.0
    %1867 = vmatprep.subr.mxu0 0.0
    %1868 = vmatpush1.msra.mxu0 0.0
    %1869 = vmatprep.subr.mxu0 0.0
    %1870 = vmatpush1.msra.mxu0 0.0
    %1871 = vmatprep.subr.mxu0 0.0
    %1872 = vmatpush1.msra.mxu0 0.0
    %1873 = vmatprep.subr.mxu0 0.0
    %1874 = vmatpush1.msra.mxu0 0.0
    %1875 = vmatprep.subr.mxu0 0.0
    %1876 = vmatpush1.msra.mxu0 0.0
    %1877 = vmatprep.subr.mxu0 0.0
    %1878 = vmatpush1.msra.mxu0 0.0
    %1879 = vmatprep.subr.mxu0 0.0
    %1880 = vmatpush1.msra.mxu0 0.0
    %1881 = vmatprep.subr.mxu0 0.0
    %1882 = vmatpush1.msra.mxu0 0.0
    %1883 = vmatprep.subr.mxu0 0.0
    %1884 = vmatpush1.msra.mxu0 0.0
    %1885 = vmatprep.subr.mxu0 0.0
    %1886 = vmatpush1.msra.mxu0 0.0
    %1887 = vmatprep.subr.mxu0 0.0
    %1888 = vmatpush1.msra.mxu0 0.0
    %1889 = vmatprep.subr.mxu0 0.0
    %1890 = vmatpush1.msra.mxu0 0.0
    %1891 = vmatprep.subr.mxu0 0.0
    %1892 = vmatpush1.msra.mxu0 0.0
    %1893 = vmatprep.subr.mxu0 0.0
    %1894 = vmatpush1.msra.mxu0 0.0
    %1895 = vmatprep.subr.mxu0 0.0
    %1896 = vmatpush1.msra.mxu0 0.0
    %1897 = vmatprep.subr.mxu0 0.0
    %1898 = vmatpush1.msra.mxu0 0.0
    %1899 = vmatprep.subr.mxu0 0.0
    %1900 = vmatpush1.msra.mxu0 0.0
    %1901 = vmatprep.subr.mxu0 0.0
    %1902 = vmatpush1.msra.mxu0 0.0
    %1903 = vmatprep.subr.mxu0 0.0
    %1904 = vmatpush1.msra.mxu0 0.0
    %1905 = vmatprep.subr.mxu0 0.0
    %1906 = vmatpush1.msra.mxu0 0.0
    %1907 = vmatprep.subr.mxu0 0.0
    %1908 = vmatpush1.msra.mxu0 0.0
    %1909 = vmatprep.subr.mxu0 0.0
    %1910 = vmatpush1.msra.mxu0 0.0
    %1911 = vmatprep.subr.mxu0 0.0
    %1912 = vmatpush1.msra.mxu0 0.0
    %1913 = vmatprep.mubr.f32.mxu0 0.0
    %1914 = vmatmul.mubr.f32.gmra.mrb[0].mxu0 %v1847
    %v1915 = vpop.f32.mrb[0].mxu0
    %v1916 = vadd.f32 0.0, %v1915
    %v1917 = vpop.f32.mrb[0].mxu0
    %1918 = vdwg.mxu0
    %v1920 = vsel %vm1626, %v1614, 0
    %1922 = vmatprep.subr.mxu0 0.0
    %1923 = vmatpush1.msra.mxu0 %v1622
    %1924 = vmatprep.subr.mxu0 0.0
    %1925 = vmatpush1.msra.mxu0 0.0
    %1926 = vmatprep.subr.mxu0 0.0
    %1927 = vmatpush1.msra.mxu0 0.0
    %1928 = vmatprep.subr.mxu0 0.0
    %1929 = vmatpush1.msra.mxu0 0.0
    %1930 = vmatprep.subr.mxu0 0.0
    %1931 = vmatpush1.msra.mxu0 0.0
    %1932 = vmatprep.subr.mxu0 0.0
    %1933 = vmatpush1.msra.mxu0 0.0
    %1934 = vmatprep.subr.mxu0 0.0
    %1935 = vmatpush1.msra.mxu0 0.0
    %1936 = vmatprep.subr.mxu0 0.0
    %1937 = vmatpush1.msra.mxu0 0.0
    %1938 = vmatprep.subr.mxu0 0.0
    %1939 = vmatpush1.msra.mxu0 0.0
    %1940 = vmatprep.subr.mxu0 0.0
    %1941 = vmatpush1.msra.mxu0 0.0
    %1942 = vmatprep.subr.mxu0 0.0
    %1943 = vmatpush1.msra.mxu0 0.0
    %1944 = vmatprep.subr.mxu0 0.0
    %1945 = vmatpush1.msra.mxu0 0.0
    %1946 = vmatprep.subr.mxu0 0.0
    %1947 = vmatpush1.msra.mxu0 0.0
    %1948 = vmatprep.subr.mxu0 0.0
    %1949 = vmatpush1.msra.mxu0 0.0
    %1950 = vmatprep.subr.mxu0 0.0
    %1951 = vmatpush1.msra.mxu0 0.0
    %1952 = vmatprep.subr.mxu0 0.0
    %1953 = vmatpush1.msra.mxu0 0.0
    %1954 = vmatprep.subr.mxu0 0.0
    %1955 = vmatpush1.msra.mxu0 0.0
    %1956 = vmatprep.subr.mxu0 0.0
    %1957 = vmatpush1.msra.mxu0 0.0
    %1958 = vmatprep.subr.mxu0 0.0
    %1959 = vmatpush1.msra.mxu0 0.0
    %1960 = vmatprep.subr.mxu0 0.0
    %1961 = vmatpush1.msra.mxu0 0.0
    %1962 = vmatprep.subr.mxu0 0.0
    %1963 = vmatpush1.msra.mxu0 0.0
    %1964 = vmatprep.subr.mxu0 0.0
    %1965 = vmatpush1.msra.mxu0 0.0
    %1966 = vmatprep.subr.mxu0 0.0
    %1967 = vmatpush1.msra.mxu0 0.0
    %1968 = vmatprep.subr.mxu0 0.0
    %1969 = vmatpush1.msra.mxu0 0.0
    %1970 = vmatprep.subr.mxu0 0.0
    %1971 = vmatpush1.msra.mxu0 0.0
    %1972 = vmatprep.subr.mxu0 0.0
    %1973 = vmatpush1.msra.mxu0 0.0
    %1974 = vmatprep.subr.mxu0 0.0
    %1975 = vmatpush1.msra.mxu0 0.0
    %1976 = vmatprep.subr.mxu0 0.0
    %1977 = vmatpush1.msra.mxu0 0.0
    %1978 = vmatprep.subr.mxu0 0.0
    %1979 = vmatpush1.msra.mxu0 0.0
    %1980 = vmatprep.subr.mxu0 0.0
    %1981 = vmatpush1.msra.mxu0 0.0
    %1982 = vmatprep.subr.mxu0 0.0
    %1983 = vmatpush1.msra.mxu0 0.0
    %1984 = vmatprep.subr.mxu0 0.0
    %1985 = vmatpush1.msra.mxu0 0.0
    %1986 = vmatprep.mubr.f32.mxu0 0.0
    %1987 = vmatmul.mubr.f32.gmra.mrb[0].mxu0 %v1920
    %v1988 = vpop.f32.mrb[0].mxu0
    %v1989 = vadd.f32 0.0, %v1988
    %v1990 = vpop.f32.mrb[0].mxu0
    %1991 = vdwg.mxu0
    %v1993 = vsel %vm1626, %v1615, 0
    %1995 = vmatprep.subr.mxu0 0.0
    %1996 = vmatpush1.msra.mxu0 %v1623
    %1997 = vmatprep.subr.mxu0 0.0
    %1998 = vmatpush1.msra.mxu0 0.0
    %1999 = vmatprep.subr.mxu0 0.0
    %2000 = vmatpush1.msra.mxu0 0.0
    %2001 = vmatprep.subr.mxu0 0.0
    %2002 = vmatpush1.msra.mxu0 0.0
    %2003 = vmatprep.subr.mxu0 0.0
    %2004 = vmatpush1.msra.mxu0 0.0
    %2005 = vmatprep.subr.mxu0 0.0
    %2006 = vmatpush1.msra.mxu0 0.0
    %2007 = vmatprep.subr.mxu0 0.0
    %2008 = vmatpush1.msra.mxu0 0.0
    %2009 = vmatprep.subr.mxu0 0.0
    %2010 = vmatpush1.msra.mxu0 0.0
    %2011 = vmatprep.subr.mxu0 0.0
    %2012 = vmatpush1.msra.mxu0 0.0
    %2013 = vmatprep.subr.mxu0 0.0
    %2014 = vmatpush1.msra.mxu0 0.0
    %2015 = vmatprep.subr.mxu0 0.0
    %2016 = vmatpush1.msra.mxu0 0.0
    %2017 = vmatprep.subr.mxu0 0.0
    %2018 = vmatpush1.msra.mxu0 0.0
    %2019 = vmatprep.subr.mxu0 0.0
    %2020 = vmatpush1.msra.mxu0 0.0
    %2021 = vmatprep.subr.mxu0 0.0
    %2022 = vmatpush1.msra.mxu0 0.0
    %2023 = vmatprep.subr.mxu0 0.0
    %2024 = vmatpush1.msra.mxu0 0.0
    %2025 = vmatprep.subr.mxu0 0.0
    %2026 = vmatpush1.msra.mxu0 0.0
    %2027 = vmatprep.subr.mxu0 0.0
    %2028 = vmatpush1.msra.mxu0 0.0
    %2029 = vmatprep.subr.mxu0 0.0
    %2030 = vmatpush1.msra.mxu0 0.0
    %2031 = vmatprep.subr.mxu0 0.0
    %2032 = vmatpush1.msra.mxu0 0.0
    %2033 = vmatprep.subr.mxu0 0.0
    %2034 = vmatpush1.msra.mxu0 0.0
    %2035 = vmatprep.subr.mxu0 0.0
    %2036 = vmatpush1.msra.mxu0 0.0
    %2037 = vmatprep.subr.mxu0 0.0
    %2038 = vmatpush1.msra.mxu0 0.0
    %2039 = vmatprep.subr.mxu0 0.0
    %2040 = vmatpush1.msra.mxu0 0.0
    %2041 = vmatprep.subr.mxu0 0.0
    %2042 = vmatpush1.msra.mxu0 0.0
    %2043 = vmatprep.subr.mxu0 0.0
    %2044 = vmatpush1.msra.mxu0 0.0
    %2045 = vmatprep.subr.mxu0 0.0
    %2046 = vmatpush1.msra.mxu0 0.0
    %2047 = vmatprep.subr.mxu0 0.0
    %2048 = vmatpush1.msra.mxu0 0.0
    %2049 = vmatprep.subr.mxu0 0.0
    %2050 = vmatpush1.msra.mxu0 0.0
    %2051 = vmatprep.subr.mxu0 0.0
    %2052 = vmatpush1.msra.mxu0 0.0
    %2053 = vmatprep.subr.mxu0 0.0
    %2054 = vmatpush1.msra.mxu0 0.0
    %2055 = vmatprep.subr.mxu0 0.0
    %2056 = vmatpush1.msra.mxu0 0.0
    %2057 = vmatprep.subr.mxu0 0.0
    %2058 = vmatpush1.msra.mxu0 0.0
    %2059 = vmatprep.mubr.f32.mxu0 0.0
    %2060 = vmatmul.mubr.f32.gmra.mrb[0].mxu0 %v1993
    %v2061 = vpop.f32.mrb[0].mxu0
    %v2062 = vadd.f32 0.0, %v2061
    %v2063 = vpop.f32.mrb[0].mxu0
    %2064 = vdwg.mxu0
    %v2066 = vsel %vm1626, %v1616, 0
    %2068 = vmatprep.subr.mxu0 0.0
    %2069 = vmatpush1.msra.mxu0 %v1624
    %2070 = vmatprep.subr.mxu0 0.0
    %2071 = vmatpush1.msra.mxu0 0.0
    %2072 = vmatprep.subr.mxu0 0.0
    %2073 = vmatpush1.msra.mxu0 0.0
    %2074 = vmatprep.subr.mxu0 0.0
    %2075 = vmatpush1.msra.mxu0 0.0
    %2076 = vmatprep.subr.mxu0 0.0
    %2077 = vmatpush1.msra.mxu0 0.0
    %2078 = vmatprep.subr.mxu0 0.0
    %2079 = vmatpush1.msra.mxu0 0.0
    %2080 = vmatprep.subr.mxu0 0.0
    %2081 = vmatpush1.msra.mxu0 0.0
    %2082 = vmatprep.subr.mxu0 0.0
    %2083 = vmatpush1.msra.mxu0 0.0
    %2084 = vmatprep.subr.mxu0 0.0
    %2085 = vmatpush1.msra.mxu0 0.0
    %2086 = vmatprep.subr.mxu0 0.0
    %2087 = vmatpush1.msra.mxu0 0.0
    %2088 = vmatprep.subr.mxu0 0.0
    %2089 = vmatpush1.msra.mxu0 0.0
    %2090 = vmatprep.subr.mxu0 0.0
    %2091 = vmatpush1.msra.mxu0 0.0
    %2092 = vmatprep.subr.mxu0 0.0
    %2093 = vmatpush1.msra.mxu0 0.0
    %2094 = vmatprep.subr.mxu0 0.0
    %2095 = vmatpush1.msra.mxu0 0.0
    %2096 = vmatprep.subr.mxu0 0.0
    %2097 = vmatpush1.msra.mxu0 0.0
    %2098 = vmatprep.subr.mxu0 0.0
    %2099 = vmatpush1.msra.mxu0 0.0
    %2100 = vmatprep.subr.mxu0 0.0
    %2101 = vmatpush1.msra.mxu0 0.0
    %2102 = vmatprep.subr.mxu0 0.0
    %2103 = vmatpush1.msra.mxu0 0.0
    %2104 = vmatprep.subr.mxu0 0.0
    %2105 = vmatpush1.msra.mxu0 0.0
    %2106 = vmatprep.subr.mxu0 0.0
    %2107 = vmatpush1.msra.mxu0 0.0
    %2108 = vmatprep.subr.mxu0 0.0
    %2109 = vmatpush1.msra.mxu0 0.0
    %2110 = vmatprep.subr.mxu0 0.0
    %2111 = vmatpush1.msra.mxu0 0.0
    %2112 = vmatprep.subr.mxu0 0.0
    %2113 = vmatpush1.msra.mxu0 0.0
    %2114 = vmatprep.subr.mxu0 0.0
    %2115 = vmatpush1.msra.mxu0 0.0
    %2116 = vmatprep.subr.mxu0 0.0
    %2117 = vmatpush1.msra.mxu0 0.0
    %2118 = vmatprep.subr.mxu0 0.0
    %2119 = vmatpush1.msra.mxu0 0.0
    %2120 = vmatprep.subr.mxu0 0.0
    %2121 = vmatpush1.msra.mxu0 0.0
    %2122 = vmatprep.subr.mxu0 0.0
    %2123 = vmatpush1.msra.mxu0 0.0
    %2124 = vmatprep.subr.mxu0 0.0
    %2125 = vmatpush1.msra.mxu0 0.0
    %2126 = vmatprep.subr.mxu0 0.0
    %2127 = vmatpush1.msra.mxu0 0.0
    %2128 = vmatprep.subr.mxu0 0.0
    %2129 = vmatpush1.msra.mxu0 0.0
    %2130 = vmatprep.subr.mxu0 0.0
    %2131 = vmatpush1.msra.mxu0 0.0
    %2132 = vmatprep.mubr.f32.mxu0 0.0
    %2133 = vmatmul.mubr.f32.gmra.mrb[0].mxu0 %v2066
    %v2134 = vpop.f32.mrb[0].mxu0
    %v2135 = vadd.f32 0.0, %v2134
    %v2136 = vpop.f32.mrb[0].mxu0
    %2137 = vdwg.mxu0
    %v2139 = vsel %vm1626, %v1617, 0
    %2141 = vmatprep.subr.mxu0 0.0
    %2142 = vmatpush1.msra.mxu0 %v1625
    %2143 = vmatprep.subr.mxu0 0.0
    %2144 = vmatpush1.msra.mxu0 0.0
    %2145 = vmatprep.subr.mxu0 0.0
    %2146 = vmatpush1.msra.mxu0 0.0
    %2147 = vmatprep.subr.mxu0 0.0
    %2148 = vmatpush1.msra.mxu0 0.0
    %2149 = vmatprep.subr.mxu0 0.0
    %2150 = vmatpush1.msra.mxu0 0.0
    %2151 = vmatprep.subr.mxu0 0.0
    %2152 = vmatpush1.msra.mxu0 0.0
    %2153 = vmatprep.subr.mxu0 0.0
    %2154 = vmatpush1.msra.mxu0 0.0
    %2155 = vmatprep.subr.mxu0 0.0
    %2156 = vmatpush1.msra.mxu0 0.0
    %2157 = vmatprep.subr.mxu0 0.0
    %2158 = vmatpush1.msra.mxu0 0.0
    %2159 = vmatprep.subr.mxu0 0.0
    %2160 = vmatpush1.msra.mxu0 0.0
    %2161 = vmatprep.subr.mxu0 0.0
    %2162 = vmatpush1.msra.mxu0 0.0
    %2163 = vmatprep.subr.mxu0 0.0
    %2164 = vmatpush1.msra.mxu0 0.0
    %2165 = vmatprep.subr.mxu0 0.0
    %2166 = vmatpush1.msra.mxu0 0.0
    %2167 = vmatprep.subr.mxu0 0.0
    %2168 = vmatpush1.msra.mxu0 0.0
    %2169 = vmatprep.subr.mxu0 0.0
    %2170 = vmatpush1.msra.mxu0 0.0
    %2171 = vmatprep.subr.mxu0 0.0
    %2172 = vmatpush1.msra.mxu0 0.0
    %2173 = vmatprep.subr.mxu0 0.0
    %2174 = vmatpush1.msra.mxu0 0.0
    %2175 = vmatprep.subr.mxu0 0.0
    %2176 = vmatpush1.msra.mxu0 0.0
    %2177 = vmatprep.subr.mxu0 0.0
    %2178 = vmatpush1.msra.mxu0 0.0
    %2179 = vmatprep.subr.mxu0 0.0
    %2180 = vmatpush1.msra.mxu0 0.0
    %2181 = vmatprep.subr.mxu0 0.0
    %2182 = vmatpush1.msra.mxu0 0.0
    %2183 = vmatprep.subr.mxu0 0.0
    %2184 = vmatpush1.msra.mxu0 0.0
    %2185 = vmatprep.subr.mxu0 0.0
    %2186 = vmatpush1.msra.mxu0 0.0
    %2187 = vmatprep.subr.mxu0 0.0
    %2188 = vmatpush1.msra.mxu0 0.0
    %2189 = vmatprep.subr.mxu0 0.0
    %2190 = vmatpush1.msra.mxu0 0.0
    %2191 = vmatprep.subr.mxu0 0.0
    %2192 = vmatpush1.msra.mxu0 0.0
    %2193 = vmatprep.subr.mxu0 0.0
    %2194 = vmatpush1.msra.mxu0 0.0
    %2195 = vmatprep.subr.mxu0 0.0
    %2196 = vmatpush1.msra.mxu0 0.0
    %2197 = vmatprep.subr.mxu0 0.0
    %2198 = vmatpush1.msra.mxu0 0.0
    %2199 = vmatprep.subr.mxu0 0.0
    %2200 = vmatpush1.msra.mxu0 0.0
    %2201 = vmatprep.subr.mxu0 0.0
    %2202 = vmatpush1.msra.mxu0 0.0
    %2203 = vmatprep.subr.mxu0 0.0
    %2204 = vmatpush1.msra.mxu0 0.0
    %2205 = vmatprep.mubr.f32.mxu0 0.0
    %2206 = vmatmul.mubr.f32.gmra.mrb[0].mxu0 %v2139
    %v2207 = vpop.f32.mrb[0].mxu0
    %v2208 = vadd.f32 0.0, %v2207
    %v2209 = vpop.f32.mrb[0].mxu0
    %2210 = vdwg.mxu0
    %v2211 = vld [vmem:[%s10] sm:$0xff]
    %v2212 = vld [vmem:[%s10 + $0x8] sm:$0xff]
    %v2213 = vld [vmem:[%s10 + $0x10] sm:$0xff]
    %v2214 = vld [vmem:[%s10 + $0x18] sm:$0xff]
    %v2215 = vld [vmem:[%s10 + $0x20] sm:$0xff]
    %v2216 = vld [vmem:[%s10 + $0x28] sm:$0xff]
    %v2217 = vld [vmem:[%s10 + $0x30] sm:$0xff]
    %v2218 = vld [vmem:[%s10 + $0x38] sm:$0xff]
    %v2219 = vld [vmem:[%s10 + $0x40] sm:$0xff]
    %v2220 = vld [vmem:[%s10 + $0x48] sm:$0xff]
    %v2221 = vld [vmem:[%s10 + $0x50] sm:$0xff]
    %v2222 = vld [vmem:[%s10 + $0x58] sm:$0xff]
    %v2223 = vld [vmem:[%s10 + $0x60] sm:$0xff]
    %v2224 = vld [vmem:[%s10 + $0x68] sm:$0xff]
    %v2225 = vld [vmem:[%s10 + $0x70] sm:$0xff]
    %v2226 = vld [vmem:[%s10 + $0x78] sm:$0xff]
    %v2227 = vld [vmem:[%s11] sm:$0xff]
    %v2228 = vld [vmem:[%s11 + $0x8] sm:$0xff]
    %v2229 = vld [vmem:[%s11 + $0x10] sm:$0xff]
    %v2230 = vld [vmem:[%s11 + $0x18] sm:$0xff]
    %v2231 = vld [vmem:[%s11 + $0x20] sm:$0xff]
    %v2232 = vld [vmem:[%s11 + $0x28] sm:$0xff]
    %v2233 = vld [vmem:[%s11 + $0x30] sm:$0xff]
    %v2234 = vld [vmem:[%s11 + $0x38] sm:$0xff]
    %v2235 = vld [vmem:[%s11 + $0x40] sm:$0xff]
    %v2236 = vld [vmem:[%s11 + $0x48] sm:$0xff]
    %v2237 = vld [vmem:[%s11 + $0x50] sm:$0xff]
    %v2238 = vld [vmem:[%s11 + $0x58] sm:$0xff]
    %v2239 = vld [vmem:[%s11 + $0x60] sm:$0xff]
    %v2240 = vld [vmem:[%s11 + $0x68] sm:$0xff]
    %v2241 = vld [vmem:[%s11 + $0x70] sm:$0xff]
    %v2242 = vld [vmem:[%s11 + $0x78] sm:$0xff]
    %v2251 = vrot.slane %v1770, 7
    %vm2252 = vcmask 1041409
    %v2253 = vsel %vm2252, %v2251, %v1697
    %v2254 = vrot.slane %v1843, 6
    %vm2255 = vcmask 1042434
    %v2256 = vsel %vm2255, %v2254, %v2253
    %v2257 = vrot.slane %v1916, 5
    %vm2258 = vcmask 1043459
    %v2259 = vsel %vm2258, %v2257, %v2256
    %v2260 = vrot.slane %v1989, 4
    %vm2261 = vcmask 1044484
    %v2262 = vsel %vm2261, %v2260, %v2259
    %v2263 = vrot.slane %v2062, 3
    %vm2264 = vcmask 1045509
    %v2265 = vsel %vm2264, %v2263, %v2262
    %v2266 = vrot.slane %v2135, 2
    %vm2267 = vcmask 1046534
    %v2268 = vsel %vm2267, %v2266, %v2265
    %v2269 = vrot.slane %v2208, 1
    %vm2270 = vcmask 1047559
    %v2271 = vsel %vm2270, %v2269, %v2268
    %2273 = vmatprep.subr.mxu0 0.0
    %2274 = vmatpush1.msra.mxu0 %v2227
    %2275 = vmatprep.subr.mxu0 0.0
    %2276 = vmatpush1.msra.mxu0 %v2228
    %2277 = vmatprep.subr.mxu0 0.0
    %2278 = vmatpush1.msra.mxu0 %v2229
    %2279 = vmatprep.subr.mxu0 0.0
    %2280 = vmatpush1.msra.mxu0 %v2230
    %2281 = vmatprep.subr.mxu0 0.0
    %2282 = vmatpush1.msra.mxu0 %v2231
    %2283 = vmatprep.subr.mxu0 0.0
    %2284 = vmatpush1.msra.mxu0 %v2232
    %2285 = vmatprep.subr.mxu0 0.0
    %2286 = vmatpush1.msra.mxu0 %v2233
    %2287 = vmatprep.subr.mxu0 0.0
    %2288 = vmatpush1.msra.mxu0 %v2234
    %2289 = vmatprep.subr.mxu0 0.0
    %2290 = vmatpush1.msra.mxu0 %v2235
    %2291 = vmatprep.subr.mxu0 0.0
    %2292 = vmatpush1.msra.mxu0 %v2236
    %2293 = vmatprep.subr.mxu0 0.0
    %2294 = vmatpush1.msra.mxu0 %v2237
    %2295 = vmatprep.subr.mxu0 0.0
    %2296 = vmatpush1.msra.mxu0 %v2238
    %2297 = vmatprep.subr.mxu0 0.0
    %2298 = vmatpush1.msra.mxu0 %v2239
    %2299 = vmatprep.subr.mxu0 0.0
    %2300 = vmatpush1.msra.mxu0 %v2240
    %2301 = vmatprep.subr.mxu0 0.0
    %2302 = vmatpush1.msra.mxu0 %v2241
    %2303 = vmatprep.subr.mxu0 0.0
    %2304 = vmatpush1.msra.mxu0 %v2242
    %2305 = vmatprep.subr.mxu0 0.0
    %2306 = vmatpush1.msra.mxu0 0.0
    %2307 = vmatprep.subr.mxu0 0.0
    %2308 = vmatpush1.msra.mxu0 0.0
    %2309 = vmatprep.subr.mxu0 0.0
    %2310 = vmatpush1.msra.mxu0 0.0
    %2311 = vmatprep.subr.mxu0 0.0
    %2312 = vmatpush1.msra.mxu0 0.0
    %2313 = vmatprep.subr.mxu0 0.0
    %2314 = vmatpush1.msra.mxu0 0.0
    %2315 = vmatprep.subr.mxu0 0.0
    %2316 = vmatpush1.msra.mxu0 0.0
    %2317 = vmatprep.subr.mxu0 0.0
    %2318 = vmatpush1.msra.mxu0 0.0
    %2319 = vmatprep.subr.mxu0 0.0
    %2320 = vmatpush1.msra.mxu0 0.0
    %2321 = vmatprep.subr.mxu0 0.0
    %2322 = vmatpush1.msra.mxu0 0.0
    %2323 = vmatprep.subr.mxu0 0.0
    %2324 = vmatpush1.msra.mxu0 0.0
    %2325 = vmatprep.subr.mxu0 0.0
    %2326 = vmatpush1.msra.mxu0 0.0
    %2327 = vmatprep.subr.mxu0 0.0
    %2328 = vmatpush1.msra.mxu0 0.0
    %2329 = vmatprep.subr.mxu0 0.0
    %2330 = vmatpush1.msra.mxu0 0.0
    %2331 = vmatprep.subr.mxu0 0.0
    %2332 = vmatpush1.msra.mxu0 0.0
    %2333 = vmatprep.subr.mxu0 0.0
    %2334 = vmatpush1.msra.mxu0 0.0
    %2335 = vmatprep.subr.mxu0 0.0
    %2336 = vmatpush1.msra.mxu0 0.0
    %2337 = vmatprep.mubr.f32.mxu0 0.0
    %2338 = vmatmul.mubr.f32.gmra.mrb[0].mxu0 %v2271
    %v2339 = vpop.f32.mrb[0].mxu0
    %v2340 = vadd.f32 0.0, %v2339
    %v2341 = vpop.f32.mrb[0].mxu0
    %2342 = vdwg.mxu0
    %2343 = vmatprep.subr.mxu0 0.0
    %2344 = vmatpush1.msra.mxu0 %v2211
    %2345 = vmatprep.subr.mxu0 0.0
    %2346 = vmatpush1.msra.mxu0 %v2212
    %2347 = vmatprep.subr.mxu0 0.0
    %2348 = vmatpush1.msra.mxu0 %v2213
    %2349 = vmatprep.subr.mxu0 0.0
    %2350 = vmatpush1.msra.mxu0 %v2214
    %2351 = vmatprep.subr.mxu0 0.0
    %2352 = vmatpush1.msra.mxu0 %v2215
    %2353 = vmatprep.subr.mxu0 0.0
    %2354 = vmatpush1.msra.mxu0 %v2216
    %2355 = vmatprep.subr.mxu0 0.0
    %2356 = vmatpush1.msra.mxu0 %v2217
    %2357 = vmatprep.subr.mxu0 0.0
    %2358 = vmatpush1.msra.mxu0 %v2218
    %2359 = vmatprep.subr.mxu0 0.0
    %2360 = vmatpush1.msra.mxu0 %v2219
    %2361 = vmatprep.subr.mxu0 0.0
    %2362 = vmatpush1.msra.mxu0 %v2220
    %2363 = vmatprep.subr.mxu0 0.0
    %2364 = vmatpush1.msra.mxu0 %v2221
    %2365 = vmatprep.subr.mxu0 0.0
    %2366 = vmatpush1.msra.mxu0 %v2222
    %2367 = vmatprep.subr.mxu0 0.0
    %2368 = vmatpush1.msra.mxu0 %v2223
    %2369 = vmatprep.subr.mxu0 0.0
    %2370 = vmatpush1.msra.mxu0 %v2224
    %2371 = vmatprep.subr.mxu0 0.0
    %2372 = vmatpush1.msra.mxu0 %v2225
    %2373 = vmatprep.subr.mxu0 0.0
    %2374 = vmatpush1.msra.mxu0 %v2226
    %2375 = vmatprep.subr.mxu0 0.0
    %2376 = vmatpush1.msra.mxu0 0.0
    %2377 = vmatprep.subr.mxu0 0.0
    %2378 = vmatpush1.msra.mxu0 0.0
    %2379 = vmatprep.subr.mxu0 0.0
    %2380 = vmatpush1.msra.mxu0 0.0
    %2381 = vmatprep.subr.mxu0 0.0
    %2382 = vmatpush1.msra.mxu0 0.0
    %2383 = vmatprep.subr.mxu0 0.0
    %2384 = vmatpush1.msra.mxu0 0.0
    %2385 = vmatprep.subr.mxu0 0.0
    %2386 = vmatpush1.msra.mxu0 0.0
    %2387 = vmatprep.subr.mxu0 0.0
    %2388 = vmatpush1.msra.mxu0 0.0
    %2389 = vmatprep.subr.mxu0 0.0
    %2390 = vmatpush1.msra.mxu0 0.0
    %2391 = vmatprep.subr.mxu0 0.0
    %2392 = vmatpush1.msra.mxu0 0.0
    %2393 = vmatprep.subr.mxu0 0.0
    %2394 = vmatpush1.msra.mxu0 0.0
    %2395 = vmatprep.subr.mxu0 0.0
    %2396 = vmatpush1.msra.mxu0 0.0
    %2397 = vmatprep.subr.mxu0 0.0
    %2398 = vmatpush1.msra.mxu0 0.0
    %2399 = vmatprep.subr.mxu0 0.0
    %2400 = vmatpush1.msra.mxu0 0.0
    %2401 = vmatprep.subr.mxu0 0.0
    %2402 = vmatpush1.msra.mxu0 0.0
    %2403 = vmatprep.subr.mxu0 0.0
    %2404 = vmatpush1.msra.mxu0 0.0
    %2405 = vmatprep.subr.mxu0 0.0
    %2406 = vmatpush1.msra.mxu0 0.0
    %2407 = vmatprep.mubr.f32.mxu0 0.0
    %2408 = vmatmul.mubr.f32.gmra.mrb[0].mxu0 %v780
    %v2409 = vpop.f32.mrb[0].mxu0
    %v2410 = vadd.f32 %v2340, %v2409
    %v2411 = vpop.f32.mrb[0].mxu0
    %2412 = vdwg.mxu0
    %v2413 = vld [vmem:[%s12] sm:$0x1]
    %v2415 = vlaneseq
    %v2416 = vshrl.u32 %v2415, 7
    %v2417 = vsub.s32 0, %v2416
    %v2418 = vrot.slane %v2413, %v2417
    %v2420 = vadd.f32 %v2410, %v2418
    %v2421 = vtanh.pop %v2420
    %v2422 = vld [vmem:[#allocation8] sm:$0xff]
    %v2423 = vld [vmem:[#allocation8 + $0x8] sm:$0xff]
    %v2424 = vld [vmem:[#allocation8 + $0x10] sm:$0xff]
    %v2425 = vld [vmem:[#allocation8 + $0x18] sm:$0xff]
    %v2426 = vld [vmem:[#allocation8 + $0x20] sm:$0xff]
    %v2427 = vld [vmem:[#allocation8 + $0x28] sm:$0xff]
    %v2428 = vld [vmem:[#allocation8 + $0x30] sm:$0xff]
    %v2429 = vld [vmem:[#allocation8 + $0x38] sm:$0xff]
    %v2430 = vld [vmem:[#allocation8 + $0x40] sm:$0xff]
    %v2431 = vld [vmem:[#allocation8 + $0x48] sm:$0xff]
    %v2432 = vld [vmem:[#allocation8 + $0x50] sm:$0xff]
    %v2433 = vld [vmem:[#allocation8 + $0x58] sm:$0xff]
    %v2434 = vld [vmem:[#allocation8 + $0x60] sm:$0xff]
    %v2435 = vld [vmem:[#allocation8 + $0x68] sm:$0xff]
    %v2436 = vld [vmem:[#allocation8 + $0x70] sm:$0xff]
    %v2437 = vld [vmem:[#allocation8 + $0x78] sm:$0xff]
    %v2438 = vld [vmem:[%s14] sm:$0x1]
    %v2440 = vlaneseq
    %v2441 = vshrl.u32 %v2440, 7
    %v2442 = vsub.s32 0, %v2441
    %v2443 = vrot.slane %v2438, %v2442
    %2445 = vmatprep.subr.mxu0 0.0
    %2446 = vmatpush1.msra.mxu0 %v2422
    %2447 = vmatprep.subr.mxu0 0.0
    %2448 = vmatpush1.msra.mxu0 %v2423
    %2449 = vmatprep.subr.mxu0 0.0
    %2450 = vmatpush1.msra.mxu0 %v2424
    %2451 = vmatprep.subr.mxu0 0.0
    %2452 = vmatpush1.msra.mxu0 %v2425
    %2453 = vmatprep.subr.mxu0 0.0
    %2454 = vmatpush1.msra.mxu0 %v2426
    %2455 = vmatprep.subr.mxu0 0.0
    %2456 = vmatpush1.msra.mxu0 %v2427
    %2457 = vmatprep.subr.mxu0 0.0
    %2458 = vmatpush1.msra.mxu0 %v2428
    %2459 = vmatprep.subr.mxu0 0.0
    %2460 = vmatpush1.msra.mxu0 %v2429
    %2461 = vmatprep.subr.mxu0 0.0
    %2462 = vmatpush1.msra.mxu0 %v2430
    %2463 = vmatprep.subr.mxu0 0.0
    %2464 = vmatpush1.msra.mxu0 %v2431
    %2465 = vmatprep.subr.mxu0 0.0
    %2466 = vmatpush1.msra.mxu0 %v2432
    %2467 = vmatprep.subr.mxu0 0.0
    %2468 = vmatpush1.msra.mxu0 %v2433
    %2469 = vmatprep.subr.mxu0 0.0
    %2470 = vmatpush1.msra.mxu0 %v2434
    %2471 = vmatprep.subr.mxu0 0.0
    %2472 = vmatpush1.msra.mxu0 %v2435
    %2473 = vmatprep.subr.mxu0 0.0
    %2474 = vmatpush1.msra.mxu0 %v2436
    %2475 = vmatprep.subr.mxu0 0.0
    %2476 = vmatpush1.msra.mxu0 %v2437
    %2477 = vmatprep.subr.mxu0 0.0
    %2478 = vmatpush1.msra.mxu0 0.0
    %2479 = vmatprep.subr.mxu0 0.0
    %2480 = vmatpush1.msra.mxu0 0.0
    %2481 = vmatprep.subr.mxu0 0.0
    %2482 = vmatpush1.msra.mxu0 0.0
    %2483 = vmatprep.subr.mxu0 0.0
    %2484 = vmatpush1.msra.mxu0 0.0
    %2485 = vmatprep.subr.mxu0 0.0
    %2486 = vmatpush1.msra.mxu0 0.0
    %2487 = vmatprep.subr.mxu0 0.0
    %2488 = vmatpush1.msra.mxu0 0.0
    %2489 = vmatprep.subr.mxu0 0.0
    %2490 = vmatpush1.msra.mxu0 0.0
    %2491 = vmatprep.subr.mxu0 0.0
    %2492 = vmatpush1.msra.mxu0 0.0
    %2493 = vmatprep.subr.mxu0 0.0
    %2494 = vmatpush1.msra.mxu0 0.0
    %2495 = vmatprep.subr.mxu0 0.0
    %2496 = vmatpush1.msra.mxu0 0.0
    %2497 = vmatprep.subr.mxu0 0.0
    %2498 = vmatpush1.msra.mxu0 0.0
    %2499 = vmatprep.subr.mxu0 0.0
    %2500 = vmatpush1.msra.mxu0 0.0
    %2501 = vmatprep.subr.mxu0 0.0
    %2502 = vmatpush1.msra.mxu0 0.0
    %2503 = vmatprep.subr.mxu0 0.0
    %2504 = vmatpush1.msra.mxu0 0.0
    %2505 = vmatprep.subr.mxu0 0.0
    %2506 = vmatpush1.msra.mxu0 0.0
    %2507 = vmatprep.subr.mxu0 0.0
    %2508 = vmatpush1.msra.mxu0 0.0
    %2509 = vmatprep.mubr.f32.mxu0 0.0
    %2510 = vmatmul.mubr.f32.gmra.mrb[0].mxu0 %v2421
    %v2511 = vpop.f32.mrb[0].mxu0
    %v2512 = vadd.f32 %v2443, %v2511
    %v2513 = vpop.f32.mrb[0].mxu0
    %2514 = vdwg.mxu0
    %2515 = vmax.xlane.f32.xlu0 %v2512
    %v2516 = vpop.xlane.xlu0 %2515
    %v2517 = vsub.f32 %v2512, %v2516
    %v2518 = vmul.f32 %v2517, 1.442695
    %v2519 = vpow.pop %v2518
    %2520 = vadd.xlane.f32.xlu0 %v2519
    %v2521 = vpop.xlane.xlu0 %2520
    %v2522 = vrcp.pop %v2521
    %v2523 = vmul.f32 %v2519, %v2522
    %2524 = vst [vmem:[#allocation10] sm:$0xff] %v2523
    // Predicated region
    $region82: #{tpu_custom_call.1} parent=1 // pred_check
      _
    $region83: #{tpu_custom_call.1} parent=1 // pred_check_branch
      %2526 = sbr.rel (0) target = $region85
    $region84: #{tpu_custom_call.1} parent=1 // pred_region
      %s2528 = ssub.s32 128, 128
      %2529 = vsyncadd [#allocation4], %s2528
      %s2531 = sshll.u32 [#allocation10], 4
      %s2532 = int_to_ptr.vmem [resolvable:$true] %s2531
      %2534 = dma.vmem_to_hbm [thread:$0]  %s2532, 128, %s15, [#allocation4]
    $region85: #{tpu_custom_call.1} parent=1 // pred_fallthru
      _
    // Predicated region
    $region86: #{tpu_custom_call.1} parent=1 // pred_check
      _
    $region87: #{tpu_custom_call.1} parent=1 // pred_check_branch
      %2536 = sbr.rel (0) target = $region89
    $region88: #{tpu_custom_call.1} parent=1 // pred_region
      %s2538 = ssub.s32 256, 256
      %2539 = vsyncadd [#allocation12], %s2538
      %s2540 = sshll.u32 [#allocation11], 4
      %s2541 = int_to_ptr.vmem [resolvable:$true] %s2540
      %2546 = dma.vmem_to_hbm [thread:$0]  %s2541, 256, %s16, [#allocation12], 128, 128, 8
    $region89: #{tpu_custom_call.1} parent=1 // pred_fallthru
      _
    // Predicated region
    $region90: #{tpu_custom_call.1} parent=1 // pred_check
      _
    $region91: #{tpu_custom_call.1} parent=1 // pred_check_branch
      %2548 = sbr.rel (0) target = $region93
    $region92: #{tpu_custom_call.1} parent=1 // pred_region
      %2549 = dma.done [#allocation4], 128
    $region93: #{tpu_custom_call.1} parent=1 // pred_fallthru
      _
    // Predicated region
    $region94: #{tpu_custom_call.1} parent=1 // pred_check
      _
    $region95: #{tpu_custom_call.1} parent=1 // pred_check_branch
      %2551 = sbr.rel (0) target = $region97
    $region96: #{tpu_custom_call.1} parent=1 // pred_region
      %2552 = dma.done [#allocation12], 256
    $region97: #{tpu_custom_call.1} parent=1 // pred_fallthru
      _
    %2553 = vsyncpa [#allocation3], 1
    %2554 = vsyncpa [#allocation6], 1
    %2555 = vsyncpa [#allocation9], 1
    %2556 = vsyncpa [#allocation4], 1
    %2557 = vsyncpa [#allocation12], 1

</llo_original>
